<compile_context>
chip_gen: v7x
topology: tpu7x:2x2x1
jax: 0.10.0
libtpu: 0.0.40
codegen_flags: <defaults>
</compile_context>

<pallas_src>
import math
import functools

import jax
import jax.numpy as jnp
from jax import lax
from jax.experimental import pallas as pl
from jax.experimental.pallas import tpu as pltpu


def _round_up(x, m):
    return ((x + m - 1) // m) * m


# ----------------------------------------------------------------------------
# Fused kernel: GRU layers (recurrence in-kernel) + Linear + sigmoid.
# Shapes (all padded): x (T,Bp,P), wih/whh (L,P,3P), bihc (L,1,3P), bhn (L,1,P),
# wlin (P,Opad), blin (1,Opad), out (T,Bp,Opad).
# ----------------------------------------------------------------------------
def _fused_gru_kernel(x_ref, wih_ref, whh_ref, bihc_ref, bhn_ref,
                      wlin_ref, blin_ref, out_ref, seq_ref, gi_ref,
                      *, T, Bp, P, L):
    f32 = jnp.float32

    for layer in range(L):  # static unroll over layers
        # ---- hoisted input projection for ALL timesteps (one big MXU matmul)
        src = x_ref if layer == 0 else seq_ref
        xin = src[...].reshape(T * Bp, P)                             # (T*Bp, P)
        gi = jnp.dot(xin, wih_ref[layer],
                     preferred_element_type=f32) + bihc_ref[layer]    # (T*Bp, 3P)
        gi_ref[...] = gi.reshape(T, Bp, 3 * P)

        whh = whh_ref[layer]                                          # (P, 3P)
        bhn = jnp.broadcast_to(bhn_ref[layer], (Bp, P))               # hoisted

        def step(t, h):
            git = gi_ref[t]                                           # (Bp, 3P)
            gh = jnp.dot(h, whh, preferred_element_type=f32)          # (Bp, 3P)
            r = jax.nn.sigmoid(git[:, 0:P] + gh[:, 0:P])
            z = jax.nn.sigmoid(git[:, P:2 * P] + gh[:, P:2 * P])
            n = jnp.tanh(git[:, 2 * P:3 * P] + r * (gh[:, 2 * P:3 * P] + bhn))
            h_new = n + z * (h - n)            # == (1 - z) * n + z * h
            seq_ref[t] = h_new
            return h_new

        lax.fori_loop(0, T, step, jnp.zeros((Bp, P), f32), unroll=True)

    # ---- final Linear + sigmoid over the whole sequence (single matmul)
    hseq = seq_ref[...].reshape(T * Bp, P)
    y = jnp.dot(hseq, wlin_ref[...], preferred_element_type=f32) + blin_ref[...]
    out_ref[...] = jax.nn.sigmoid(y).reshape(out_ref.shape).astype(out_ref.dtype)


# ----------------------------------------------------------------------------
# Parameter init (PyTorch-style uniform(-1/sqrt(H), 1/sqrt(H))), natural layout.
# Weights stored pre-transposed: w_ih_t (in, 3H), w_hh_t (H, 3H), linear_w_t (H, O).
# ----------------------------------------------------------------------------
def init_common_gru_params(key, input_size, hidden_size, output_size, num_layers):
    k = 1.0 / math.sqrt(hidden_size)
    params = {"layers": []}
    for layer in range(num_layers):
        in_sz = input_size if layer == 0 else hidden_size
        key, k1, k2, k3, k4 = jax.random.split(key, 5)
        params["layers"].append({
            "w_ih_t": jax.random.uniform(k1, (in_sz, 3 * hidden_size),
                                         jnp.float32, -k, k),
            "w_hh_t": jax.random.uniform(k2, (hidden_size, 3 * hidden_size),
                                         jnp.float32, -k, k),
            "b_ih": jax.random.uniform(k3, (3 * hidden_size,), jnp.float32, -k, k),
            "b_hh": jax.random.uniform(k4, (3 * hidden_size,), jnp.float32, -k, k),
        })
    key, k5, k6 = jax.random.split(key, 3)
    params["linear_w_t"] = jax.random.uniform(k5, (hidden_size, output_size),
                                              jnp.float32, -k, k)
    params["linear_b"] = jax.random.uniform(k6, (output_size,), jnp.float32, -k, k)
    return params


# ----------------------------------------------------------------------------
# Pack / pad params into the lane-aligned stacked layout the kernel expects.
# Each gate block is padded from H to P lanes; padded lanes stay exactly zero.
# ----------------------------------------------------------------------------
def _pad_gate_matrix(w, rows, P, H):
    out = jnp.zeros((P, 3 * P), jnp.float32)
    for g in range(3):
        out = out.at[:rows, g * P:g * P + H].set(w[:, g * H:(g + 1) * H])
    return out


def _pad_gate_vector(b, P, H):
    out = jnp.zeros((3 * P,), jnp.float32)
    for g in range(3):
        out = out.at[g * P:g * P + H].set(b[g * H:(g + 1) * H])
    return out


def pack_params(params, input_size, hidden_size, output_size):
    H = hidden_size
    P = _round_up(max(input_size, hidden_size, 128), 128)
    Opad = _round_up(max(output_size, 128), 128)

    wih, whh, bihc, bhn = [], [], [], []
    for layer, lp in enumerate(params["layers"]):
        in_sz = input_size if layer == 0 else hidden_size
        wih.append(_pad_gate_matrix(lp["w_ih_t"], in_sz, P, H))
        whh.append(_pad_gate_matrix(lp["w_hh_t"], H, P, H))
        # fold b_ih + b_hh for r/z gates; keep n-gate input bias alone (b_hn separate)
        b_comb = lp["b_ih"] + lp["b_hh"]
        b_comb = b_comb.at[2 * H:3 * H].set(lp["b_ih"][2 * H:3 * H])
        bihc.append(_pad_gate_vector(b_comb, P, H))
        bhn.append(jnp.zeros((P,), jnp.float32).at[:H].set(lp["b_hh"][2 * H:3 * H]))

    return {
        "wih": jnp.stack(wih),                  # (L, P, 3P)
        "whh": jnp.stack(whh),                  # (L, P, 3P)
        "bihc": jnp.stack(bihc)[:, None, :],    # (L, 1, 3P)
        "bhn": jnp.stack(bhn)[:, None, :],      # (L, 1, P)
        "wlin": jnp.zeros((P, Opad), jnp.float32)
                   .at[:H, :output_size].set(params["linear_w_t"]),
        "blin": jnp.zeros((1, Opad), jnp.float32)
                   .at[0, :output_size].set(params["linear_b"]),
        "P": P, "Opad": Opad, "O": output_size,
        "L": len(params["layers"]), "I": input_size,
    }


# ----------------------------------------------------------------------------
# Forward: x (B, T, input_size) batch_first -> (B, T, output_size)
# ----------------------------------------------------------------------------
def common_gru_forward(packed, x_bti):
    # TODO(synk): only mode='GRU' + activation_fn=sigmoid are implemented
    # (module defaults); LSTM mode is not translated. The module's LeakyReLU
    # member is unused in its forward, so it is intentionally omitted.
    B, T, I = x_bti.shape
    P, Opad, L, O = packed["P"], packed["Opad"], packed["L"], packed["O"]
    Bp = _round_up(max(B, 8), 8)

    x_tbi = jnp.transpose(x_bti, (1, 0, 2)).astype(jnp.float32)       # (T, B, I)
    x_pad = jnp.zeros((T, Bp, P), jnp.float32).at[:, :B, :I].set(x_tbi)

    kernel = functools.partial(_fused_gru_kernel, T=T, Bp=Bp, P=P, L=L)
    out_pad = pl.pallas_call(
        kernel,
        out_shape=jax.ShapeDtypeStruct((T, Bp, Opad), jnp.float32),
        grid=(1,),
        in_specs=[
            pl.BlockSpec((T, Bp, P), lambda i: (0, 0, 0)),
            pl.BlockSpec((L, P, 3 * P), lambda i: (0, 0, 0)),
            pl.BlockSpec((L, P, 3 * P), lambda i: (0, 0, 0)),
            pl.BlockSpec((L, 1, 3 * P), lambda i: (0, 0, 0)),
            pl.BlockSpec((L, 1, P), lambda i: (0, 0, 0)),
            pl.BlockSpec((P, Opad), lambda i: (0, 0)),
            pl.BlockSpec((1, Opad), lambda i: (0, 0)),
        ],
        out_specs=pl.BlockSpec((T, Bp, Opad), lambda i: (0, 0, 0)),
        scratch_shapes=[
            pltpu.VMEM((T, Bp, P), jnp.float32),       # current layer output seq
            pltpu.VMEM((T, Bp, 3 * P), jnp.float32),   # hoisted input-gate buffer
        ],
        compiler_params=pltpu.CompilerParams(
            dimension_semantics=("arbitrary",),
            vmem_limit_bytes=32 * 1024 * 1024,
        ),
    )(x_pad, packed["wih"], packed["whh"], packed["bihc"], packed["bhn"],
      packed["wlin"], packed["blin"])

    out = out_pad[:, :B, :O]                            # strip batch/lane padding
    return jnp.transpose(out, (1, 0, 2))                # (B, T, O)


if __name__ == "__main__":
    B, T = 2, 8
    input_size, hidden_size, output_size, num_layers = 16, 32, 8, 2

    key = jax.random.PRNGKey(0)
    kp, kx = jax.random.split(key)
    params = init_common_gru_params(kp, input_size, hidden_size,
                                    output_size, num_layers)
    packed = pack_params(params, input_size, hidden_size, output_size)
    x = jax.random.normal(kx, (B, T, input_size), jnp.float32)

    out = common_gru_forward(packed, x)
    jax.block_until_ready(out)
    assert out.shape == (B, T, output_size), out.shape
    print("KERNEL_OK")
</pallas_src>

<mosaic_0001>
module attributes {stable_mosaic.version = 11 : i64} {
  func.func @_fused_gru_kernel(%arg0: i32, %arg1: memref<8x8x128xf32, #tpu.memory_space<vmem>>, %arg2: memref<2x128x384xf32, #tpu.memory_space<vmem>>, %arg3: memref<2x128x384xf32, #tpu.memory_space<vmem>>, %arg4: memref<2x1x384xf32, #tpu.memory_space<vmem>>, %arg5: memref<2x1x128xf32, #tpu.memory_space<vmem>>, %arg6: memref<128x128xf32, #tpu.memory_space<vmem>>, %arg7: memref<1x128xf32, #tpu.memory_space<vmem>>, %arg8: memref<8x8x128xf32, #tpu.memory_space<vmem>>, %arg9: memref<8x8x128xf32, #tpu.memory_space<vmem>>, %arg10: memref<8x8x384xf32, #tpu.memory_space<vmem>>) attributes {dimension_semantics = [#tpu.dimension_semantics<arbitrary>], iteration_bounds = array<i64: 1>, scalar_prefetch = 0 : i64, scratch_operands = 2 : i64, tpu.core_type = #tpu.core_type<tc>, window_params = [{pipeline_mode = #tpu.pipeline_mode<synchronous>, transform_indices = @transform_0, window_bounds = array<i64: 8, 8, 128>}, {pipeline_mode = #tpu.pipeline_mode<synchronous>, transform_indices = @transform_1, window_bounds = array<i64: 2, 128, 384>}, {pipeline_mode = #tpu.pipeline_mode<synchronous>, transform_indices = @transform_2, window_bounds = array<i64: 2, 128, 384>}, {pipeline_mode = #tpu.pipeline_mode<synchronous>, transform_indices = @transform_3, window_bounds = array<i64: 2, 1, 384>}, {pipeline_mode = #tpu.pipeline_mode<synchronous>, transform_indices = @transform_4, window_bounds = array<i64: 2, 1, 128>}, {pipeline_mode = #tpu.pipeline_mode<synchronous>, transform_indices = @transform_5, window_bounds = array<i64: 128, 128>}, {pipeline_mode = #tpu.pipeline_mode<synchronous>, transform_indices = @transform_6, window_bounds = array<i64: 1, 128>}, {pipeline_mode = #tpu.pipeline_mode<synchronous>, transform_indices = @transform_7, window_bounds = array<i64: 8, 8, 128>}]} {
    %c0 = arith.constant 0 : index
    %c0_0 = arith.constant 0 : index
    %c0_1 = arith.constant 0 : index
    %0 = vector.load %arg1[%c0, %c0_0, %c0_1] : memref<8x8x128xf32, #tpu.memory_space<vmem>>, vector<8x8x128xf32>
    %1 = vector.shape_cast %0 : vector<8x8x128xf32> to vector<64x128xf32>
    %c0_2 = arith.constant 0 : index
    %c0_3 = arith.constant 0 : index
    %c0_4 = arith.constant 0 : index
    %2 = vector.load %arg2[%c0_2, %c0_3, %c0_4] : memref<2x128x384xf32, #tpu.memory_space<vmem>>, vector<1x128x384xf32>
    %3 = vector.shape_cast %2 : vector<1x128x384xf32> to vector<128x384xf32>
    %cst = arith.constant dense<0.000000e+00> : vector<64x384xf32>
    %4 = tpu.matmul %1, %3, %cst {dimension_numbers = #tpu.dot_dimension_numbers<[1], [0], [0], [1], [0, 0, 1, 1], [], []>} : vector<64x128xf32>, vector<128x384xf32>, vector<64x384xf32> -> vector<64x384xf32>
    %c0_5 = arith.constant 0 : index
    %c0_6 = arith.constant 0 : index
    %c0_7 = arith.constant 0 : index
    %5 = vector.load %arg4[%c0_5, %c0_6, %c0_7] : memref<2x1x384xf32, #tpu.memory_space<vmem>>, vector<1x1x384xf32>
    %6 = vector.shape_cast %5 : vector<1x1x384xf32> to vector<1x384xf32>
    %7 = vector.broadcast %6 : vector<1x384xf32> to vector<64x384xf32>
    %8 = arith.addf %4, %7 : vector<64x384xf32>
    %9 = vector.shape_cast %8 : vector<64x384xf32> to vector<8x8x384xf32>
    %c0_8 = arith.constant 0 : index
    %c0_9 = arith.constant 0 : index
    %c0_10 = arith.constant 0 : index
    %10 = vector.load %arg10[%c0_8, %c0_9, %c0_10] : memref<8x8x384xf32, #tpu.memory_space<vmem>>, vector<8x8x384xf32>
    tpu.vector_store %arg10[%c0_8, %c0_9, %c0_10], %9 {strides = array<i32>} : memref<8x8x384xf32, #tpu.memory_space<vmem>>, vector<8x8x384xf32>,
    %c0_11 = arith.constant 0 : index
    %c0_12 = arith.constant 0 : index
    %c0_13 = arith.constant 0 : index
    %11 = vector.load %arg3[%c0_11, %c0_12, %c0_13] : memref<2x128x384xf32, #tpu.memory_space<vmem>>, vector<1x128x384xf32>
    %12 = vector.shape_cast %11 : vector<1x128x384xf32> to vector<128x384xf32>
    %c0_14 = arith.constant 0 : index
    %c0_15 = arith.constant 0 : index
    %c0_16 = arith.constant 0 : index
    %13 = vector.load %arg5[%c0_14, %c0_15, %c0_16] : memref<2x1x128xf32, #tpu.memory_space<vmem>>, vector<1x1x128xf32>
    %14 = vector.shape_cast %13 : vector<1x1x128xf32> to vector<1x128xf32>
    %15 = vector.shape_cast %14 : vector<1x128xf32> to vector<1x128xf32>
    %16 = vector.broadcast %15 : vector<1x128xf32> to vector<8x128xf32>
    %cst_17 = arith.constant 0.000000e+00 : f32
    %17 = vector.broadcast %cst_17 : f32 to vector<8x128xf32>
    %c0_i32 = arith.constant 0 : i32
    %18 = arith.index_cast %c0_i32 : i32 to index
    %c0_18 = arith.constant 0 : index
    %c0_19 = arith.constant 0 : index
    %19 = vector.load %arg10[%18, %c0_18, %c0_19] : memref<8x8x384xf32, #tpu.memory_space<vmem>>, vector<1x8x384xf32>
    %20 = vector.shape_cast %19 : vector<1x8x384xf32> to vector<8x384xf32>
    %cst_20 = arith.constant dense<0.000000e+00> : vector<8x384xf32>
    %21 = tpu.matmul %17, %12, %cst_20 {dimension_numbers = #tpu.dot_dimension_numbers<[1], [0], [0], [1], [0, 0, 1, 1], [], []>} : vector<8x128xf32>, vector<128x384xf32>, vector<8x384xf32> -> vector<8x384xf32>
    %22 = vector.extract_strided_slice %20 {offsets = [0, 0], sizes = [8, 128], strides = [1, 1]} : vector<8x384xf32> to vector<8x128xf32>
    %23 = vector.extract_strided_slice %21 {offsets = [0, 0], sizes = [8, 128], strides = [1, 1]} : vector<8x384xf32> to vector<8x128xf32>
    %24 = arith.addf %22, %23 : vector<8x128xf32>
    %25 = arith.negf %24 : vector<8x128xf32>
    %26 = math.exp %25 : vector<8x128xf32>
    %cst_21 = arith.constant 1.000000e+00 : f32
    %27 = vector.broadcast %cst_21 : f32 to vector<8x128xf32>
    %28 = arith.addf %27, %26 : vector<8x128xf32>
    %29 = arith.divf %27, %28 : vector<8x128xf32>
    %30 = vector.extract_strided_slice %20 {offsets = [0, 128], sizes = [8, 128], strides = [1, 1]} : vector<8x384xf32> to vector<8x128xf32>
    %31 = vector.extract_strided_slice %21 {offsets = [0, 128], sizes = [8, 128], strides = [1, 1]} : vector<8x384xf32> to vector<8x128xf32>
    %32 = arith.addf %30, %31 : vector<8x128xf32>
    %33 = arith.negf %32 : vector<8x128xf32>
    %34 = math.exp %33 : vector<8x128xf32>
    %cst_22 = arith.constant 1.000000e+00 : f32
    %35 = vector.broadcast %cst_22 : f32 to vector<8x128xf32>
    %36 = arith.addf %35, %34 : vector<8x128xf32>
    %37 = arith.divf %35, %36 : vector<8x128xf32>
    %38 = vector.extract_strided_slice %20 {offsets = [0, 256], sizes = [8, 128], strides = [1, 1]} : vector<8x384xf32> to vector<8x128xf32>
    %39 = vector.extract_strided_slice %21 {offsets = [0, 256], sizes = [8, 128], strides = [1, 1]} : vector<8x384xf32> to vector<8x128xf32>
    %40 = arith.addf %39, %16 : vector<8x128xf32>
    %41 = arith.mulf %29, %40 : vector<8x128xf32>
    %42 = arith.addf %38, %41 : vector<8x128xf32>
    %43 = math.tanh %42 : vector<8x128xf32>
    %44 = arith.subf %17, %43 : vector<8x128xf32>
    %45 = arith.mulf %37, %44 : vector<8x128xf32>
    %46 = arith.addf %43, %45 : vector<8x128xf32>
    %47 = arith.index_cast %c0_i32 : i32 to index
    %c0_23 = arith.constant 0 : index
    %c0_24 = arith.constant 0 : index
    %48 = vector.load %arg9[%47, %c0_23, %c0_24] : memref<8x8x128xf32, #tpu.memory_space<vmem>>, vector<1x8x128xf32>
    %49 = vector.shape_cast %48 : vector<1x8x128xf32> to vector<8x128xf32>
    %50 = vector.shape_cast %46 : vector<8x128xf32> to vector<1x8x128xf32>
    tpu.vector_store %arg9[%47, %c0_23, %c0_24], %50 {strides = array<i32>} : memref<8x8x128xf32, #tpu.memory_space<vmem>>, vector<1x8x128xf32>,
    %c1_i32 = arith.constant 1 : i32
    %51 = arith.index_cast %c1_i32 : i32 to index
    %c0_25 = arith.constant 0 : index
    %c0_26 = arith.constant 0 : index
    %52 = vector.load %arg10[%51, %c0_25, %c0_26] : memref<8x8x384xf32, #tpu.memory_space<vmem>>, vector<1x8x384xf32>
    %53 = vector.shape_cast %52 : vector<1x8x384xf32> to vector<8x384xf32>
    %cst_27 = arith.constant dense<0.000000e+00> : vector<8x384xf32>
    %54 = tpu.matmul %46, %12, %cst_27 {dimension_numbers = #tpu.dot_dimension_numbers<[1], [0], [0], [1], [0, 0, 1, 1], [], []>} : vector<8x128xf32>, vector<128x384xf32>, vector<8x384xf32> -> vector<8x384xf32>
    %55 = vector.extract_strided_slice %53 {offsets = [0, 0], sizes = [8, 128], strides = [1, 1]} : vector<8x384xf32> to vector<8x128xf32>
    %56 = vector.extract_strided_slice %54 {offsets = [0, 0], sizes = [8, 128], strides = [1, 1]} : vector<8x384xf32> to vector<8x128xf32>
    %57 = arith.addf %55, %56 : vector<8x128xf32>
    %58 = arith.negf %57 : vector<8x128xf32>
    %59 = math.exp %58 : vector<8x128xf32>
    %cst_28 = arith.constant 1.000000e+00 : f32
    %60 = vector.broadcast %cst_28 : f32 to vector<8x128xf32>
    %61 = arith.addf %60, %59 : vector<8x128xf32>
    %62 = arith.divf %60, %61 : vector<8x128xf32>
    %63 = vector.extract_strided_slice %53 {offsets = [0, 128], sizes = [8, 128], strides = [1, 1]} : vector<8x384xf32> to vector<8x128xf32>
    %64 = vector.extract_strided_slice %54 {offsets = [0, 128], sizes = [8, 128], strides = [1, 1]} : vector<8x384xf32> to vector<8x128xf32>
    %65 = arith.addf %63, %64 : vector<8x128xf32>
    %66 = arith.negf %65 : vector<8x128xf32>
    %67 = math.exp %66 : vector<8x128xf32>
    %cst_29 = arith.constant 1.000000e+00 : f32
    %68 = vector.broadcast %cst_29 : f32 to vector<8x128xf32>
    %69 = arith.addf %68, %67 : vector<8x128xf32>
    %70 = arith.divf %68, %69 : vector<8x128xf32>
    %71 = vector.extract_strided_slice %53 {offsets = [0, 256], sizes = [8, 128], strides = [1, 1]} : vector<8x384xf32> to vector<8x128xf32>
    %72 = vector.extract_strided_slice %54 {offsets = [0, 256], sizes = [8, 128], strides = [1, 1]} : vector<8x384xf32> to vector<8x128xf32>
    %73 = arith.addf %72, %16 : vector<8x128xf32>
    %74 = arith.mulf %62, %73 : vector<8x128xf32>
    %75 = arith.addf %71, %74 : vector<8x128xf32>
    %76 = math.tanh %75 : vector<8x128xf32>
    %77 = arith.subf %46, %76 : vector<8x128xf32>
    %78 = arith.mulf %70, %77 : vector<8x128xf32>
    %79 = arith.addf %76, %78 : vector<8x128xf32>
    %80 = arith.index_cast %c1_i32 : i32 to index
    %c0_30 = arith.constant 0 : index
    %c0_31 = arith.constant 0 : index
    %81 = vector.load %arg9[%80, %c0_30, %c0_31] : memref<8x8x128xf32, #tpu.memory_space<vmem>>, vector<1x8x128xf32>
    %82 = vector.shape_cast %81 : vector<1x8x128xf32> to vector<8x128xf32>
    %83 = vector.shape_cast %79 : vector<8x128xf32> to vector<1x8x128xf32>
    tpu.vector_store %arg9[%80, %c0_30, %c0_31], %83 {strides = array<i32>} : memref<8x8x128xf32, #tpu.memory_space<vmem>>, vector<1x8x128xf32>,
    %c2_i32 = arith.constant 2 : i32
    %84 = arith.index_cast %c2_i32 : i32 to index
    %c0_32 = arith.constant 0 : index
    %c0_33 = arith.constant 0 : index
    %85 = vector.load %arg10[%84, %c0_32, %c0_33] : memref<8x8x384xf32, #tpu.memory_space<vmem>>, vector<1x8x384xf32>
    %86 = vector.shape_cast %85 : vector<1x8x384xf32> to vector<8x384xf32>
    %cst_34 = arith.constant dense<0.000000e+00> : vector<8x384xf32>
    %87 = tpu.matmul %79, %12, %cst_34 {dimension_numbers = #tpu.dot_dimension_numbers<[1], [0], [0], [1], [0, 0, 1, 1], [], []>} : vector<8x128xf32>, vector<128x384xf32>, vector<8x384xf32> -> vector<8x384xf32>
    %88 = vector.extract_strided_slice %86 {offsets = [0, 0], sizes = [8, 128], strides = [1, 1]} : vector<8x384xf32> to vector<8x128xf32>
    %89 = vector.extract_strided_slice %87 {offsets = [0, 0], sizes = [8, 128], strides = [1, 1]} : vector<8x384xf32> to vector<8x128xf32>
    %90 = arith.addf %88, %89 : vector<8x128xf32>
    %91 = arith.negf %90 : vector<8x128xf32>
    %92 = math.exp %91 : vector<8x128xf32>
    %cst_35 = arith.constant 1.000000e+00 : f32
    %93 = vector.broadcast %cst_35 : f32 to vector<8x128xf32>
    %94 = arith.addf %93, %92 : vector<8x128xf32>
    %95 = arith.divf %93, %94 : vector<8x128xf32>
    %96 = vector.extract_strided_slice %86 {offsets = [0, 128], sizes = [8, 128], strides = [1, 1]} : vector<8x384xf32> to vector<8x128xf32>
    %97 = vector.extract_strided_slice %87 {offsets = [0, 128], sizes = [8, 128], strides = [1, 1]} : vector<8x384xf32> to vector<8x128xf32>
    %98 = arith.addf %96, %97 : vector<8x128xf32>
    %99 = arith.negf %98 : vector<8x128xf32>
    %100 = math.exp %99 : vector<8x128xf32>
    %cst_36 = arith.constant 1.000000e+00 : f32
    %101 = vector.broadcast %cst_36 : f32 to vector<8x128xf32>
    %102 = arith.addf %101, %100 : vector<8x128xf32>
    %103 = arith.divf %101, %102 : vector<8x128xf32>
    %104 = vector.extract_strided_slice %86 {offsets = [0, 256], sizes = [8, 128], strides = [1, 1]} : vector<8x384xf32> to vector<8x128xf32>
    %105 = vector.extract_strided_slice %87 {offsets = [0, 256], sizes = [8, 128], strides = [1, 1]} : vector<8x384xf32> to vector<8x128xf32>
    %106 = arith.addf %105, %16 : vector<8x128xf32>
    %107 = arith.mulf %95, %106 : vector<8x128xf32>
    %108 = arith.addf %104, %107 : vector<8x128xf32>
    %109 = math.tanh %108 : vector<8x128xf32>
    %110 = arith.subf %79, %109 : vector<8x128xf32>
    %111 = arith.mulf %103, %110 : vector<8x128xf32>
    %112 = arith.addf %109, %111 : vector<8x128xf32>
    %113 = arith.index_cast %c2_i32 : i32 to index
    %c0_37 = arith.constant 0 : index
    %c0_38 = arith.constant 0 : index
    %114 = vector.load %arg9[%113, %c0_37, %c0_38] : memref<8x8x128xf32, #tpu.memory_space<vmem>>, vector<1x8x128xf32>
    %115 = vector.shape_cast %114 : vector<1x8x128xf32> to vector<8x128xf32>
    %116 = vector.shape_cast %112 : vector<8x128xf32> to vector<1x8x128xf32>
    tpu.vector_store %arg9[%113, %c0_37, %c0_38], %116 {strides = array<i32>} : memref<8x8x128xf32, #tpu.memory_space<vmem>>, vector<1x8x128xf32>,
    %c3_i32 = arith.constant 3 : i32
    %117 = arith.index_cast %c3_i32 : i32 to index
    %c0_39 = arith.constant 0 : index
    %c0_40 = arith.constant 0 : index
    %118 = vector.load %arg10[%117, %c0_39, %c0_40] : memref<8x8x384xf32, #tpu.memory_space<vmem>>, vector<1x8x384xf32>
    %119 = vector.shape_cast %118 : vector<1x8x384xf32> to vector<8x384xf32>
    %cst_41 = arith.constant dense<0.000000e+00> : vector<8x384xf32>
    %120 = tpu.matmul %112, %12, %cst_41 {dimension_numbers = #tpu.dot_dimension_numbers<[1], [0], [0], [1], [0, 0, 1, 1], [], []>} : vector<8x128xf32>, vector<128x384xf32>, vector<8x384xf32> -> vector<8x384xf32>
    %121 = vector.extract_strided_slice %119 {offsets = [0, 0], sizes = [8, 128], strides = [1, 1]} : vector<8x384xf32> to vector<8x128xf32>
    %122 = vector.extract_strided_slice %120 {offsets = [0, 0], sizes = [8, 128], strides = [1, 1]} : vector<8x384xf32> to vector<8x128xf32>
    %123 = arith.addf %121, %122 : vector<8x128xf32>
    %124 = arith.negf %123 : vector<8x128xf32>
    %125 = math.exp %124 : vector<8x128xf32>
    %cst_42 = arith.constant 1.000000e+00 : f32
    %126 = vector.broadcast %cst_42 : f32 to vector<8x128xf32>
    %127 = arith.addf %126, %125 : vector<8x128xf32>
    %128 = arith.divf %126, %127 : vector<8x128xf32>
    %129 = vector.extract_strided_slice %119 {offsets = [0, 128], sizes = [8, 128], strides = [1, 1]} : vector<8x384xf32> to vector<8x128xf32>
    %130 = vector.extract_strided_slice %120 {offsets = [0, 128], sizes = [8, 128], strides = [1, 1]} : vector<8x384xf32> to vector<8x128xf32>
    %131 = arith.addf %129, %130 : vector<8x128xf32>
    %132 = arith.negf %131 : vector<8x128xf32>
    %133 = math.exp %132 : vector<8x128xf32>
    %cst_43 = arith.constant 1.000000e+00 : f32
    %134 = vector.broadcast %cst_43 : f32 to vector<8x128xf32>
    %135 = arith.addf %134, %133 : vector<8x128xf32>
    %136 = arith.divf %134, %135 : vector<8x128xf32>
    %137 = vector.extract_strided_slice %119 {offsets = [0, 256], sizes = [8, 128], strides = [1, 1]} : vector<8x384xf32> to vector<8x128xf32>
    %138 = vector.extract_strided_slice %120 {offsets = [0, 256], sizes = [8, 128], strides = [1, 1]} : vector<8x384xf32> to vector<8x128xf32>
    %139 = arith.addf %138, %16 : vector<8x128xf32>
    %140 = arith.mulf %128, %139 : vector<8x128xf32>
    %141 = arith.addf %137, %140 : vector<8x128xf32>
    %142 = math.tanh %141 : vector<8x128xf32>
    %143 = arith.subf %112, %142 : vector<8x128xf32>
    %144 = arith.mulf %136, %143 : vector<8x128xf32>
    %145 = arith.addf %142, %144 : vector<8x128xf32>
    %146 = arith.index_cast %c3_i32 : i32 to index
    %c0_44 = arith.constant 0 : index
    %c0_45 = arith.constant 0 : index
    %147 = vector.load %arg9[%146, %c0_44, %c0_45] : memref<8x8x128xf32, #tpu.memory_space<vmem>>, vector<1x8x128xf32>
    %148 = vector.shape_cast %147 : vector<1x8x128xf32> to vector<8x128xf32>
    %149 = vector.shape_cast %145 : vector<8x128xf32> to vector<1x8x128xf32>
    tpu.vector_store %arg9[%146, %c0_44, %c0_45], %149 {strides = array<i32>} : memref<8x8x128xf32, #tpu.memory_space<vmem>>, vector<1x8x128xf32>,
    %c4_i32 = arith.constant 4 : i32
    %150 = arith.index_cast %c4_i32 : i32 to index
    %c0_46 = arith.constant 0 : index
    %c0_47 = arith.constant 0 : index
    %151 = vector.load %arg10[%150, %c0_46, %c0_47] : memref<8x8x384xf32, #tpu.memory_space<vmem>>, vector<1x8x384xf32>
    %152 = vector.shape_cast %151 : vector<1x8x384xf32> to vector<8x384xf32>
    %cst_48 = arith.constant dense<0.000000e+00> : vector<8x384xf32>
    %153 = tpu.matmul %145, %12, %cst_48 {dimension_numbers = #tpu.dot_dimension_numbers<[1], [0], [0], [1], [0, 0, 1, 1], [], []>} : vector<8x128xf32>, vector<128x384xf32>, vector<8x384xf32> -> vector<8x384xf32>
    %154 = vector.extract_strided_slice %152 {offsets = [0, 0], sizes = [8, 128], strides = [1, 1]} : vector<8x384xf32> to vector<8x128xf32>
    %155 = vector.extract_strided_slice %153 {offsets = [0, 0], sizes = [8, 128], strides = [1, 1]} : vector<8x384xf32> to vector<8x128xf32>
    %156 = arith.addf %154, %155 : vector<8x128xf32>
    %157 = arith.negf %156 : vector<8x128xf32>
    %158 = math.exp %157 : vector<8x128xf32>
    %cst_49 = arith.constant 1.000000e+00 : f32
    %159 = vector.broadcast %cst_49 : f32 to vector<8x128xf32>
    %160 = arith.addf %159, %158 : vector<8x128xf32>
    %161 = arith.divf %159, %160 : vector<8x128xf32>
    %162 = vector.extract_strided_slice %152 {offsets = [0, 128], sizes = [8, 128], strides = [1, 1]} : vector<8x384xf32> to vector<8x128xf32>
    %163 = vector.extract_strided_slice %153 {offsets = [0, 128], sizes = [8, 128], strides = [1, 1]} : vector<8x384xf32> to vector<8x128xf32>
    %164 = arith.addf %162, %163 : vector<8x128xf32>
    %165 = arith.negf %164 : vector<8x128xf32>
    %166 = math.exp %165 : vector<8x128xf32>
    %cst_50 = arith.constant 1.000000e+00 : f32
    %167 = vector.broadcast %cst_50 : f32 to vector<8x128xf32>
    %168 = arith.addf %167, %166 : vector<8x128xf32>
    %169 = arith.divf %167, %168 : vector<8x128xf32>
    %170 = vector.extract_strided_slice %152 {offsets = [0, 256], sizes = [8, 128], strides = [1, 1]} : vector<8x384xf32> to vector<8x128xf32>
    %171 = vector.extract_strided_slice %153 {offsets = [0, 256], sizes = [8, 128], strides = [1, 1]} : vector<8x384xf32> to vector<8x128xf32>
    %172 = arith.addf %171, %16 : vector<8x128xf32>
    %173 = arith.mulf %161, %172 : vector<8x128xf32>
    %174 = arith.addf %170, %173 : vector<8x128xf32>
    %175 = math.tanh %174 : vector<8x128xf32>
    %176 = arith.subf %145, %175 : vector<8x128xf32>
    %177 = arith.mulf %169, %176 : vector<8x128xf32>
    %178 = arith.addf %175, %177 : vector<8x128xf32>
    %179 = arith.index_cast %c4_i32 : i32 to index
    %c0_51 = arith.constant 0 : index
    %c0_52 = arith.constant 0 : index
    %180 = vector.load %arg9[%179, %c0_51, %c0_52] : memref<8x8x128xf32, #tpu.memory_space<vmem>>, vector<1x8x128xf32>
    %181 = vector.shape_cast %180 : vector<1x8x128xf32> to vector<8x128xf32>
    %182 = vector.shape_cast %178 : vector<8x128xf32> to vector<1x8x128xf32>
    tpu.vector_store %arg9[%179, %c0_51, %c0_52], %182 {strides = array<i32>} : memref<8x8x128xf32, #tpu.memory_space<vmem>>, vector<1x8x128xf32>,
    %c5_i32 = arith.constant 5 : i32
    %183 = arith.index_cast %c5_i32 : i32 to index
    %c0_53 = arith.constant 0 : index
    %c0_54 = arith.constant 0 : index
    %184 = vector.load %arg10[%183, %c0_53, %c0_54] : memref<8x8x384xf32, #tpu.memory_space<vmem>>, vector<1x8x384xf32>
    %185 = vector.shape_cast %184 : vector<1x8x384xf32> to vector<8x384xf32>
    %cst_55 = arith.constant dense<0.000000e+00> : vector<8x384xf32>
    %186 = tpu.matmul %178, %12, %cst_55 {dimension_numbers = #tpu.dot_dimension_numbers<[1], [0], [0], [1], [0, 0, 1, 1], [], []>} : vector<8x128xf32>, vector<128x384xf32>, vector<8x384xf32> -> vector<8x384xf32>
    %187 = vector.extract_strided_slice %185 {offsets = [0, 0], sizes = [8, 128], strides = [1, 1]} : vector<8x384xf32> to vector<8x128xf32>
    %188 = vector.extract_strided_slice %186 {offsets = [0, 0], sizes = [8, 128], strides = [1, 1]} : vector<8x384xf32> to vector<8x128xf32>
    %189 = arith.addf %187, %188 : vector<8x128xf32>
    %190 = arith.negf %189 : vector<8x128xf32>
    %191 = math.exp %190 : vector<8x128xf32>
    %cst_56 = arith.constant 1.000000e+00 : f32
    %192 = vector.broadcast %cst_56 : f32 to vector<8x128xf32>
    %193 = arith.addf %192, %191 : vector<8x128xf32>
    %194 = arith.divf %192, %193 : vector<8x128xf32>
    %195 = vector.extract_strided_slice %185 {offsets = [0, 128], sizes = [8, 128], strides = [1, 1]} : vector<8x384xf32> to vector<8x128xf32>
    %196 = vector.extract_strided_slice %186 {offsets = [0, 128], sizes = [8, 128], strides = [1, 1]} : vector<8x384xf32> to vector<8x128xf32>
    %197 = arith.addf %195, %196 : vector<8x128xf32>
    %198 = arith.negf %197 : vector<8x128xf32>
    %199 = math.exp %198 : vector<8x128xf32>
    %cst_57 = arith.constant 1.000000e+00 : f32
    %200 = vector.broadcast %cst_57 : f32 to vector<8x128xf32>
    %201 = arith.addf %200, %199 : vector<8x128xf32>
    %202 = arith.divf %200, %201 : vector<8x128xf32>
    %203 = vector.extract_strided_slice %185 {offsets = [0, 256], sizes = [8, 128], strides = [1, 1]} : vector<8x384xf32> to vector<8x128xf32>
    %204 = vector.extract_strided_slice %186 {offsets = [0, 256], sizes = [8, 128], strides = [1, 1]} : vector<8x384xf32> to vector<8x128xf32>
    %205 = arith.addf %204, %16 : vector<8x128xf32>
    %206 = arith.mulf %194, %205 : vector<8x128xf32>
    %207 = arith.addf %203, %206 : vector<8x128xf32>
    %208 = math.tanh %207 : vector<8x128xf32>
    %209 = arith.subf %178, %208 : vector<8x128xf32>
    %210 = arith.mulf %202, %209 : vector<8x128xf32>
    %211 = arith.addf %208, %210 : vector<8x128xf32>
    %212 = arith.index_cast %c5_i32 : i32 to index
    %c0_58 = arith.constant 0 : index
    %c0_59 = arith.constant 0 : index
    %213 = vector.load %arg9[%212, %c0_58, %c0_59] : memref<8x8x128xf32, #tpu.memory_space<vmem>>, vector<1x8x128xf32>
    %214 = vector.shape_cast %213 : vector<1x8x128xf32> to vector<8x128xf32>
    %215 = vector.shape_cast %211 : vector<8x128xf32> to vector<1x8x128xf32>
    tpu.vector_store %arg9[%212, %c0_58, %c0_59], %215 {strides = array<i32>} : memref<8x8x128xf32, #tpu.memory_space<vmem>>, vector<1x8x128xf32>,
    %c6_i32 = arith.constant 6 : i32
    %216 = arith.index_cast %c6_i32 : i32 to index
    %c0_60 = arith.constant 0 : index
    %c0_61 = arith.constant 0 : index
    %217 = vector.load %arg10[%216, %c0_60, %c0_61] : memref<8x8x384xf32, #tpu.memory_space<vmem>>, vector<1x8x384xf32>
    %218 = vector.shape_cast %217 : vector<1x8x384xf32> to vector<8x384xf32>
    %cst_62 = arith.constant dense<0.000000e+00> : vector<8x384xf32>
    %219 = tpu.matmul %211, %12, %cst_62 {dimension_numbers = #tpu.dot_dimension_numbers<[1], [0], [0], [1], [0, 0, 1, 1], [], []>} : vector<8x128xf32>, vector<128x384xf32>, vector<8x384xf32> -> vector<8x384xf32>
    %220 = vector.extract_strided_slice %218 {offsets = [0, 0], sizes = [8, 128], strides = [1, 1]} : vector<8x384xf32> to vector<8x128xf32>
    %221 = vector.extract_strided_slice %219 {offsets = [0, 0], sizes = [8, 128], strides = [1, 1]} : vector<8x384xf32> to vector<8x128xf32>
    %222 = arith.addf %220, %221 : vector<8x128xf32>
    %223 = arith.negf %222 : vector<8x128xf32>
    %224 = math.exp %223 : vector<8x128xf32>
    %cst_63 = arith.constant 1.000000e+00 : f32
    %225 = vector.broadcast %cst_63 : f32 to vector<8x128xf32>
    %226 = arith.addf %225, %224 : vector<8x128xf32>
    %227 = arith.divf %225, %226 : vector<8x128xf32>
    %228 = vector.extract_strided_slice %218 {offsets = [0, 128], sizes = [8, 128], strides = [1, 1]} : vector<8x384xf32> to vector<8x128xf32>
    %229 = vector.extract_strided_slice %219 {offsets = [0, 128], sizes = [8, 128], strides = [1, 1]} : vector<8x384xf32> to vector<8x128xf32>
    %230 = arith.addf %228, %229 : vector<8x128xf32>
    %231 = arith.negf %230 : vector<8x128xf32>
    %232 = math.exp %231 : vector<8x128xf32>
    %cst_64 = arith.constant 1.000000e+00 : f32
    %233 = vector.broadcast %cst_64 : f32 to vector<8x128xf32>
    %234 = arith.addf %233, %232 : vector<8x128xf32>
    %235 = arith.divf %233, %234 : vector<8x128xf32>
    %236 = vector.extract_strided_slice %218 {offsets = [0, 256], sizes = [8, 128], strides = [1, 1]} : vector<8x384xf32> to vector<8x128xf32>
    %237 = vector.extract_strided_slice %219 {offsets = [0, 256], sizes = [8, 128], strides = [1, 1]} : vector<8x384xf32> to vector<8x128xf32>
    %238 = arith.addf %237, %16 : vector<8x128xf32>
    %239 = arith.mulf %227, %238 : vector<8x128xf32>
    %240 = arith.addf %236, %239 : vector<8x128xf32>
    %241 = math.tanh %240 : vector<8x128xf32>
    %242 = arith.subf %211, %241 : vector<8x128xf32>
    %243 = arith.mulf %235, %242 : vector<8x128xf32>
    %244 = arith.addf %241, %243 : vector<8x128xf32>
    %245 = arith.index_cast %c6_i32 : i32 to index
    %c0_65 = arith.constant 0 : index
    %c0_66 = arith.constant 0 : index
    %246 = vector.load %arg9[%245, %c0_65, %c0_66] : memref<8x8x128xf32, #tpu.memory_space<vmem>>, vector<1x8x128xf32>
    %247 = vector.shape_cast %246 : vector<1x8x128xf32> to vector<8x128xf32>
    %248 = vector.shape_cast %244 : vector<8x128xf32> to vector<1x8x128xf32>
    tpu.vector_store %arg9[%245, %c0_65, %c0_66], %248 {strides = array<i32>} : memref<8x8x128xf32, #tpu.memory_space<vmem>>, vector<1x8x128xf32>,
    %c7_i32 = arith.constant 7 : i32
    %249 = arith.index_cast %c7_i32 : i32 to index
    %c0_67 = arith.constant 0 : index
    %c0_68 = arith.constant 0 : index
    %250 = vector.load %arg10[%249, %c0_67, %c0_68] : memref<8x8x384xf32, #tpu.memory_space<vmem>>, vector<1x8x384xf32>
    %251 = vector.shape_cast %250 : vector<1x8x384xf32> to vector<8x384xf32>
    %cst_69 = arith.constant dense<0.000000e+00> : vector<8x384xf32>
    %252 = tpu.matmul %244, %12, %cst_69 {dimension_numbers = #tpu.dot_dimension_numbers<[1], [0], [0], [1], [0, 0, 1, 1], [], []>} : vector<8x128xf32>, vector<128x384xf32>, vector<8x384xf32> -> vector<8x384xf32>
    %253 = vector.extract_strided_slice %251 {offsets = [0, 0], sizes = [8, 128], strides = [1, 1]} : vector<8x384xf32> to vector<8x128xf32>
    %254 = vector.extract_strided_slice %252 {offsets = [0, 0], sizes = [8, 128], strides = [1, 1]} : vector<8x384xf32> to vector<8x128xf32>
    %255 = arith.addf %253, %254 : vector<8x128xf32>
    %256 = arith.negf %255 : vector<8x128xf32>
    %257 = math.exp %256 : vector<8x128xf32>
    %cst_70 = arith.constant 1.000000e+00 : f32
    %258 = vector.broadcast %cst_70 : f32 to vector<8x128xf32>
    %259 = arith.addf %258, %257 : vector<8x128xf32>
    %260 = arith.divf %258, %259 : vector<8x128xf32>
    %261 = vector.extract_strided_slice %251 {offsets = [0, 128], sizes = [8, 128], strides = [1, 1]} : vector<8x384xf32> to vector<8x128xf32>
    %262 = vector.extract_strided_slice %252 {offsets = [0, 128], sizes = [8, 128], strides = [1, 1]} : vector<8x384xf32> to vector<8x128xf32>
    %263 = arith.addf %261, %262 : vector<8x128xf32>
    %264 = arith.negf %263 : vector<8x128xf32>
    %265 = math.exp %264 : vector<8x128xf32>
    %cst_71 = arith.constant 1.000000e+00 : f32
    %266 = vector.broadcast %cst_71 : f32 to vector<8x128xf32>
    %267 = arith.addf %266, %265 : vector<8x128xf32>
    %268 = arith.divf %266, %267 : vector<8x128xf32>
    %269 = vector.extract_strided_slice %251 {offsets = [0, 256], sizes = [8, 128], strides = [1, 1]} : vector<8x384xf32> to vector<8x128xf32>
    %270 = vector.extract_strided_slice %252 {offsets = [0, 256], sizes = [8, 128], strides = [1, 1]} : vector<8x384xf32> to vector<8x128xf32>
    %271 = arith.addf %270, %16 : vector<8x128xf32>
    %272 = arith.mulf %260, %271 : vector<8x128xf32>
    %273 = arith.addf %269, %272 : vector<8x128xf32>
    %274 = math.tanh %273 : vector<8x128xf32>
    %275 = arith.subf %244, %274 : vector<8x128xf32>
    %276 = arith.mulf %268, %275 : vector<8x128xf32>
    %277 = arith.addf %274, %276 : vector<8x128xf32>
    %278 = arith.index_cast %c7_i32 : i32 to index
    %c0_72 = arith.constant 0 : index
    %c0_73 = arith.constant 0 : index
    %279 = vector.load %arg9[%278, %c0_72, %c0_73] : memref<8x8x128xf32, #tpu.memory_space<vmem>>, vector<1x8x128xf32>
    %280 = vector.shape_cast %279 : vector<1x8x128xf32> to vector<8x128xf32>
    %281 = vector.shape_cast %277 : vector<8x128xf32> to vector<1x8x128xf32>
    tpu.vector_store %arg9[%278, %c0_72, %c0_73], %281 {strides = array<i32>} : memref<8x8x128xf32, #tpu.memory_space<vmem>>, vector<1x8x128xf32>,
    %c8_i32 = arith.constant 8 : i32
    %c0_74 = arith.constant 0 : index
    %c0_75 = arith.constant 0 : index
    %c0_76 = arith.constant 0 : index
    %282 = vector.load %arg9[%c0_74, %c0_75, %c0_76] : memref<8x8x128xf32, #tpu.memory_space<vmem>>, vector<8x8x128xf32>
    %283 = vector.shape_cast %282 : vector<8x8x128xf32> to vector<64x128xf32>
    %c1 = arith.constant 1 : index
    %c0_77 = arith.constant 0 : index
    %c0_78 = arith.constant 0 : index
    %284 = vector.load %arg2[%c1, %c0_77, %c0_78] : memref<2x128x384xf32, #tpu.memory_space<vmem>>, vector<1x128x384xf32>
    %285 = vector.shape_cast %284 : vector<1x128x384xf32> to vector<128x384xf32>
    %cst_79 = arith.constant dense<0.000000e+00> : vector<64x384xf32>
    %286 = tpu.matmul %283, %285, %cst_79 {dimension_numbers = #tpu.dot_dimension_numbers<[1], [0], [0], [1], [0, 0, 1, 1], [], []>} : vector<64x128xf32>, vector<128x384xf32>, vector<64x384xf32> -> vector<64x384xf32>
    %c1_80 = arith.constant 1 : index
    %c0_81 = arith.constant 0 : index
    %c0_82 = arith.constant 0 : index
    %287 = vector.load %arg4[%c1_80, %c0_81, %c0_82] : memref<2x1x384xf32, #tpu.memory_space<vmem>>, vector<1x1x384xf32>
    %288 = vector.shape_cast %287 : vector<1x1x384xf32> to vector<1x384xf32>
    %289 = vector.broadcast %288 : vector<1x384xf32> to vector<64x384xf32>
    %290 = arith.addf %286, %289 : vector<64x384xf32>
    %291 = vector.shape_cast %290 : vector<64x384xf32> to vector<8x8x384xf32>
    %c0_83 = arith.constant 0 : index
    %c0_84 = arith.constant 0 : index
    %c0_85 = arith.constant 0 : index
    %292 = vector.load %arg10[%c0_83, %c0_84, %c0_85] : memref<8x8x384xf32, #tpu.memory_space<vmem>>, vector<8x8x384xf32>
    tpu.vector_store %arg10[%c0_83, %c0_84, %c0_85], %291 {strides = array<i32>} : memref<8x8x384xf32, #tpu.memory_space<vmem>>, vector<8x8x384xf32>,
    %c1_86 = arith.constant 1 : index
    %c0_87 = arith.constant 0 : index
    %c0_88 = arith.constant 0 : index
    %293 = vector.load %arg3[%c1_86, %c0_87, %c0_88] : memref<2x128x384xf32, #tpu.memory_space<vmem>>, vector<1x128x384xf32>
    %294 = vector.shape_cast %293 : vector<1x128x384xf32> to vector<128x384xf32>
    %c1_89 = arith.constant 1 : index
    %c0_90 = arith.constant 0 : index
    %c0_91 = arith.constant 0 : index
    %295 = vector.load %arg5[%c1_89, %c0_90, %c0_91] : memref<2x1x128xf32, #tpu.memory_space<vmem>>, vector<1x1x128xf32>
    %296 = vector.shape_cast %295 : vector<1x1x128xf32> to vector<1x128xf32>
    %297 = vector.shape_cast %296 : vector<1x128xf32> to vector<1x128xf32>
    %298 = vector.broadcast %297 : vector<1x128xf32> to vector<8x128xf32>
    %cst_92 = arith.constant 0.000000e+00 : f32
    %299 = vector.broadcast %cst_92 : f32 to vector<8x128xf32>
    %c0_i32_93 = arith.constant 0 : i32
    %300 = arith.index_cast %c0_i32_93 : i32 to index
    %c0_94 = arith.constant 0 : index
    %c0_95 = arith.constant 0 : index
    %301 = vector.load %arg10[%300, %c0_94, %c0_95] : memref<8x8x384xf32, #tpu.memory_space<vmem>>, vector<1x8x384xf32>
    %302 = vector.shape_cast %301 : vector<1x8x384xf32> to vector<8x384xf32>
    %cst_96 = arith.constant dense<0.000000e+00> : vector<8x384xf32>
    %303 = tpu.matmul %299, %294, %cst_96 {dimension_numbers = #tpu.dot_dimension_numbers<[1], [0], [0], [1], [0, 0, 1, 1], [], []>} : vector<8x128xf32>, vector<128x384xf32>, vector<8x384xf32> -> vector<8x384xf32>
    %304 = vector.extract_strided_slice %302 {offsets = [0, 0], sizes = [8, 128], strides = [1, 1]} : vector<8x384xf32> to vector<8x128xf32>
    %305 = vector.extract_strided_slice %303 {offsets = [0, 0], sizes = [8, 128], strides = [1, 1]} : vector<8x384xf32> to vector<8x128xf32>
    %306 = arith.addf %304, %305 : vector<8x128xf32>
    %307 = arith.negf %306 : vector<8x128xf32>
    %308 = math.exp %307 : vector<8x128xf32>
    %cst_97 = arith.constant 1.000000e+00 : f32
    %309 = vector.broadcast %cst_97 : f32 to vector<8x128xf32>
    %310 = arith.addf %309, %308 : vector<8x128xf32>
    %311 = arith.divf %309, %310 : vector<8x128xf32>
    %312 = vector.extract_strided_slice %302 {offsets = [0, 128], sizes = [8, 128], strides = [1, 1]} : vector<8x384xf32> to vector<8x128xf32>
    %313 = vector.extract_strided_slice %303 {offsets = [0, 128], sizes = [8, 128], strides = [1, 1]} : vector<8x384xf32> to vector<8x128xf32>
    %314 = arith.addf %312, %313 : vector<8x128xf32>
    %315 = arith.negf %314 : vector<8x128xf32>
    %316 = math.exp %315 : vector<8x128xf32>
    %cst_98 = arith.constant 1.000000e+00 : f32
    %317 = vector.broadcast %cst_98 : f32 to vector<8x128xf32>
    %318 = arith.addf %317, %316 : vector<8x128xf32>
    %319 = arith.divf %317, %318 : vector<8x128xf32>
    %320 = vector.extract_strided_slice %302 {offsets = [0, 256], sizes = [8, 128], strides = [1, 1]} : vector<8x384xf32> to vector<8x128xf32>
    %321 = vector.extract_strided_slice %303 {offsets = [0, 256], sizes = [8, 128], strides = [1, 1]} : vector<8x384xf32> to vector<8x128xf32>
    %322 = arith.addf %321, %298 : vector<8x128xf32>
    %323 = arith.mulf %311, %322 : vector<8x128xf32>
    %324 = arith.addf %320, %323 : vector<8x128xf32>
    %325 = math.tanh %324 : vector<8x128xf32>
    %326 = arith.subf %299, %325 : vector<8x128xf32>
    %327 = arith.mulf %319, %326 : vector<8x128xf32>
    %328 = arith.addf %325, %327 : vector<8x128xf32>
    %329 = arith.index_cast %c0_i32_93 : i32 to index
    %c0_99 = arith.constant 0 : index
    %c0_100 = arith.constant 0 : index
    %330 = vector.load %arg9[%329, %c0_99, %c0_100] : memref<8x8x128xf32, #tpu.memory_space<vmem>>, vector<1x8x128xf32>
    %331 = vector.shape_cast %330 : vector<1x8x128xf32> to vector<8x128xf32>
    %332 = vector.shape_cast %328 : vector<8x128xf32> to vector<1x8x128xf32>
    tpu.vector_store %arg9[%329, %c0_99, %c0_100], %332 {strides = array<i32>} : memref<8x8x128xf32, #tpu.memory_space<vmem>>, vector<1x8x128xf32>,
    %c1_i32_101 = arith.constant 1 : i32
    %333 = arith.index_cast %c1_i32_101 : i32 to index
    %c0_102 = arith.constant 0 : index
    %c0_103 = arith.constant 0 : index
    %334 = vector.load %arg10[%333, %c0_102, %c0_103] : memref<8x8x384xf32, #tpu.memory_space<vmem>>, vector<1x8x384xf32>
    %335 = vector.shape_cast %334 : vector<1x8x384xf32> to vector<8x384xf32>
    %cst_104 = arith.constant dense<0.000000e+00> : vector<8x384xf32>
    %336 = tpu.matmul %328, %294, %cst_104 {dimension_numbers = #tpu.dot_dimension_numbers<[1], [0], [0], [1], [0, 0, 1, 1], [], []>} : vector<8x128xf32>, vector<128x384xf32>, vector<8x384xf32> -> vector<8x384xf32>
    %337 = vector.extract_strided_slice %335 {offsets = [0, 0], sizes = [8, 128], strides = [1, 1]} : vector<8x384xf32> to vector<8x128xf32>
    %338 = vector.extract_strided_slice %336 {offsets = [0, 0], sizes = [8, 128], strides = [1, 1]} : vector<8x384xf32> to vector<8x128xf32>
    %339 = arith.addf %337, %338 : vector<8x128xf32>
    %340 = arith.negf %339 : vector<8x128xf32>
    %341 = math.exp %340 : vector<8x128xf32>
    %cst_105 = arith.constant 1.000000e+00 : f32
    %342 = vector.broadcast %cst_105 : f32 to vector<8x128xf32>
    %343 = arith.addf %342, %341 : vector<8x128xf32>
    %344 = arith.divf %342, %343 : vector<8x128xf32>
    %345 = vector.extract_strided_slice %335 {offsets = [0, 128], sizes = [8, 128], strides = [1, 1]} : vector<8x384xf32> to vector<8x128xf32>
    %346 = vector.extract_strided_slice %336 {offsets = [0, 128], sizes = [8, 128], strides = [1, 1]} : vector<8x384xf32> to vector<8x128xf32>
    %347 = arith.addf %345, %346 : vector<8x128xf32>
    %348 = arith.negf %347 : vector<8x128xf32>
    %349 = math.exp %348 : vector<8x128xf32>
    %cst_106 = arith.constant 1.000000e+00 : f32
    %350 = vector.broadcast %cst_106 : f32 to vector<8x128xf32>
    %351 = arith.addf %350, %349 : vector<8x128xf32>
    %352 = arith.divf %350, %351 : vector<8x128xf32>
    %353 = vector.extract_strided_slice %335 {offsets = [0, 256], sizes = [8, 128], strides = [1, 1]} : vector<8x384xf32> to vector<8x128xf32>
    %354 = vector.extract_strided_slice %336 {offsets = [0, 256], sizes = [8, 128], strides = [1, 1]} : vector<8x384xf32> to vector<8x128xf32>
    %355 = arith.addf %354, %298 : vector<8x128xf32>
    %356 = arith.mulf %344, %355 : vector<8x128xf32>
    %357 = arith.addf %353, %356 : vector<8x128xf32>
    %358 = math.tanh %357 : vector<8x128xf32>
    %359 = arith.subf %328, %358 : vector<8x128xf32>
    %360 = arith.mulf %352, %359 : vector<8x128xf32>
    %361 = arith.addf %358, %360 : vector<8x128xf32>
    %362 = arith.index_cast %c1_i32_101 : i32 to index
    %c0_107 = arith.constant 0 : index
    %c0_108 = arith.constant 0 : index
    %363 = vector.load %arg9[%362, %c0_107, %c0_108] : memref<8x8x128xf32, #tpu.memory_space<vmem>>, vector<1x8x128xf32>
    %364 = vector.shape_cast %363 : vector<1x8x128xf32> to vector<8x128xf32>
    %365 = vector.shape_cast %361 : vector<8x128xf32> to vector<1x8x128xf32>
    tpu.vector_store %arg9[%362, %c0_107, %c0_108], %365 {strides = array<i32>} : memref<8x8x128xf32, #tpu.memory_space<vmem>>, vector<1x8x128xf32>,
    %c2_i32_109 = arith.constant 2 : i32
    %366 = arith.index_cast %c2_i32_109 : i32 to index
    %c0_110 = arith.constant 0 : index
    %c0_111 = arith.constant 0 : index
    %367 = vector.load %arg10[%366, %c0_110, %c0_111] : memref<8x8x384xf32, #tpu.memory_space<vmem>>, vector<1x8x384xf32>
    %368 = vector.shape_cast %367 : vector<1x8x384xf32> to vector<8x384xf32>
    %cst_112 = arith.constant dense<0.000000e+00> : vector<8x384xf32>
    %369 = tpu.matmul %361, %294, %cst_112 {dimension_numbers = #tpu.dot_dimension_numbers<[1], [0], [0], [1], [0, 0, 1, 1], [], []>} : vector<8x128xf32>, vector<128x384xf32>, vector<8x384xf32> -> vector<8x384xf32>
    %370 = vector.extract_strided_slice %368 {offsets = [0, 0], sizes = [8, 128], strides = [1, 1]} : vector<8x384xf32> to vector<8x128xf32>
    %371 = vector.extract_strided_slice %369 {offsets = [0, 0], sizes = [8, 128], strides = [1, 1]} : vector<8x384xf32> to vector<8x128xf32>
    %372 = arith.addf %370, %371 : vector<8x128xf32>
    %373 = arith.negf %372 : vector<8x128xf32>
    %374 = math.exp %373 : vector<8x128xf32>
    %cst_113 = arith.constant 1.000000e+00 : f32
    %375 = vector.broadcast %cst_113 : f32 to vector<8x128xf32>
    %376 = arith.addf %375, %374 : vector<8x128xf32>
    %377 = arith.divf %375, %376 : vector<8x128xf32>
    %378 = vector.extract_strided_slice %368 {offsets = [0, 128], sizes = [8, 128], strides = [1, 1]} : vector<8x384xf32> to vector<8x128xf32>
    %379 = vector.extract_strided_slice %369 {offsets = [0, 128], sizes = [8, 128], strides = [1, 1]} : vector<8x384xf32> to vector<8x128xf32>
    %380 = arith.addf %378, %379 : vector<8x128xf32>
    %381 = arith.negf %380 : vector<8x128xf32>
    %382 = math.exp %381 : vector<8x128xf32>
    %cst_114 = arith.constant 1.000000e+00 : f32
    %383 = vector.broadcast %cst_114 : f32 to vector<8x128xf32>
    %384 = arith.addf %383, %382 : vector<8x128xf32>
    %385 = arith.divf %383, %384 : vector<8x128xf32>
    %386 = vector.extract_strided_slice %368 {offsets = [0, 256], sizes = [8, 128], strides = [1, 1]} : vector<8x384xf32> to vector<8x128xf32>
    %387 = vector.extract_strided_slice %369 {offsets = [0, 256], sizes = [8, 128], strides = [1, 1]} : vector<8x384xf32> to vector<8x128xf32>
    %388 = arith.addf %387, %298 : vector<8x128xf32>
    %389 = arith.mulf %377, %388 : vector<8x128xf32>
    %390 = arith.addf %386, %389 : vector<8x128xf32>
    %391 = math.tanh %390 : vector<8x128xf32>
    %392 = arith.subf %361, %391 : vector<8x128xf32>
    %393 = arith.mulf %385, %392 : vector<8x128xf32>
    %394 = arith.addf %391, %393 : vector<8x128xf32>
    %395 = arith.index_cast %c2_i32_109 : i32 to index
    %c0_115 = arith.constant 0 : index
    %c0_116 = arith.constant 0 : index
    %396 = vector.load %arg9[%395, %c0_115, %c0_116] : memref<8x8x128xf32, #tpu.memory_space<vmem>>, vector<1x8x128xf32>
    %397 = vector.shape_cast %396 : vector<1x8x128xf32> to vector<8x128xf32>
    %398 = vector.shape_cast %394 : vector<8x128xf32> to vector<1x8x128xf32>
    tpu.vector_store %arg9[%395, %c0_115, %c0_116], %398 {strides = array<i32>} : memref<8x8x128xf32, #tpu.memory_space<vmem>>, vector<1x8x128xf32>,
    %c3_i32_117 = arith.constant 3 : i32
    %399 = arith.index_cast %c3_i32_117 : i32 to index
    %c0_118 = arith.constant 0 : index
    %c0_119 = arith.constant 0 : index
    %400 = vector.load %arg10[%399, %c0_118, %c0_119] : memref<8x8x384xf32, #tpu.memory_space<vmem>>, vector<1x8x384xf32>
    %401 = vector.shape_cast %400 : vector<1x8x384xf32> to vector<8x384xf32>
    %cst_120 = arith.constant dense<0.000000e+00> : vector<8x384xf32>
    %402 = tpu.matmul %394, %294, %cst_120 {dimension_numbers = #tpu.dot_dimension_numbers<[1], [0], [0], [1], [0, 0, 1, 1], [], []>} : vector<8x128xf32>, vector<128x384xf32>, vector<8x384xf32> -> vector<8x384xf32>
    %403 = vector.extract_strided_slice %401 {offsets = [0, 0], sizes = [8, 128], strides = [1, 1]} : vector<8x384xf32> to vector<8x128xf32>
    %404 = vector.extract_strided_slice %402 {offsets = [0, 0], sizes = [8, 128], strides = [1, 1]} : vector<8x384xf32> to vector<8x128xf32>
    %405 = arith.addf %403, %404 : vector<8x128xf32>
    %406 = arith.negf %405 : vector<8x128xf32>
    %407 = math.exp %406 : vector<8x128xf32>
    %cst_121 = arith.constant 1.000000e+00 : f32
    %408 = vector.broadcast %cst_121 : f32 to vector<8x128xf32>
    %409 = arith.addf %408, %407 : vector<8x128xf32>
    %410 = arith.divf %408, %409 : vector<8x128xf32>
    %411 = vector.extract_strided_slice %401 {offsets = [0, 128], sizes = [8, 128], strides = [1, 1]} : vector<8x384xf32> to vector<8x128xf32>
    %412 = vector.extract_strided_slice %402 {offsets = [0, 128], sizes = [8, 128], strides = [1, 1]} : vector<8x384xf32> to vector<8x128xf32>
    %413 = arith.addf %411, %412 : vector<8x128xf32>
    %414 = arith.negf %413 : vector<8x128xf32>
    %415 = math.exp %414 : vector<8x128xf32>
    %cst_122 = arith.constant 1.000000e+00 : f32
    %416 = vector.broadcast %cst_122 : f32 to vector<8x128xf32>
    %417 = arith.addf %416, %415 : vector<8x128xf32>
    %418 = arith.divf %416, %417 : vector<8x128xf32>
    %419 = vector.extract_strided_slice %401 {offsets = [0, 256], sizes = [8, 128], strides = [1, 1]} : vector<8x384xf32> to vector<8x128xf32>
    %420 = vector.extract_strided_slice %402 {offsets = [0, 256], sizes = [8, 128], strides = [1, 1]} : vector<8x384xf32> to vector<8x128xf32>
    %421 = arith.addf %420, %298 : vector<8x128xf32>
    %422 = arith.mulf %410, %421 : vector<8x128xf32>
    %423 = arith.addf %419, %422 : vector<8x128xf32>
    %424 = math.tanh %423 : vector<8x128xf32>
    %425 = arith.subf %394, %424 : vector<8x128xf32>
    %426 = arith.mulf %418, %425 : vector<8x128xf32>
    %427 = arith.addf %424, %426 : vector<8x128xf32>
    %428 = arith.index_cast %c3_i32_117 : i32 to index
    %c0_123 = arith.constant 0 : index
    %c0_124 = arith.constant 0 : index
    %429 = vector.load %arg9[%428, %c0_123, %c0_124] : memref<8x8x128xf32, #tpu.memory_space<vmem>>, vector<1x8x128xf32>
    %430 = vector.shape_cast %429 : vector<1x8x128xf32> to vector<8x128xf32>
    %431 = vector.shape_cast %427 : vector<8x128xf32> to vector<1x8x128xf32>
    tpu.vector_store %arg9[%428, %c0_123, %c0_124], %431 {strides = array<i32>} : memref<8x8x128xf32, #tpu.memory_space<vmem>>, vector<1x8x128xf32>,
    %c4_i32_125 = arith.constant 4 : i32
    %432 = arith.index_cast %c4_i32_125 : i32 to index
    %c0_126 = arith.constant 0 : index
    %c0_127 = arith.constant 0 : index
    %433 = vector.load %arg10[%432, %c0_126, %c0_127] : memref<8x8x384xf32, #tpu.memory_space<vmem>>, vector<1x8x384xf32>
    %434 = vector.shape_cast %433 : vector<1x8x384xf32> to vector<8x384xf32>
    %cst_128 = arith.constant dense<0.000000e+00> : vector<8x384xf32>
    %435 = tpu.matmul %427, %294, %cst_128 {dimension_numbers = #tpu.dot_dimension_numbers<[1], [0], [0], [1], [0, 0, 1, 1], [], []>} : vector<8x128xf32>, vector<128x384xf32>, vector<8x384xf32> -> vector<8x384xf32>
    %436 = vector.extract_strided_slice %434 {offsets = [0, 0], sizes = [8, 128], strides = [1, 1]} : vector<8x384xf32> to vector<8x128xf32>
    %437 = vector.extract_strided_slice %435 {offsets = [0, 0], sizes = [8, 128], strides = [1, 1]} : vector<8x384xf32> to vector<8x128xf32>
    %438 = arith.addf %436, %437 : vector<8x128xf32>
    %439 = arith.negf %438 : vector<8x128xf32>
    %440 = math.exp %439 : vector<8x128xf32>
    %cst_129 = arith.constant 1.000000e+00 : f32
    %441 = vector.broadcast %cst_129 : f32 to vector<8x128xf32>
    %442 = arith.addf %441, %440 : vector<8x128xf32>
    %443 = arith.divf %441, %442 : vector<8x128xf32>
    %444 = vector.extract_strided_slice %434 {offsets = [0, 128], sizes = [8, 128], strides = [1, 1]} : vector<8x384xf32> to vector<8x128xf32>
    %445 = vector.extract_strided_slice %435 {offsets = [0, 128], sizes = [8, 128], strides = [1, 1]} : vector<8x384xf32> to vector<8x128xf32>
    %446 = arith.addf %444, %445 : vector<8x128xf32>
    %447 = arith.negf %446 : vector<8x128xf32>
    %448 = math.exp %447 : vector<8x128xf32>
    %cst_130 = arith.constant 1.000000e+00 : f32
    %449 = vector.broadcast %cst_130 : f32 to vector<8x128xf32>
    %450 = arith.addf %449, %448 : vector<8x128xf32>
    %451 = arith.divf %449, %450 : vector<8x128xf32>
    %452 = vector.extract_strided_slice %434 {offsets = [0, 256], sizes = [8, 128], strides = [1, 1]} : vector<8x384xf32> to vector<8x128xf32>
    %453 = vector.extract_strided_slice %435 {offsets = [0, 256], sizes = [8, 128], strides = [1, 1]} : vector<8x384xf32> to vector<8x128xf32>
    %454 = arith.addf %453, %298 : vector<8x128xf32>
    %455 = arith.mulf %443, %454 : vector<8x128xf32>
    %456 = arith.addf %452, %455 : vector<8x128xf32>
    %457 = math.tanh %456 : vector<8x128xf32>
    %458 = arith.subf %427, %457 : vector<8x128xf32>
    %459 = arith.mulf %451, %458 : vector<8x128xf32>
    %460 = arith.addf %457, %459 : vector<8x128xf32>
    %461 = arith.index_cast %c4_i32_125 : i32 to index
    %c0_131 = arith.constant 0 : index
    %c0_132 = arith.constant 0 : index
    %462 = vector.load %arg9[%461, %c0_131, %c0_132] : memref<8x8x128xf32, #tpu.memory_space<vmem>>, vector<1x8x128xf32>
    %463 = vector.shape_cast %462 : vector<1x8x128xf32> to vector<8x128xf32>
    %464 = vector.shape_cast %460 : vector<8x128xf32> to vector<1x8x128xf32>
    tpu.vector_store %arg9[%461, %c0_131, %c0_132], %464 {strides = array<i32>} : memref<8x8x128xf32, #tpu.memory_space<vmem>>, vector<1x8x128xf32>,
    %c5_i32_133 = arith.constant 5 : i32
    %465 = arith.index_cast %c5_i32_133 : i32 to index
    %c0_134 = arith.constant 0 : index
    %c0_135 = arith.constant 0 : index
    %466 = vector.load %arg10[%465, %c0_134, %c0_135] : memref<8x8x384xf32, #tpu.memory_space<vmem>>, vector<1x8x384xf32>
    %467 = vector.shape_cast %466 : vector<1x8x384xf32> to vector<8x384xf32>
    %cst_136 = arith.constant dense<0.000000e+00> : vector<8x384xf32>
    %468 = tpu.matmul %460, %294, %cst_136 {dimension_numbers = #tpu.dot_dimension_numbers<[1], [0], [0], [1], [0, 0, 1, 1], [], []>} : vector<8x128xf32>, vector<128x384xf32>, vector<8x384xf32> -> vector<8x384xf32>
    %469 = vector.extract_strided_slice %467 {offsets = [0, 0], sizes = [8, 128], strides = [1, 1]} : vector<8x384xf32> to vector<8x128xf32>
    %470 = vector.extract_strided_slice %468 {offsets = [0, 0], sizes = [8, 128], strides = [1, 1]} : vector<8x384xf32> to vector<8x128xf32>
    %471 = arith.addf %469, %470 : vector<8x128xf32>
    %472 = arith.negf %471 : vector<8x128xf32>
    %473 = math.exp %472 : vector<8x128xf32>
    %cst_137 = arith.constant 1.000000e+00 : f32
    %474 = vector.broadcast %cst_137 : f32 to vector<8x128xf32>
    %475 = arith.addf %474, %473 : vector<8x128xf32>
    %476 = arith.divf %474, %475 : vector<8x128xf32>
    %477 = vector.extract_strided_slice %467 {offsets = [0, 128], sizes = [8, 128], strides = [1, 1]} : vector<8x384xf32> to vector<8x128xf32>
    %478 = vector.extract_strided_slice %468 {offsets = [0, 128], sizes = [8, 128], strides = [1, 1]} : vector<8x384xf32> to vector<8x128xf32>
    %479 = arith.addf %477, %478 : vector<8x128xf32>
    %480 = arith.negf %479 : vector<8x128xf32>
    %481 = math.exp %480 : vector<8x128xf32>
    %cst_138 = arith.constant 1.000000e+00 : f32
    %482 = vector.broadcast %cst_138 : f32 to vector<8x128xf32>
    %483 = arith.addf %482, %481 : vector<8x128xf32>
    %484 = arith.divf %482, %483 : vector<8x128xf32>
    %485 = vector.extract_strided_slice %467 {offsets = [0, 256], sizes = [8, 128], strides = [1, 1]} : vector<8x384xf32> to vector<8x128xf32>
    %486 = vector.extract_strided_slice %468 {offsets = [0, 256], sizes = [8, 128], strides = [1, 1]} : vector<8x384xf32> to vector<8x128xf32>
    %487 = arith.addf %486, %298 : vector<8x128xf32>
    %488 = arith.mulf %476, %487 : vector<8x128xf32>
    %489 = arith.addf %485, %488 : vector<8x128xf32>
    %490 = math.tanh %489 : vector<8x128xf32>
    %491 = arith.subf %460, %490 : vector<8x128xf32>
    %492 = arith.mulf %484, %491 : vector<8x128xf32>
    %493 = arith.addf %490, %492 : vector<8x128xf32>
    %494 = arith.index_cast %c5_i32_133 : i32 to index
    %c0_139 = arith.constant 0 : index
    %c0_140 = arith.constant 0 : index
    %495 = vector.load %arg9[%494, %c0_139, %c0_140] : memref<8x8x128xf32, #tpu.memory_space<vmem>>, vector<1x8x128xf32>
    %496 = vector.shape_cast %495 : vector<1x8x128xf32> to vector<8x128xf32>
    %497 = vector.shape_cast %493 : vector<8x128xf32> to vector<1x8x128xf32>
    tpu.vector_store %arg9[%494, %c0_139, %c0_140], %497 {strides = array<i32>} : memref<8x8x128xf32, #tpu.memory_space<vmem>>, vector<1x8x128xf32>,
    %c6_i32_141 = arith.constant 6 : i32
    %498 = arith.index_cast %c6_i32_141 : i32 to index
    %c0_142 = arith.constant 0 : index
    %c0_143 = arith.constant 0 : index
    %499 = vector.load %arg10[%498, %c0_142, %c0_143] : memref<8x8x384xf32, #tpu.memory_space<vmem>>, vector<1x8x384xf32>
    %500 = vector.shape_cast %499 : vector<1x8x384xf32> to vector<8x384xf32>
    %cst_144 = arith.constant dense<0.000000e+00> : vector<8x384xf32>
    %501 = tpu.matmul %493, %294, %cst_144 {dimension_numbers = #tpu.dot_dimension_numbers<[1], [0], [0], [1], [0, 0, 1, 1], [], []>} : vector<8x128xf32>, vector<128x384xf32>, vector<8x384xf32> -> vector<8x384xf32>
    %502 = vector.extract_strided_slice %500 {offsets = [0, 0], sizes = [8, 128], strides = [1, 1]} : vector<8x384xf32> to vector<8x128xf32>
    %503 = vector.extract_strided_slice %501 {offsets = [0, 0], sizes = [8, 128], strides = [1, 1]} : vector<8x384xf32> to vector<8x128xf32>
    %504 = arith.addf %502, %503 : vector<8x128xf32>
    %505 = arith.negf %504 : vector<8x128xf32>
    %506 = math.exp %505 : vector<8x128xf32>
    %cst_145 = arith.constant 1.000000e+00 : f32
    %507 = vector.broadcast %cst_145 : f32 to vector<8x128xf32>
    %508 = arith.addf %507, %506 : vector<8x128xf32>
    %509 = arith.divf %507, %508 : vector<8x128xf32>
    %510 = vector.extract_strided_slice %500 {offsets = [0, 128], sizes = [8, 128], strides = [1, 1]} : vector<8x384xf32> to vector<8x128xf32>
    %511 = vector.extract_strided_slice %501 {offsets = [0, 128], sizes = [8, 128], strides = [1, 1]} : vector<8x384xf32> to vector<8x128xf32>
    %512 = arith.addf %510, %511 : vector<8x128xf32>
    %513 = arith.negf %512 : vector<8x128xf32>
    %514 = math.exp %513 : vector<8x128xf32>
    %cst_146 = arith.constant 1.000000e+00 : f32
    %515 = vector.broadcast %cst_146 : f32 to vector<8x128xf32>
    %516 = arith.addf %515, %514 : vector<8x128xf32>
    %517 = arith.divf %515, %516 : vector<8x128xf32>
    %518 = vector.extract_strided_slice %500 {offsets = [0, 256], sizes = [8, 128], strides = [1, 1]} : vector<8x384xf32> to vector<8x128xf32>
    %519 = vector.extract_strided_slice %501 {offsets = [0, 256], sizes = [8, 128], strides = [1, 1]} : vector<8x384xf32> to vector<8x128xf32>
    %520 = arith.addf %519, %298 : vector<8x128xf32>
    %521 = arith.mulf %509, %520 : vector<8x128xf32>
    %522 = arith.addf %518, %521 : vector<8x128xf32>
    %523 = math.tanh %522 : vector<8x128xf32>
    %524 = arith.subf %493, %523 : vector<8x128xf32>
    %525 = arith.mulf %517, %524 : vector<8x128xf32>
    %526 = arith.addf %523, %525 : vector<8x128xf32>
    %527 = arith.index_cast %c6_i32_141 : i32 to index
    %c0_147 = arith.constant 0 : index
    %c0_148 = arith.constant 0 : index
    %528 = vector.load %arg9[%527, %c0_147, %c0_148] : memref<8x8x128xf32, #tpu.memory_space<vmem>>, vector<1x8x128xf32>
    %529 = vector.shape_cast %528 : vector<1x8x128xf32> to vector<8x128xf32>
    %530 = vector.shape_cast %526 : vector<8x128xf32> to vector<1x8x128xf32>
    tpu.vector_store %arg9[%527, %c0_147, %c0_148], %530 {strides = array<i32>} : memref<8x8x128xf32, #tpu.memory_space<vmem>>, vector<1x8x128xf32>,
    %c7_i32_149 = arith.constant 7 : i32
    %531 = arith.index_cast %c7_i32_149 : i32 to index
    %c0_150 = arith.constant 0 : index
    %c0_151 = arith.constant 0 : index
    %532 = vector.load %arg10[%531, %c0_150, %c0_151] : memref<8x8x384xf32, #tpu.memory_space<vmem>>, vector<1x8x384xf32>
    %533 = vector.shape_cast %532 : vector<1x8x384xf32> to vector<8x384xf32>
    %cst_152 = arith.constant dense<0.000000e+00> : vector<8x384xf32>
    %534 = tpu.matmul %526, %294, %cst_152 {dimension_numbers = #tpu.dot_dimension_numbers<[1], [0], [0], [1], [0, 0, 1, 1], [], []>} : vector<8x128xf32>, vector<128x384xf32>, vector<8x384xf32> -> vector<8x384xf32>
    %535 = vector.extract_strided_slice %533 {offsets = [0, 0], sizes = [8, 128], strides = [1, 1]} : vector<8x384xf32> to vector<8x128xf32>
    %536 = vector.extract_strided_slice %534 {offsets = [0, 0], sizes = [8, 128], strides = [1, 1]} : vector<8x384xf32> to vector<8x128xf32>
    %537 = arith.addf %535, %536 : vector<8x128xf32>
    %538 = arith.negf %537 : vector<8x128xf32>
    %539 = math.exp %538 : vector<8x128xf32>
    %cst_153 = arith.constant 1.000000e+00 : f32
    %540 = vector.broadcast %cst_153 : f32 to vector<8x128xf32>
    %541 = arith.addf %540, %539 : vector<8x128xf32>
    %542 = arith.divf %540, %541 : vector<8x128xf32>
    %543 = vector.extract_strided_slice %533 {offsets = [0, 128], sizes = [8, 128], strides = [1, 1]} : vector<8x384xf32> to vector<8x128xf32>
    %544 = vector.extract_strided_slice %534 {offsets = [0, 128], sizes = [8, 128], strides = [1, 1]} : vector<8x384xf32> to vector<8x128xf32>
    %545 = arith.addf %543, %544 : vector<8x128xf32>
    %546 = arith.negf %545 : vector<8x128xf32>
    %547 = math.exp %546 : vector<8x128xf32>
    %cst_154 = arith.constant 1.000000e+00 : f32
    %548 = vector.broadcast %cst_154 : f32 to vector<8x128xf32>
    %549 = arith.addf %548, %547 : vector<8x128xf32>
    %550 = arith.divf %548, %549 : vector<8x128xf32>
    %551 = vector.extract_strided_slice %533 {offsets = [0, 256], sizes = [8, 128], strides = [1, 1]} : vector<8x384xf32> to vector<8x128xf32>
    %552 = vector.extract_strided_slice %534 {offsets = [0, 256], sizes = [8, 128], strides = [1, 1]} : vector<8x384xf32> to vector<8x128xf32>
    %553 = arith.addf %552, %298 : vector<8x128xf32>
    %554 = arith.mulf %542, %553 : vector<8x128xf32>
    %555 = arith.addf %551, %554 : vector<8x128xf32>
    %556 = math.tanh %555 : vector<8x128xf32>
    %557 = arith.subf %526, %556 : vector<8x128xf32>
    %558 = arith.mulf %550, %557 : vector<8x128xf32>
    %559 = arith.addf %556, %558 : vector<8x128xf32>
    %560 = arith.index_cast %c7_i32_149 : i32 to index
    %c0_155 = arith.constant 0 : index
    %c0_156 = arith.constant 0 : index
    %561 = vector.load %arg9[%560, %c0_155, %c0_156] : memref<8x8x128xf32, #tpu.memory_space<vmem>>, vector<1x8x128xf32>
    %562 = vector.shape_cast %561 : vector<1x8x128xf32> to vector<8x128xf32>
    %563 = vector.shape_cast %559 : vector<8x128xf32> to vector<1x8x128xf32>
    tpu.vector_store %arg9[%560, %c0_155, %c0_156], %563 {strides = array<i32>} : memref<8x8x128xf32, #tpu.memory_space<vmem>>, vector<1x8x128xf32>,
    %c8_i32_157 = arith.constant 8 : i32
    %c0_158 = arith.constant 0 : index
    %c0_159 = arith.constant 0 : index
    %c0_160 = arith.constant 0 : index
    %564 = vector.load %arg9[%c0_158, %c0_159, %c0_160] : memref<8x8x128xf32, #tpu.memory_space<vmem>>, vector<8x8x128xf32>
    %565 = vector.shape_cast %564 : vector<8x8x128xf32> to vector<64x128xf32>
    %c0_161 = arith.constant 0 : index
    %c0_162 = arith.constant 0 : index
    %566 = vector.load %arg6[%c0_161, %c0_162] : memref<128x128xf32, #tpu.memory_space<vmem>>, vector<128x128xf32>
    %cst_163 = arith.constant dense<0.000000e+00> : vector<64x128xf32>
    %567 = tpu.matmul %565, %566, %cst_163 {dimension_numbers = #tpu.dot_dimension_numbers<[1], [0], [0], [1], [0, 0, 1, 1], [], []>} : vector<64x128xf32>, vector<128x128xf32>, vector<64x128xf32> -> vector<64x128xf32>
    %c0_164 = arith.constant 0 : index
    %c0_165 = arith.constant 0 : index
    %568 = vector.load %arg7[%c0_164, %c0_165] : memref<1x128xf32, #tpu.memory_space<vmem>>, vector<1x128xf32>
    %569 = vector.broadcast %568 : vector<1x128xf32> to vector<64x128xf32>
    %570 = arith.addf %567, %569 : vector<64x128xf32>
    %571 = arith.negf %570 : vector<64x128xf32>
    %572 = math.exp %571 : vector<64x128xf32>
    %cst_166 = arith.constant 1.000000e+00 : f32
    %573 = vector.broadcast %cst_166 : f32 to vector<64x128xf32>
    %574 = arith.addf %573, %572 : vector<64x128xf32>
    %575 = arith.divf %573, %574 : vector<64x128xf32>
    %576 = vector.shape_cast %575 : vector<64x128xf32> to vector<8x8x128xf32>
    %c0_167 = arith.constant 0 : index
    %c0_168 = arith.constant 0 : index
    %c0_169 = arith.constant 0 : index
    %577 = vector.load %arg8[%c0_167, %c0_168, %c0_169] : memref<8x8x128xf32, #tpu.memory_space<vmem>>, vector<8x8x128xf32>
    tpu.vector_store %arg8[%c0_167, %c0_168, %c0_169], %576 {strides = array<i32>} : memref<8x8x128xf32, #tpu.memory_space<vmem>>, vector<8x8x128xf32>,
    return
  }
  func.func @transform_0(%arg0: i32) -> (i32, i32, i32) {
    %c0_i32 = arith.constant 0 : i32
    %c0_i32_0 = arith.constant 0 : i32
    %c0_i32_1 = arith.constant 0 : i32
    %c0_i32_2 = arith.constant 0 : i32
    return %c0_i32, %c0_i32_0, %c0_i32_1 : i32, i32, i32
  }
  func.func @transform_1(%arg0: i32) -> (i32, i32, i32) {
    %c0_i32 = arith.constant 0 : i32
    %c0_i32_0 = arith.constant 0 : i32
    %c0_i32_1 = arith.constant 0 : i32
    %c0_i32_2 = arith.constant 0 : i32
    return %c0_i32, %c0_i32_0, %c0_i32_1 : i32, i32, i32
  }
  func.func @transform_2(%arg0: i32) -> (i32, i32, i32) {
    %c0_i32 = arith.constant 0 : i32
    %c0_i32_0 = arith.constant 0 : i32
    %c0_i32_1 = arith.constant 0 : i32
    %c0_i32_2 = arith.constant 0 : i32
    return %c0_i32, %c0_i32_0, %c0_i32_1 : i32, i32, i32
  }
  func.func @transform_3(%arg0: i32) -> (i32, i32, i32) {
    %c0_i32 = arith.constant 0 : i32
    %c0_i32_0 = arith.constant 0 : i32
    %c0_i32_1 = arith.constant 0 : i32
    %c0_i32_2 = arith.constant 0 : i32
    return %c0_i32, %c0_i32_0, %c0_i32_1 : i32, i32, i32
  }
  func.func @transform_4(%arg0: i32) -> (i32, i32, i32) {
    %c0_i32 = arith.constant 0 : i32
    %c0_i32_0 = arith.constant 0 : i32
    %c0_i32_1 = arith.constant 0 : i32
    %c0_i32_2 = arith.constant 0 : i32
    return %c0_i32, %c0_i32_0, %c0_i32_1 : i32, i32, i32
  }
  func.func @transform_5(%arg0: i32) -> (i32, i32) {
    %c0_i32 = arith.constant 0 : i32
    %c0_i32_0 = arith.constant 0 : i32
    %c0_i32_1 = arith.constant 0 : i32
    return %c0_i32, %c0_i32_0 : i32, i32
  }
  func.func @transform_6(%arg0: i32) -> (i32, i32) {
    %c0_i32 = arith.constant 0 : i32
    %c0_i32_0 = arith.constant 0 : i32
    %c0_i32_1 = arith.constant 0 : i32
    return %c0_i32, %c0_i32_0 : i32, i32
  }
  func.func @transform_7(%arg0: i32) -> (i32, i32, i32) {
    %c0_i32 = arith.constant 0 : i32
    %c0_i32_0 = arith.constant 0 : i32
    %c0_i32_1 = arith.constant 0 : i32
    %c0_i32_2 = arith.constant 0 : i32
    return %c0_i32, %c0_i32_0, %c0_i32_1 : i32, i32, i32
  }
}

</mosaic_0001>

<llo_original>
// kernel: tpu_custom_call.1
$region0: #{tpu_custom_call.1}
  #allocation0 [shape = 'u32[]', space=smem, size = 0x4, offset = 0x4, fixed_abs, tag = 'smem constant byte address 0x4 - core index']
  #allocation1 [shape = 'u32[144,128]{1,0:T(1,128)}', space=vmem, size = 0x12000, scoped, tag = 'internal scratch']
  #allocation2 [shape = 'f32[8,8,128]{2,1,0:T(8,128)}', space=vmem, size = 0x8000, scoped, tag = 'scratch operand']
  #allocation3 [shape = 'f32[8,8,384]{2,1,0:T(8,128)}', space=vmem, size = 0x18000, scoped, tag = 'scratch operand']
  %s0 = inlined_call_operand.hbm [shape: f32[8,8,128], index: 0, kind: input, shape index: {}]
  %s1 = inlined_call_operand.hbm [shape: f32[2,128,384], index: 1, kind: input, shape index: {}]
  %s2 = inlined_call_operand.hbm [shape: f32[2,128,384], index: 2, kind: input, shape index: {}]
  %s3 = inlined_call_operand.vmem [shape: f32[2,1,384], index: 3, kind: input, shape index: {}]
  %s4 = inlined_call_operand.vmem [shape: f32[2,1,128], index: 4, kind: input, shape index: {}]
  %s5 = inlined_call_operand.hbm [shape: f32[128,128], index: 5, kind: input, shape index: {}]
  %s6 = inlined_call_operand.vmem [shape: f32[1,128], index: 6, kind: input, shape index: {}]
  %s7 = inlined_call_operand.hbm [shape: f32[8,8,128], index: 7, kind: output, shape index: {}]
  %s8 = sld [smem:[#allocation0]]
  $region54: #{tpu_custom_call.1} parent=0
    _
  %s10 = ssub.s32 1, %s8
  %s11 = scalar_select 0, %s10, %s8
  $region1: #{tpu_custom_call.1} parent=0
    #allocation4 [shape = 'u8[32768]{0}', space=vmem, size = 0x8000, scoped, tag = 'input window, operand 0, single buffered']
    #allocation5 [shape = 's32[1]{0}', space=sflag, size = 0x4, scoped, tag = 'scoped memory for tpu_custom_call.1']
    #allocation6 [shape = 's32[1]{0}', space=sflag, size = 0x4, scoped, tag = 'scoped memory for tpu_custom_call.1']
    #allocation7 [shape = 'u8[393216]{0}', space=vmem, size = 0x60000, scoped, tag = 'input window, operand 1, single buffered']
    #allocation8 [shape = 's32[1]{0}', space=sflag, size = 0x4, scoped, tag = 'scoped memory for tpu_custom_call.1']
    #allocation9 [shape = 'u8[393216]{0}', space=vmem, size = 0x60000, scoped, tag = 'input window, operand 2, single buffered']
    #allocation10 [shape = 'u8[65536]{0}', space=vmem, size = 0x10000, scoped, tag = 'input window, operand 5, single buffered']
    #allocation11 [shape = 's32[1]{0}', space=sflag, size = 0x4, scoped, tag = 'scoped memory for tpu_custom_call.1']
    #allocation12 [shape = 'u8[32768]{0}', space=vmem, size = 0x8000, scoped, tag = 'output window, operand 0, single buffered']
    %12 = vsyncpa [#allocation5], 0
    %13 = vsyncpa [#allocation8], 0
    %14 = vsyncpa [#allocation11], 0
    %15 = vsyncpa [#allocation6], 0
    // Predicated region
    $region2: #{tpu_custom_call.1} parent=1 // pred_check
      _
    $region3: #{tpu_custom_call.1} parent=1 // pred_check_branch
      %17 = sbr.rel (0) target = $region5
    $region4: #{tpu_custom_call.1} parent=1 // pred_region
      %s19 = ssub.s32 1024, 1024
      %20 = vsyncadd [#allocation5], %s19
      %s21 = sshll.u32 [#allocation4], 4
      %s22 = int_to_ptr.vmem [resolvable:$true] %s21
      %27 = dma.hbm_to_vmem [thread:$0]  %s0, 1024, %s22, [#allocation5], 128, 128, 8
    $region5: #{tpu_custom_call.1} parent=1 // pred_fallthru
      _
    // Predicated region
    $region6: #{tpu_custom_call.1} parent=1 // pred_check
      _
    $region7: #{tpu_custom_call.1} parent=1 // pred_check_branch
      %29 = sbr.rel (0) target = $region9
    $region8: #{tpu_custom_call.1} parent=1 // pred_region
      %s31 = ssub.s32 12288, 12288
      %32 = vsyncadd [#allocation8], %s31
      %s33 = sshll.u32 [#allocation7], 4
      %s34 = int_to_ptr.vmem [resolvable:$true] %s33
      %39 = dma.hbm_to_vmem [thread:$0]  %s1, 12288, %s34, [#allocation8], 384, 384, 24
    $region9: #{tpu_custom_call.1} parent=1 // pred_fallthru
      _
    // Predicated region
    $region10: #{tpu_custom_call.1} parent=1 // pred_check
      _
    $region11: #{tpu_custom_call.1} parent=1 // pred_check_branch
      %41 = sbr.rel (0) target = $region13
    $region12: #{tpu_custom_call.1} parent=1 // pred_region
      %s43 = ssub.s32 12288, 12288
      %44 = vsyncadd [#allocation8], %s43
      %s45 = sshll.u32 [#allocation9], 4
      %s46 = int_to_ptr.vmem [resolvable:$true] %s45
      %51 = dma.hbm_to_vmem [thread:$0]  %s2, 12288, %s46, [#allocation8], 384, 384, 24
    $region13: #{tpu_custom_call.1} parent=1 // pred_fallthru
      _
    // Predicated region
    $region14: #{tpu_custom_call.1} parent=1 // pred_check
      _
    $region15: #{tpu_custom_call.1} parent=1 // pred_check_branch
      %53 = sbr.rel (0) target = $region17
    $region16: #{tpu_custom_call.1} parent=1 // pred_region
      _
    $region17: #{tpu_custom_call.1} parent=1 // pred_fallthru
      _
    // Predicated region
    $region18: #{tpu_custom_call.1} parent=1 // pred_check
      _
    $region19: #{tpu_custom_call.1} parent=1 // pred_check_branch
      %55 = sbr.rel (0) target = $region21
    $region20: #{tpu_custom_call.1} parent=1 // pred_region
      _
    $region21: #{tpu_custom_call.1} parent=1 // pred_fallthru
      _
    // Predicated region
    $region22: #{tpu_custom_call.1} parent=1 // pred_check
      _
    $region23: #{tpu_custom_call.1} parent=1 // pred_check_branch
      %57 = sbr.rel (0) target = $region25
    $region24: #{tpu_custom_call.1} parent=1 // pred_region
      %s59 = ssub.s32 2048, 2048
      %60 = vsyncadd [#allocation11], %s59
      %s61 = sshll.u32 [#allocation10], 4
      %s62 = int_to_ptr.vmem [resolvable:$true] %s61
      %67 = dma.hbm_to_vmem [thread:$0]  %s5, 2048, %s62, [#allocation11], 128, 128, 8
    $region25: #{tpu_custom_call.1} parent=1 // pred_fallthru
      _
    // Predicated region
    $region26: #{tpu_custom_call.1} parent=1 // pred_check
      _
    $region27: #{tpu_custom_call.1} parent=1 // pred_check_branch
      %69 = sbr.rel (0) target = $region29
    $region28: #{tpu_custom_call.1} parent=1 // pred_region
      _
    $region29: #{tpu_custom_call.1} parent=1 // pred_fallthru
      _
    // Predicated region
    $region30: #{tpu_custom_call.1} parent=1 // pred_check
      _
    $region31: #{tpu_custom_call.1} parent=1 // pred_check_branch
      %71 = sbr.rel (0) target = $region33
    $region32: #{tpu_custom_call.1} parent=1 // pred_region
      %72 = dma.done [#allocation5], 1024
    $region33: #{tpu_custom_call.1} parent=1 // pred_fallthru
      _
    // Predicated region
    $region34: #{tpu_custom_call.1} parent=1 // pred_check
      _
    $region35: #{tpu_custom_call.1} parent=1 // pred_check_branch
      %74 = sbr.rel (0) target = $region37
    $region36: #{tpu_custom_call.1} parent=1 // pred_region
      %75 = dma.done [#allocation8], 12288
    $region37: #{tpu_custom_call.1} parent=1 // pred_fallthru
      _
    // Predicated region
    $region38: #{tpu_custom_call.1} parent=1 // pred_check
      _
    $region39: #{tpu_custom_call.1} parent=1 // pred_check_branch
      %77 = sbr.rel (0) target = $region41
    $region40: #{tpu_custom_call.1} parent=1 // pred_region
      %78 = dma.done [#allocation8], 12288
    $region41: #{tpu_custom_call.1} parent=1 // pred_fallthru
      _
    // Predicated region
    $region42: #{tpu_custom_call.1} parent=1 // pred_check
      _
    $region43: #{tpu_custom_call.1} parent=1 // pred_check_branch
      %80 = sbr.rel (0) target = $region45
    $region44: #{tpu_custom_call.1} parent=1 // pred_region
      %81 = dma.done [#allocation11], 2048
    $region45: #{tpu_custom_call.1} parent=1 // pred_fallthru
      _
    %v82 = vld [vmem:[#allocation4] sm:$0xff]
    %v83 = vld [vmem:[#allocation4 + $0x8] sm:$0xff]
    %v84 = vld [vmem:[#allocation4 + $0x10] sm:$0xff]
    %v85 = vld [vmem:[#allocation4 + $0x18] sm:$0xff]
    %v86 = vld [vmem:[#allocation4 + $0x20] sm:$0xff]
    %v87 = vld [vmem:[#allocation4 + $0x28] sm:$0xff]
    %v88 = vld [vmem:[#allocation4 + $0x30] sm:$0xff]
    %v89 = vld [vmem:[#allocation4 + $0x38] sm:$0xff]
    %v90 = vld [vmem:[#allocation7] sm:$0xff]
    %v91 = vld [vmem:[#allocation7 + $0x8] sm:$0xff]
    %v92 = vld [vmem:[#allocation7 + $0x10] sm:$0xff]
    %v93 = vld [vmem:[#allocation7 + $0x18] sm:$0xff]
    %v94 = vld [vmem:[#allocation7 + $0x20] sm:$0xff]
    %v95 = vld [vmem:[#allocation7 + $0x28] sm:$0xff]
    %v96 = vld [vmem:[#allocation7 + $0x30] sm:$0xff]
    %v97 = vld [vmem:[#allocation7 + $0x38] sm:$0xff]
    %v98 = vld [vmem:[#allocation7 + $0x40] sm:$0xff]
    %v99 = vld [vmem:[#allocation7 + $0x48] sm:$0xff]
    %v100 = vld [vmem:[#allocation7 + $0x50] sm:$0xff]
    %v101 = vld [vmem:[#allocation7 + $0x58] sm:$0xff]
    %v102 = vld [vmem:[#allocation7 + $0x60] sm:$0xff]
    %v103 = vld [vmem:[#allocation7 + $0x68] sm:$0xff]
    %v104 = vld [vmem:[#allocation7 + $0x70] sm:$0xff]
    %v105 = vld [vmem:[#allocation7 + $0x78] sm:$0xff]
    %v106 = vld [vmem:[#allocation7 + $0x80] sm:$0xff]
    %v107 = vld [vmem:[#allocation7 + $0x88] sm:$0xff]
    %v108 = vld [vmem:[#allocation7 + $0x90] sm:$0xff]
    %v109 = vld [vmem:[#allocation7 + $0x98] sm:$0xff]
    %v110 = vld [vmem:[#allocation7 + $0xa0] sm:$0xff]
    %v111 = vld [vmem:[#allocation7 + $0xa8] sm:$0xff]
    %v112 = vld [vmem:[#allocation7 + $0xb0] sm:$0xff]
    %v113 = vld [vmem:[#allocation7 + $0xb8] sm:$0xff]
    %v114 = vld [vmem:[#allocation7 + $0xc0] sm:$0xff]
    %v115 = vld [vmem:[#allocation7 + $0xc8] sm:$0xff]
    %v116 = vld [vmem:[#allocation7 + $0xd0] sm:$0xff]
    %v117 = vld [vmem:[#allocation7 + $0xd8] sm:$0xff]
    %v118 = vld [vmem:[#allocation7 + $0xe0] sm:$0xff]
    %v119 = vld [vmem:[#allocation7 + $0xe8] sm:$0xff]
    %v120 = vld [vmem:[#allocation7 + $0xf0] sm:$0xff]
    %v121 = vld [vmem:[#allocation7 + $0xf8] sm:$0xff]
    %v122 = vld [vmem:[#allocation7 + $0x100] sm:$0xff]
    %v123 = vld [vmem:[#allocation7 + $0x108] sm:$0xff]
    %v124 = vld [vmem:[#allocation7 + $0x110] sm:$0xff]
    %v125 = vld [vmem:[#allocation7 + $0x118] sm:$0xff]
    %v126 = vld [vmem:[#allocation7 + $0x120] sm:$0xff]
    %v127 = vld [vmem:[#allocation7 + $0x128] sm:$0xff]
    %v128 = vld [vmem:[#allocation7 + $0x130] sm:$0xff]
    %v129 = vld [vmem:[#allocation7 + $0x138] sm:$0xff]
    %v130 = vld [vmem:[#allocation7 + $0x140] sm:$0xff]
    %v131 = vld [vmem:[#allocation7 + $0x148] sm:$0xff]
    %v132 = vld [vmem:[#allocation7 + $0x150] sm:$0xff]
    %v133 = vld [vmem:[#allocation7 + $0x158] sm:$0xff]
    %v134 = vld [vmem:[#allocation7 + $0x160] sm:$0xff]
    %v135 = vld [vmem:[#allocation7 + $0x168] sm:$0xff]
    %v136 = vld [vmem:[#allocation7 + $0x170] sm:$0xff]
    %v137 = vld [vmem:[#allocation7 + $0x178] sm:$0xff]
    %v138 = vld [vmem:[%s3] sm:$0x7]
    %v140 = vlaneseq
    %v141 = vshrl.u32 %v140, 7
    %v142 = vsub.s32 0, %v141
    %v143 = vrot.slane %v138, %v142
    %v144 = vlaneseq
    %v145 = vshrl.u32 %v144, 7
    %v146 = vsub.s32 1, %v145
    %v147 = vrot.slane %v138, %v146
    %v148 = vlaneseq
    %v149 = vshrl.u32 %v148, 7
    %v150 = vsub.s32 2, %v149
    %v151 = vrot.slane %v138, %v150
    %155 = vmatprep.subr.mxu0 %v91
    %156 = vmatpush1.msra.mxu0 %v90
    %157 = vmatprep.subr.mxu0 %v94
    %158 = vmatpush1.msra.mxu0 %v93
    %159 = vmatprep.subr.mxu0 %v97
    %160 = vmatpush1.msra.mxu0 %v96
    %161 = vmatprep.subr.mxu0 %v100
    %162 = vmatpush1.msra.mxu0 %v99
    %163 = vmatprep.subr.mxu0 %v103
    %164 = vmatpush1.msra.mxu0 %v102
    %165 = vmatprep.subr.mxu0 %v106
    %166 = vmatpush1.msra.mxu0 %v105
    %167 = vmatprep.subr.mxu0 %v109
    %168 = vmatpush1.msra.mxu0 %v108
    %169 = vmatprep.subr.mxu0 %v112
    %170 = vmatpush1.msra.mxu0 %v111
    %171 = vmatprep.subr.mxu0 %v115
    %172 = vmatpush1.msra.mxu0 %v114
    %173 = vmatprep.subr.mxu0 %v118
    %174 = vmatpush1.msra.mxu0 %v117
    %175 = vmatprep.subr.mxu0 %v121
    %176 = vmatpush1.msra.mxu0 %v120
    %177 = vmatprep.subr.mxu0 %v124
    %178 = vmatpush1.msra.mxu0 %v123
    %179 = vmatprep.subr.mxu0 %v127
    %180 = vmatpush1.msra.mxu0 %v126
    %181 = vmatprep.subr.mxu0 %v130
    %182 = vmatpush1.msra.mxu0 %v129
    %183 = vmatprep.subr.mxu0 %v133
    %184 = vmatpush1.msra.mxu0 %v132
    %185 = vmatprep.subr.mxu0 %v136
    %186 = vmatpush1.msra.mxu0 %v135
    %187 = vmatprep.subr.mxu0 0.0
    %188 = vmatpush1.msra.mxu0 0.0
    %189 = vmatprep.subr.mxu0 0.0
    %190 = vmatpush1.msra.mxu0 0.0
    %191 = vmatprep.subr.mxu0 0.0
    %192 = vmatpush1.msra.mxu0 0.0
    %193 = vmatprep.subr.mxu0 0.0
    %194 = vmatpush1.msra.mxu0 0.0
    %195 = vmatprep.subr.mxu0 0.0
    %196 = vmatpush1.msra.mxu0 0.0
    %197 = vmatprep.subr.mxu0 0.0
    %198 = vmatpush1.msra.mxu0 0.0
    %199 = vmatprep.subr.mxu0 0.0
    %200 = vmatpush1.msra.mxu0 0.0
    %201 = vmatprep.subr.mxu0 0.0
    %202 = vmatpush1.msra.mxu0 0.0
    %203 = vmatprep.subr.mxu0 0.0
    %204 = vmatpush1.msra.mxu0 0.0
    %205 = vmatprep.subr.mxu0 0.0
    %206 = vmatpush1.msra.mxu0 0.0
    %207 = vmatprep.subr.mxu0 0.0
    %208 = vmatpush1.msra.mxu0 0.0
    %209 = vmatprep.subr.mxu0 0.0
    %210 = vmatpush1.msra.mxu0 0.0
    %211 = vmatprep.subr.mxu0 0.0
    %212 = vmatpush1.msra.mxu0 0.0
    %213 = vmatprep.subr.mxu0 0.0
    %214 = vmatpush1.msra.mxu0 0.0
    %215 = vmatprep.subr.mxu0 0.0
    %216 = vmatpush1.msra.mxu0 0.0
    %217 = vmatprep.subr.mxu0 0.0
    %218 = vmatpush1.msra.mxu0 0.0
    %219 = vmatprep.mubr.f32.mxu0 0.0
    %220 = vmatmul.mubr.f32.gmra.mrb[0].mxu0 %v82
    %v221 = vpop.f32.mrb[0].mxu0
    %v222 = vadd.f32 %v143, %v221
    %v223 = vpop.f32.mrb[0].mxu0
    %v224 = vadd.f32 %v147, %v223
    %225 = vmatprep.mubr.f32.mxu0 0.0
    %226 = vmatmul.mubr.f32.gmra.mrb[0].mxu0 %v83
    %v227 = vpop.f32.mrb[0].mxu0
    %v228 = vadd.f32 %v143, %v227
    %v229 = vpop.f32.mrb[0].mxu0
    %v230 = vadd.f32 %v147, %v229
    %231 = vmatprep.mubr.f32.mxu0 0.0
    %232 = vmatmul.mubr.f32.gmra.mrb[0].mxu0 %v84
    %v233 = vpop.f32.mrb[0].mxu0
    %v234 = vadd.f32 %v143, %v233
    %v235 = vpop.f32.mrb[0].mxu0
    %v236 = vadd.f32 %v147, %v235
    %237 = vmatprep.mubr.f32.mxu0 0.0
    %238 = vmatmul.mubr.f32.gmra.mrb[0].mxu0 %v85
    %v239 = vpop.f32.mrb[0].mxu0
    %v240 = vadd.f32 %v143, %v239
    %v241 = vpop.f32.mrb[0].mxu0
    %v242 = vadd.f32 %v147, %v241
    %243 = vmatprep.mubr.f32.mxu0 0.0
    %244 = vmatmul.mubr.f32.gmra.mrb[0].mxu0 %v86
    %v245 = vpop.f32.mrb[0].mxu0
    %v246 = vadd.f32 %v143, %v245
    %v247 = vpop.f32.mrb[0].mxu0
    %v248 = vadd.f32 %v147, %v247
    %249 = vmatprep.mubr.f32.mxu0 0.0
    %250 = vmatmul.mubr.f32.gmra.mrb[0].mxu0 %v87
    %v251 = vpop.f32.mrb[0].mxu0
    %v252 = vadd.f32 %v143, %v251
    %v253 = vpop.f32.mrb[0].mxu0
    %v254 = vadd.f32 %v147, %v253
    %255 = vmatprep.mubr.f32.mxu0 0.0
    %256 = vmatmul.mubr.f32.gmra.mrb[0].mxu0 %v88
    %v257 = vpop.f32.mrb[0].mxu0
    %v258 = vadd.f32 %v143, %v257
    %v259 = vpop.f32.mrb[0].mxu0
    %v260 = vadd.f32 %v147, %v259
    %261 = vmatprep.mubr.f32.mxu0 0.0
    %262 = vmatmul.mubr.f32.gmra.mrb[0].mxu0 %v89
    %v263 = vpop.f32.mrb[0].mxu0
    %v264 = vadd.f32 %v143, %v263
    %v265 = vpop.f32.mrb[0].mxu0
    %v266 = vadd.f32 %v147, %v265
    %267 = vdwg.mxu0
    %268 = vmatprep.subr.mxu0 0.0
    %269 = vmatpush1.msra.mxu0 %v92
    %270 = vmatprep.subr.mxu0 0.0
    %271 = vmatpush1.msra.mxu0 %v95
    %272 = vmatprep.subr.mxu0 0.0
    %273 = vmatpush1.msra.mxu0 %v98
    %274 = vmatprep.subr.mxu0 0.0
    %275 = vmatpush1.msra.mxu0 %v101
    %276 = vmatprep.subr.mxu0 0.0
    %277 = vmatpush1.msra.mxu0 %v104
    %278 = vmatprep.subr.mxu0 0.0
    %279 = vmatpush1.msra.mxu0 %v107
    %280 = vmatprep.subr.mxu0 0.0
    %281 = vmatpush1.msra.mxu0 %v110
    %282 = vmatprep.subr.mxu0 0.0
    %283 = vmatpush1.msra.mxu0 %v113
    %284 = vmatprep.subr.mxu0 0.0
    %285 = vmatpush1.msra.mxu0 %v116
    %286 = vmatprep.subr.mxu0 0.0
    %287 = vmatpush1.msra.mxu0 %v119
    %288 = vmatprep.subr.mxu0 0.0
    %289 = vmatpush1.msra.mxu0 %v122
    %290 = vmatprep.subr.mxu0 0.0
    %291 = vmatpush1.msra.mxu0 %v125
    %292 = vmatprep.subr.mxu0 0.0
    %293 = vmatpush1.msra.mxu0 %v128
    %294 = vmatprep.subr.mxu0 0.0
    %295 = vmatpush1.msra.mxu0 %v131
    %296 = vmatprep.subr.mxu0 0.0
    %297 = vmatpush1.msra.mxu0 %v134
    %298 = vmatprep.subr.mxu0 0.0
    %299 = vmatpush1.msra.mxu0 %v137
    %300 = vmatprep.subr.mxu0 0.0
    %301 = vmatpush1.msra.mxu0 0.0
    %302 = vmatprep.subr.mxu0 0.0
    %303 = vmatpush1.msra.mxu0 0.0
    %304 = vmatprep.subr.mxu0 0.0
    %305 = vmatpush1.msra.mxu0 0.0
    %306 = vmatprep.subr.mxu0 0.0
    %307 = vmatpush1.msra.mxu0 0.0
    %308 = vmatprep.subr.mxu0 0.0
    %309 = vmatpush1.msra.mxu0 0.0
    %310 = vmatprep.subr.mxu0 0.0
    %311 = vmatpush1.msra.mxu0 0.0
    %312 = vmatprep.subr.mxu0 0.0
    %313 = vmatpush1.msra.mxu0 0.0
    %314 = vmatprep.subr.mxu0 0.0
    %315 = vmatpush1.msra.mxu0 0.0
    %316 = vmatprep.subr.mxu0 0.0
    %317 = vmatpush1.msra.mxu0 0.0
    %318 = vmatprep.subr.mxu0 0.0
    %319 = vmatpush1.msra.mxu0 0.0
    %320 = vmatprep.subr.mxu0 0.0
    %321 = vmatpush1.msra.mxu0 0.0
    %322 = vmatprep.subr.mxu0 0.0
    %323 = vmatpush1.msra.mxu0 0.0
    %324 = vmatprep.subr.mxu0 0.0
    %325 = vmatpush1.msra.mxu0 0.0
    %326 = vmatprep.subr.mxu0 0.0
    %327 = vmatpush1.msra.mxu0 0.0
    %328 = vmatprep.subr.mxu0 0.0
    %329 = vmatpush1.msra.mxu0 0.0
    %330 = vmatprep.subr.mxu0 0.0
    %331 = vmatpush1.msra.mxu0 0.0
    %332 = vmatprep.mubr.f32.mxu0 0.0
    %333 = vmatmul.mubr.f32.gmra.mrb[0].mxu0 %v82
    %v334 = vpop.f32.mrb[0].mxu0
    %v335 = vadd.f32 %v151, %v334
    %v336 = vpop.f32.mrb[0].mxu0
    %337 = vmatprep.mubr.f32.mxu0 0.0
    %338 = vmatmul.mubr.f32.gmra.mrb[0].mxu0 %v83
    %v339 = vpop.f32.mrb[0].mxu0
    %v340 = vadd.f32 %v151, %v339
    %v341 = vpop.f32.mrb[0].mxu0
    %342 = vmatprep.mubr.f32.mxu0 0.0
    %343 = vmatmul.mubr.f32.gmra.mrb[0].mxu0 %v84
    %v344 = vpop.f32.mrb[0].mxu0
    %v345 = vadd.f32 %v151, %v344
    %v346 = vpop.f32.mrb[0].mxu0
    %347 = vmatprep.mubr.f32.mxu0 0.0
    %348 = vmatmul.mubr.f32.gmra.mrb[0].mxu0 %v85
    %v349 = vpop.f32.mrb[0].mxu0
    %v350 = vadd.f32 %v151, %v349
    %v351 = vpop.f32.mrb[0].mxu0
    %352 = vmatprep.mubr.f32.mxu0 0.0
    %353 = vmatmul.mubr.f32.gmra.mrb[0].mxu0 %v86
    %v354 = vpop.f32.mrb[0].mxu0
    %v355 = vadd.f32 %v151, %v354
    %v356 = vpop.f32.mrb[0].mxu0
    %357 = vmatprep.mubr.f32.mxu0 0.0
    %358 = vmatmul.mubr.f32.gmra.mrb[0].mxu0 %v87
    %v359 = vpop.f32.mrb[0].mxu0
    %v360 = vadd.f32 %v151, %v359
    %v361 = vpop.f32.mrb[0].mxu0
    %362 = vmatprep.mubr.f32.mxu0 0.0
    %363 = vmatmul.mubr.f32.gmra.mrb[0].mxu0 %v88
    %v364 = vpop.f32.mrb[0].mxu0
    %v365 = vadd.f32 %v151, %v364
    %v366 = vpop.f32.mrb[0].mxu0
    %367 = vmatprep.mubr.f32.mxu0 0.0
    %368 = vmatmul.mubr.f32.gmra.mrb[0].mxu0 %v89
    %v369 = vpop.f32.mrb[0].mxu0
    %v370 = vadd.f32 %v151, %v369
    %v371 = vpop.f32.mrb[0].mxu0
    %372 = vdwg.mxu0
    %373 = vst [vmem:[#allocation3] sm:$0xff] %v222
    %374 = vst [vmem:[#allocation3 + $0x8] sm:$0xff] %v224
    %375 = vst [vmem:[#allocation3 + $0x10] sm:$0xff] %v335
    %376 = vst [vmem:[#allocation3 + $0x18] sm:$0xff] %v228
    %377 = vst [vmem:[#allocation3 + $0x20] sm:$0xff] %v230
    %378 = vst [vmem:[#allocation3 + $0x28] sm:$0xff] %v340
    %379 = vst [vmem:[#allocation3 + $0x30] sm:$0xff] %v234
    %380 = vst [vmem:[#allocation3 + $0x38] sm:$0xff] %v236
    %381 = vst [vmem:[#allocation3 + $0x40] sm:$0xff] %v345
    %382 = vst [vmem:[#allocation3 + $0x48] sm:$0xff] %v240
    %383 = vst [vmem:[#allocation3 + $0x50] sm:$0xff] %v242
    %384 = vst [vmem:[#allocation3 + $0x58] sm:$0xff] %v350
    %385 = vst [vmem:[#allocation3 + $0x60] sm:$0xff] %v246
    %386 = vst [vmem:[#allocation3 + $0x68] sm:$0xff] %v248
    %387 = vst [vmem:[#allocation3 + $0x70] sm:$0xff] %v355
    %388 = vst [vmem:[#allocation3 + $0x78] sm:$0xff] %v252
    %389 = vst [vmem:[#allocation3 + $0x80] sm:$0xff] %v254
    %390 = vst [vmem:[#allocation3 + $0x88] sm:$0xff] %v360
    %391 = vst [vmem:[#allocation3 + $0x90] sm:$0xff] %v258
    %392 = vst [vmem:[#allocation3 + $0x98] sm:$0xff] %v260
    %393 = vst [vmem:[#allocation3 + $0xa0] sm:$0xff] %v365
    %394 = vst [vmem:[#allocation3 + $0xa8] sm:$0xff] %v264
    %395 = vst [vmem:[#allocation3 + $0xb0] sm:$0xff] %v266
    %396 = vst [vmem:[#allocation3 + $0xb8] sm:$0xff] %v370
    %v397 = vld [vmem:[#allocation9] sm:$0xff]
    %v398 = vld [vmem:[#allocation9 + $0x8] sm:$0xff]
    %v399 = vld [vmem:[#allocation9 + $0x10] sm:$0xff]
    %v400 = vld [vmem:[#allocation9 + $0x18] sm:$0xff]
    %v401 = vld [vmem:[#allocation9 + $0x20] sm:$0xff]
    %v402 = vld [vmem:[#allocation9 + $0x28] sm:$0xff]
    %v403 = vld [vmem:[#allocation9 + $0x30] sm:$0xff]
    %v404 = vld [vmem:[#allocation9 + $0x38] sm:$0xff]
    %v405 = vld [vmem:[#allocation9 + $0x40] sm:$0xff]
    %v406 = vld [vmem:[#allocation9 + $0x48] sm:$0xff]
    %v407 = vld [vmem:[#allocation9 + $0x50] sm:$0xff]
    %v408 = vld [vmem:[#allocation9 + $0x58] sm:$0xff]
    %v409 = vld [vmem:[#allocation9 + $0x60] sm:$0xff]
    %v410 = vld [vmem:[#allocation9 + $0x68] sm:$0xff]
    %v411 = vld [vmem:[#allocation9 + $0x70] sm:$0xff]
    %v412 = vld [vmem:[#allocation9 + $0x78] sm:$0xff]
    %v413 = vld [vmem:[#allocation9 + $0x80] sm:$0xff]
    %v414 = vld [vmem:[#allocation9 + $0x88] sm:$0xff]
    %v415 = vld [vmem:[#allocation9 + $0x90] sm:$0xff]
    %v416 = vld [vmem:[#allocation9 + $0x98] sm:$0xff]
    %v417 = vld [vmem:[#allocation9 + $0xa0] sm:$0xff]
    %v418 = vld [vmem:[#allocation9 + $0xa8] sm:$0xff]
    %v419 = vld [vmem:[#allocation9 + $0xb0] sm:$0xff]
    %v420 = vld [vmem:[#allocation9 + $0xb8] sm:$0xff]
    %v421 = vld [vmem:[#allocation9 + $0xc0] sm:$0xff]
    %v422 = vld [vmem:[#allocation9 + $0xc8] sm:$0xff]
    %v423 = vld [vmem:[#allocation9 + $0xd0] sm:$0xff]
    %v424 = vld [vmem:[#allocation9 + $0xd8] sm:$0xff]
    %v425 = vld [vmem:[#allocation9 + $0xe0] sm:$0xff]
    %v426 = vld [vmem:[#allocation9 + $0xe8] sm:$0xff]
    %v427 = vld [vmem:[#allocation9 + $0xf0] sm:$0xff]
    %v428 = vld [vmem:[#allocation9 + $0xf8] sm:$0xff]
    %v429 = vld [vmem:[#allocation9 + $0x100] sm:$0xff]
    %v430 = vld [vmem:[#allocation9 + $0x108] sm:$0xff]
    %v431 = vld [vmem:[#allocation9 + $0x110] sm:$0xff]
    %v432 = vld [vmem:[#allocation9 + $0x118] sm:$0xff]
    %v433 = vld [vmem:[#allocation9 + $0x120] sm:$0xff]
    %v434 = vld [vmem:[#allocation9 + $0x128] sm:$0xff]
    %v435 = vld [vmem:[#allocation9 + $0x130] sm:$0xff]
    %v436 = vld [vmem:[#allocation9 + $0x138] sm:$0xff]
    %v437 = vld [vmem:[#allocation9 + $0x140] sm:$0xff]
    %v438 = vld [vmem:[#allocation9 + $0x148] sm:$0xff]
    %v439 = vld [vmem:[#allocation9 + $0x150] sm:$0xff]
    %v440 = vld [vmem:[#allocation9 + $0x158] sm:$0xff]
    %v441 = vld [vmem:[#allocation9 + $0x160] sm:$0xff]
    %v442 = vld [vmem:[#allocation9 + $0x168] sm:$0xff]
    %v443 = vld [vmem:[#allocation9 + $0x170] sm:$0xff]
    %v444 = vld [vmem:[#allocation9 + $0x178] sm:$0xff]
    %v445 = vld [vmem:[%s4] sm:$0x1]
    %v447 = vlaneseq
    %v448 = vshrl.u32 %v447, 7
    %v449 = vsub.s32 0, %v448
    %v450 = vrot.slane %v445, %v449
    %v452 = vld [vmem:[#allocation3] sm:$0xff]
    %v453 = vld [vmem:[#allocation3 + $0x8] sm:$0xff]
    %v454 = vld [vmem:[#allocation3 + $0x10] sm:$0xff]
    %455 = vmatprep.subr.mxu0 %v398
    %456 = vmatpush1.msra.mxu0 %v397
    %457 = vmatprep.subr.mxu0 %v401
    %458 = vmatpush1.msra.mxu0 %v400
    %459 = vmatprep.subr.mxu0 %v404
    %460 = vmatpush1.msra.mxu0 %v403
    %461 = vmatprep.subr.mxu0 %v407
    %462 = vmatpush1.msra.mxu0 %v406
    %463 = vmatprep.subr.mxu0 %v410
    %464 = vmatpush1.msra.mxu0 %v409
    %465 = vmatprep.subr.mxu0 %v413
    %466 = vmatpush1.msra.mxu0 %v412
    %467 = vmatprep.subr.mxu0 %v416
    %468 = vmatpush1.msra.mxu0 %v415
    %469 = vmatprep.subr.mxu0 %v419
    %470 = vmatpush1.msra.mxu0 %v418
    %471 = vmatprep.subr.mxu0 %v422
    %472 = vmatpush1.msra.mxu0 %v421
    %473 = vmatprep.subr.mxu0 %v425
    %474 = vmatpush1.msra.mxu0 %v424
    %475 = vmatprep.subr.mxu0 %v428
    %476 = vmatpush1.msra.mxu0 %v427
    %477 = vmatprep.subr.mxu0 %v431
    %478 = vmatpush1.msra.mxu0 %v430
    %479 = vmatprep.subr.mxu0 %v434
    %480 = vmatpush1.msra.mxu0 %v433
    %481 = vmatprep.subr.mxu0 %v437
    %482 = vmatpush1.msra.mxu0 %v436
    %483 = vmatprep.subr.mxu0 %v440
    %484 = vmatpush1.msra.mxu0 %v439
    %485 = vmatprep.subr.mxu0 %v443
    %486 = vmatpush1.msra.mxu0 %v442
    %487 = vmatprep.subr.mxu0 0.0
    %488 = vmatpush1.msra.mxu0 0.0
    %489 = vmatprep.subr.mxu0 0.0
    %490 = vmatpush1.msra.mxu0 0.0
    %491 = vmatprep.subr.mxu0 0.0
    %492 = vmatpush1.msra.mxu0 0.0
    %493 = vmatprep.subr.mxu0 0.0
    %494 = vmatpush1.msra.mxu0 0.0
    %495 = vmatprep.subr.mxu0 0.0
    %496 = vmatpush1.msra.mxu0 0.0
    %497 = vmatprep.subr.mxu0 0.0
    %498 = vmatpush1.msra.mxu0 0.0
    %499 = vmatprep.subr.mxu0 0.0
    %500 = vmatpush1.msra.mxu0 0.0
    %501 = vmatprep.subr.mxu0 0.0
    %502 = vmatpush1.msra.mxu0 0.0
    %503 = vmatprep.subr.mxu0 0.0
    %504 = vmatpush1.msra.mxu0 0.0
    %505 = vmatprep.subr.mxu0 0.0
    %506 = vmatpush1.msra.mxu0 0.0
    %507 = vmatprep.subr.mxu0 0.0
    %508 = vmatpush1.msra.mxu0 0.0
    %509 = vmatprep.subr.mxu0 0.0
    %510 = vmatpush1.msra.mxu0 0.0
    %511 = vmatprep.subr.mxu0 0.0
    %512 = vmatpush1.msra.mxu0 0.0
    %513 = vmatprep.subr.mxu0 0.0
    %514 = vmatpush1.msra.mxu0 0.0
    %515 = vmatprep.subr.mxu0 0.0
    %516 = vmatpush1.msra.mxu0 0.0
    %517 = vmatprep.subr.mxu0 0.0
    %518 = vmatpush1.msra.mxu0 0.0
    %519 = vmatprep.mubr.f32.mxu0 0.0
    %520 = vmatmul.mubr.f32.gmra.mrb[0].mxu0 0.0
    %v521 = vpop.f32.mrb[0].mxu0
    %v522 = vadd.f32 0.0, %v521
    %v523 = vpop.f32.mrb[0].mxu0
    %v524 = vadd.f32 0.0, %v523
    %525 = vdwg.mxu0
    %526 = vmatprep.subr.mxu0 0.0
    %527 = vmatpush1.msra.mxu0 %v399
    %528 = vmatprep.subr.mxu0 0.0
    %529 = vmatpush1.msra.mxu0 %v402
    %530 = vmatprep.subr.mxu0 0.0
    %531 = vmatpush1.msra.mxu0 %v405
    %532 = vmatprep.subr.mxu0 0.0
    %533 = vmatpush1.msra.mxu0 %v408
    %534 = vmatprep.subr.mxu0 0.0
    %535 = vmatpush1.msra.mxu0 %v411
    %536 = vmatprep.subr.mxu0 0.0
    %537 = vmatpush1.msra.mxu0 %v414
    %538 = vmatprep.subr.mxu0 0.0
    %539 = vmatpush1.msra.mxu0 %v417
    %540 = vmatprep.subr.mxu0 0.0
    %541 = vmatpush1.msra.mxu0 %v420
    %542 = vmatprep.subr.mxu0 0.0
    %543 = vmatpush1.msra.mxu0 %v423
    %544 = vmatprep.subr.mxu0 0.0
    %545 = vmatpush1.msra.mxu0 %v426
    %546 = vmatprep.subr.mxu0 0.0
    %547 = vmatpush1.msra.mxu0 %v429
    %548 = vmatprep.subr.mxu0 0.0
    %549 = vmatpush1.msra.mxu0 %v432
    %550 = vmatprep.subr.mxu0 0.0
    %551 = vmatpush1.msra.mxu0 %v435
    %552 = vmatprep.subr.mxu0 0.0
    %553 = vmatpush1.msra.mxu0 %v438
    %554 = vmatprep.subr.mxu0 0.0
    %555 = vmatpush1.msra.mxu0 %v441
    %556 = vmatprep.subr.mxu0 0.0
    %557 = vmatpush1.msra.mxu0 %v444
    %558 = vmatprep.subr.mxu0 0.0
    %559 = vmatpush1.msra.mxu0 0.0
    %560 = vmatprep.subr.mxu0 0.0
    %561 = vmatpush1.msra.mxu0 0.0
    %562 = vmatprep.subr.mxu0 0.0
    %563 = vmatpush1.msra.mxu0 0.0
    %564 = vmatprep.subr.mxu0 0.0
    %565 = vmatpush1.msra.mxu0 0.0
    %566 = vmatprep.subr.mxu0 0.0
    %567 = vmatpush1.msra.mxu0 0.0
    %568 = vmatprep.subr.mxu0 0.0
    %569 = vmatpush1.msra.mxu0 0.0
    %570 = vmatprep.subr.mxu0 0.0
    %571 = vmatpush1.msra.mxu0 0.0
    %572 = vmatprep.subr.mxu0 0.0
    %573 = vmatpush1.msra.mxu0 0.0
    %574 = vmatprep.subr.mxu0 0.0
    %575 = vmatpush1.msra.mxu0 0.0
    %576 = vmatprep.subr.mxu0 0.0
    %577 = vmatpush1.msra.mxu0 0.0
    %578 = vmatprep.subr.mxu0 0.0
    %579 = vmatpush1.msra.mxu0 0.0
    %580 = vmatprep.subr.mxu0 0.0
    %581 = vmatpush1.msra.mxu0 0.0
    %582 = vmatprep.subr.mxu0 0.0
    %583 = vmatpush1.msra.mxu0 0.0
    %584 = vmatprep.subr.mxu0 0.0
    %585 = vmatpush1.msra.mxu0 0.0
    %586 = vmatprep.subr.mxu0 0.0
    %587 = vmatpush1.msra.mxu0 0.0
    %588 = vmatprep.subr.mxu0 0.0
    %589 = vmatpush1.msra.mxu0 0.0
    %590 = vmatprep.mubr.f32.mxu0 0.0
    %591 = vmatmul.mubr.f32.gmra.mrb[0].mxu0 0.0
    %v592 = vpop.f32.mrb[0].mxu0
    %v593 = vadd.f32 0.0, %v592
    %v594 = vpop.f32.mrb[0].mxu0
    %595 = vdwg.mxu0
    %v596 = vadd.f32 %v452, %v522
    %v597 = vxor.u32 %v596, 2147483648
    %v598 = vmul.f32 %v597, 1.442695
    %v599 = vpow.pop %v598
    %v600 = vadd.f32 %v599, 1.0
    %v601 = vrcp.pop %v600
    %v602 = vmul.f32 1.0, %v601
    %v603 = vadd.f32 %v453, %v524
    %v604 = vxor.u32 %v603, 2147483648
    %v605 = vmul.f32 %v604, 1.442695
    %v606 = vpow.pop %v605
    %v607 = vadd.f32 %v606, 1.0
    %v608 = vrcp.pop %v607
    %v609 = vmul.f32 1.0, %v608
    %v610 = vadd.f32 %v593, %v450
    %v611 = vmul.f32 %v602, %v610
    %v612 = vadd.f32 %v454, %v611
    %v613 = vtanh.pop %v612
    %v614 = vsub.f32 0.0, %v613
    %v615 = vmul.f32 %v609, %v614
    %v616 = vadd.f32 %v613, %v615
    %617 = vst [vmem:[#allocation2] sm:$0xff] %v616
    %s618 = scalar_lea.vmem [#allocation3], 24
    %v619 = vld [vmem:[%s618] sm:$0xff]
    %v620 = vld [vmem:[%s618 + $0x8] sm:$0xff]
    %v621 = vld [vmem:[%s618 + $0x10] sm:$0xff]
    %622 = vmatprep.subr.mxu0 %v398
    %623 = vmatpush1.msra.mxu0 %v397
    %624 = vmatprep.subr.mxu0 %v401
    %625 = vmatpush1.msra.mxu0 %v400
    %626 = vmatprep.subr.mxu0 %v404
    %627 = vmatpush1.msra.mxu0 %v403
    %628 = vmatprep.subr.mxu0 %v407
    %629 = vmatpush1.msra.mxu0 %v406
    %630 = vmatprep.subr.mxu0 %v410
    %631 = vmatpush1.msra.mxu0 %v409
    %632 = vmatprep.subr.mxu0 %v413
    %633 = vmatpush1.msra.mxu0 %v412
    %634 = vmatprep.subr.mxu0 %v416
    %635 = vmatpush1.msra.mxu0 %v415
    %636 = vmatprep.subr.mxu0 %v419
    %637 = vmatpush1.msra.mxu0 %v418
    %638 = vmatprep.subr.mxu0 %v422
    %639 = vmatpush1.msra.mxu0 %v421
    %640 = vmatprep.subr.mxu0 %v425
    %641 = vmatpush1.msra.mxu0 %v424
    %642 = vmatprep.subr.mxu0 %v428
    %643 = vmatpush1.msra.mxu0 %v427
    %644 = vmatprep.subr.mxu0 %v431
    %645 = vmatpush1.msra.mxu0 %v430
    %646 = vmatprep.subr.mxu0 %v434
    %647 = vmatpush1.msra.mxu0 %v433
    %648 = vmatprep.subr.mxu0 %v437
    %649 = vmatpush1.msra.mxu0 %v436
    %650 = vmatprep.subr.mxu0 %v440
    %651 = vmatpush1.msra.mxu0 %v439
    %652 = vmatprep.subr.mxu0 %v443
    %653 = vmatpush1.msra.mxu0 %v442
    %654 = vmatprep.subr.mxu0 0.0
    %655 = vmatpush1.msra.mxu0 0.0
    %656 = vmatprep.subr.mxu0 0.0
    %657 = vmatpush1.msra.mxu0 0.0
    %658 = vmatprep.subr.mxu0 0.0
    %659 = vmatpush1.msra.mxu0 0.0
    %660 = vmatprep.subr.mxu0 0.0
    %661 = vmatpush1.msra.mxu0 0.0
    %662 = vmatprep.subr.mxu0 0.0
    %663 = vmatpush1.msra.mxu0 0.0
    %664 = vmatprep.subr.mxu0 0.0
    %665 = vmatpush1.msra.mxu0 0.0
    %666 = vmatprep.subr.mxu0 0.0
    %667 = vmatpush1.msra.mxu0 0.0
    %668 = vmatprep.subr.mxu0 0.0
    %669 = vmatpush1.msra.mxu0 0.0
    %670 = vmatprep.subr.mxu0 0.0
    %671 = vmatpush1.msra.mxu0 0.0
    %672 = vmatprep.subr.mxu0 0.0
    %673 = vmatpush1.msra.mxu0 0.0
    %674 = vmatprep.subr.mxu0 0.0
    %675 = vmatpush1.msra.mxu0 0.0
    %676 = vmatprep.subr.mxu0 0.0
    %677 = vmatpush1.msra.mxu0 0.0
    %678 = vmatprep.subr.mxu0 0.0
    %679 = vmatpush1.msra.mxu0 0.0
    %680 = vmatprep.subr.mxu0 0.0
    %681 = vmatpush1.msra.mxu0 0.0
    %682 = vmatprep.subr.mxu0 0.0
    %683 = vmatpush1.msra.mxu0 0.0
    %684 = vmatprep.subr.mxu0 0.0
    %685 = vmatpush1.msra.mxu0 0.0
    %686 = vmatprep.mubr.f32.mxu0 0.0
    %687 = vmatmul.mubr.f32.gmra.mrb[0].mxu0 %v616
    %v688 = vpop.f32.mrb[0].mxu0
    %v689 = vadd.f32 0.0, %v688
    %v690 = vpop.f32.mrb[0].mxu0
    %v691 = vadd.f32 0.0, %v690
    %692 = vdwg.mxu0
    %693 = vmatprep.subr.mxu0 0.0
    %694 = vmatpush1.msra.mxu0 %v399
    %695 = vmatprep.subr.mxu0 0.0
    %696 = vmatpush1.msra.mxu0 %v402
    %697 = vmatprep.subr.mxu0 0.0
    %698 = vmatpush1.msra.mxu0 %v405
    %699 = vmatprep.subr.mxu0 0.0
    %700 = vmatpush1.msra.mxu0 %v408
    %701 = vmatprep.subr.mxu0 0.0
    %702 = vmatpush1.msra.mxu0 %v411
    %703 = vmatprep.subr.mxu0 0.0
    %704 = vmatpush1.msra.mxu0 %v414
    %705 = vmatprep.subr.mxu0 0.0
    %706 = vmatpush1.msra.mxu0 %v417
    %707 = vmatprep.subr.mxu0 0.0
    %708 = vmatpush1.msra.mxu0 %v420
    %709 = vmatprep.subr.mxu0 0.0
    %710 = vmatpush1.msra.mxu0 %v423
    %711 = vmatprep.subr.mxu0 0.0
    %712 = vmatpush1.msra.mxu0 %v426
    %713 = vmatprep.subr.mxu0 0.0
    %714 = vmatpush1.msra.mxu0 %v429
    %715 = vmatprep.subr.mxu0 0.0
    %716 = vmatpush1.msra.mxu0 %v432
    %717 = vmatprep.subr.mxu0 0.0
    %718 = vmatpush1.msra.mxu0 %v435
    %719 = vmatprep.subr.mxu0 0.0
    %720 = vmatpush1.msra.mxu0 %v438
    %721 = vmatprep.subr.mxu0 0.0
    %722 = vmatpush1.msra.mxu0 %v441
    %723 = vmatprep.subr.mxu0 0.0
    %724 = vmatpush1.msra.mxu0 %v444
    %725 = vmatprep.subr.mxu0 0.0
    %726 = vmatpush1.msra.mxu0 0.0
    %727 = vmatprep.subr.mxu0 0.0
    %728 = vmatpush1.msra.mxu0 0.0
    %729 = vmatprep.subr.mxu0 0.0
    %730 = vmatpush1.msra.mxu0 0.0
    %731 = vmatprep.subr.mxu0 0.0
    %732 = vmatpush1.msra.mxu0 0.0
    %733 = vmatprep.subr.mxu0 0.0
    %734 = vmatpush1.msra.mxu0 0.0
    %735 = vmatprep.subr.mxu0 0.0
    %736 = vmatpush1.msra.mxu0 0.0
    %737 = vmatprep.subr.mxu0 0.0
    %738 = vmatpush1.msra.mxu0 0.0
    %739 = vmatprep.subr.mxu0 0.0
    %740 = vmatpush1.msra.mxu0 0.0
    %741 = vmatprep.subr.mxu0 0.0
    %742 = vmatpush1.msra.mxu0 0.0
    %743 = vmatprep.subr.mxu0 0.0
    %744 = vmatpush1.msra.mxu0 0.0
    %745 = vmatprep.subr.mxu0 0.0
    %746 = vmatpush1.msra.mxu0 0.0
    %747 = vmatprep.subr.mxu0 0.0
    %748 = vmatpush1.msra.mxu0 0.0
    %749 = vmatprep.subr.mxu0 0.0
    %750 = vmatpush1.msra.mxu0 0.0
    %751 = vmatprep.subr.mxu0 0.0
    %752 = vmatpush1.msra.mxu0 0.0
    %753 = vmatprep.subr.mxu0 0.0
    %754 = vmatpush1.msra.mxu0 0.0
    %755 = vmatprep.subr.mxu0 0.0
    %756 = vmatpush1.msra.mxu0 0.0
    %757 = vmatprep.mubr.f32.mxu0 0.0
    %758 = vmatmul.mubr.f32.gmra.mrb[0].mxu0 %v616
    %v759 = vpop.f32.mrb[0].mxu0
    %v760 = vadd.f32 0.0, %v759
    %v761 = vpop.f32.mrb[0].mxu0
    %762 = vdwg.mxu0
    %v763 = vadd.f32 %v619, %v689
    %v764 = vxor.u32 %v763, 2147483648
    %v765 = vmul.f32 %v764, 1.442695
    %v766 = vpow.pop %v765
    %v767 = vadd.f32 %v766, 1.0
    %v768 = vrcp.pop %v767
    %v769 = vmul.f32 1.0, %v768
    %v770 = vadd.f32 %v620, %v691
    %v771 = vxor.u32 %v770, 2147483648
    %v772 = vmul.f32 %v771, 1.442695
    %v773 = vpow.pop %v772
    %v774 = vadd.f32 %v773, 1.0
    %v775 = vrcp.pop %v774
    %v776 = vmul.f32 1.0, %v775
    %v777 = vadd.f32 %v760, %v450
    %v778 = vmul.f32 %v769, %v777
    %v779 = vadd.f32 %v621, %v778
    %v780 = vtanh.pop %v779
    %v781 = vsub.f32 %v616, %v780
    %v782 = vmul.f32 %v776, %v781
    %v783 = vadd.f32 %v780, %v782
    %s784 = scalar_lea.vmem [#allocation2], 8
    %785 = vst [vmem:[%s784] sm:$0xff] %v783
    %s786 = scalar_lea.vmem [#allocation3], 48
    %v787 = vld [vmem:[%s786] sm:$0xff]
    %v788 = vld [vmem:[%s786 + $0x8] sm:$0xff]
    %v789 = vld [vmem:[%s786 + $0x10] sm:$0xff]
    %790 = vmatprep.subr.mxu0 %v398
    %791 = vmatpush1.msra.mxu0 %v397
    %792 = vmatprep.subr.mxu0 %v401
    %793 = vmatpush1.msra.mxu0 %v400
    %794 = vmatprep.subr.mxu0 %v404
    %795 = vmatpush1.msra.mxu0 %v403
    %796 = vmatprep.subr.mxu0 %v407
    %797 = vmatpush1.msra.mxu0 %v406
    %798 = vmatprep.subr.mxu0 %v410
    %799 = vmatpush1.msra.mxu0 %v409
    %800 = vmatprep.subr.mxu0 %v413
    %801 = vmatpush1.msra.mxu0 %v412
    %802 = vmatprep.subr.mxu0 %v416
    %803 = vmatpush1.msra.mxu0 %v415
    %804 = vmatprep.subr.mxu0 %v419
    %805 = vmatpush1.msra.mxu0 %v418
    %806 = vmatprep.subr.mxu0 %v422
    %807 = vmatpush1.msra.mxu0 %v421
    %808 = vmatprep.subr.mxu0 %v425
    %809 = vmatpush1.msra.mxu0 %v424
    %810 = vmatprep.subr.mxu0 %v428
    %811 = vmatpush1.msra.mxu0 %v427
    %812 = vmatprep.subr.mxu0 %v431
    %813 = vmatpush1.msra.mxu0 %v430
    %814 = vmatprep.subr.mxu0 %v434
    %815 = vmatpush1.msra.mxu0 %v433
    %816 = vmatprep.subr.mxu0 %v437
    %817 = vmatpush1.msra.mxu0 %v436
    %818 = vmatprep.subr.mxu0 %v440
    %819 = vmatpush1.msra.mxu0 %v439
    %820 = vmatprep.subr.mxu0 %v443
    %821 = vmatpush1.msra.mxu0 %v442
    %822 = vmatprep.subr.mxu0 0.0
    %823 = vmatpush1.msra.mxu0 0.0
    %824 = vmatprep.subr.mxu0 0.0
    %825 = vmatpush1.msra.mxu0 0.0
    %826 = vmatprep.subr.mxu0 0.0
    %827 = vmatpush1.msra.mxu0 0.0
    %828 = vmatprep.subr.mxu0 0.0
    %829 = vmatpush1.msra.mxu0 0.0
    %830 = vmatprep.subr.mxu0 0.0
    %831 = vmatpush1.msra.mxu0 0.0
    %832 = vmatprep.subr.mxu0 0.0
    %833 = vmatpush1.msra.mxu0 0.0
    %834 = vmatprep.subr.mxu0 0.0
    %835 = vmatpush1.msra.mxu0 0.0
    %836 = vmatprep.subr.mxu0 0.0
    %837 = vmatpush1.msra.mxu0 0.0
    %838 = vmatprep.subr.mxu0 0.0
    %839 = vmatpush1.msra.mxu0 0.0
    %840 = vmatprep.subr.mxu0 0.0
    %841 = vmatpush1.msra.mxu0 0.0
    %842 = vmatprep.subr.mxu0 0.0
    %843 = vmatpush1.msra.mxu0 0.0
    %844 = vmatprep.subr.mxu0 0.0
    %845 = vmatpush1.msra.mxu0 0.0
    %846 = vmatprep.subr.mxu0 0.0
    %847 = vmatpush1.msra.mxu0 0.0
    %848 = vmatprep.subr.mxu0 0.0
    %849 = vmatpush1.msra.mxu0 0.0
    %850 = vmatprep.subr.mxu0 0.0
    %851 = vmatpush1.msra.mxu0 0.0
    %852 = vmatprep.subr.mxu0 0.0
    %853 = vmatpush1.msra.mxu0 0.0
    %854 = vmatprep.mubr.f32.mxu0 0.0
    %855 = vmatmul.mubr.f32.gmra.mrb[0].mxu0 %v783
    %v856 = vpop.f32.mrb[0].mxu0
    %v857 = vadd.f32 0.0, %v856
    %v858 = vpop.f32.mrb[0].mxu0
    %v859 = vadd.f32 0.0, %v858
    %860 = vdwg.mxu0
    %861 = vmatprep.subr.mxu0 0.0
    %862 = vmatpush1.msra.mxu0 %v399
    %863 = vmatprep.subr.mxu0 0.0
    %864 = vmatpush1.msra.mxu0 %v402
    %865 = vmatprep.subr.mxu0 0.0
    %866 = vmatpush1.msra.mxu0 %v405
    %867 = vmatprep.subr.mxu0 0.0
    %868 = vmatpush1.msra.mxu0 %v408
    %869 = vmatprep.subr.mxu0 0.0
    %870 = vmatpush1.msra.mxu0 %v411
    %871 = vmatprep.subr.mxu0 0.0
    %872 = vmatpush1.msra.mxu0 %v414
    %873 = vmatprep.subr.mxu0 0.0
    %874 = vmatpush1.msra.mxu0 %v417
    %875 = vmatprep.subr.mxu0 0.0
    %876 = vmatpush1.msra.mxu0 %v420
    %877 = vmatprep.subr.mxu0 0.0
    %878 = vmatpush1.msra.mxu0 %v423
    %879 = vmatprep.subr.mxu0 0.0
    %880 = vmatpush1.msra.mxu0 %v426
    %881 = vmatprep.subr.mxu0 0.0
    %882 = vmatpush1.msra.mxu0 %v429
    %883 = vmatprep.subr.mxu0 0.0
    %884 = vmatpush1.msra.mxu0 %v432
    %885 = vmatprep.subr.mxu0 0.0
    %886 = vmatpush1.msra.mxu0 %v435
    %887 = vmatprep.subr.mxu0 0.0
    %888 = vmatpush1.msra.mxu0 %v438
    %889 = vmatprep.subr.mxu0 0.0
    %890 = vmatpush1.msra.mxu0 %v441
    %891 = vmatprep.subr.mxu0 0.0
    %892 = vmatpush1.msra.mxu0 %v444
    %893 = vmatprep.subr.mxu0 0.0
    %894 = vmatpush1.msra.mxu0 0.0
    %895 = vmatprep.subr.mxu0 0.0
    %896 = vmatpush1.msra.mxu0 0.0
    %897 = vmatprep.subr.mxu0 0.0
    %898 = vmatpush1.msra.mxu0 0.0
    %899 = vmatprep.subr.mxu0 0.0
    %900 = vmatpush1.msra.mxu0 0.0
    %901 = vmatprep.subr.mxu0 0.0
    %902 = vmatpush1.msra.mxu0 0.0
    %903 = vmatprep.subr.mxu0 0.0
    %904 = vmatpush1.msra.mxu0 0.0
    %905 = vmatprep.subr.mxu0 0.0
    %906 = vmatpush1.msra.mxu0 0.0
    %907 = vmatprep.subr.mxu0 0.0
    %908 = vmatpush1.msra.mxu0 0.0
    %909 = vmatprep.subr.mxu0 0.0
    %910 = vmatpush1.msra.mxu0 0.0
    %911 = vmatprep.subr.mxu0 0.0
    %912 = vmatpush1.msra.mxu0 0.0
    %913 = vmatprep.subr.mxu0 0.0
    %914 = vmatpush1.msra.mxu0 0.0
    %915 = vmatprep.subr.mxu0 0.0
    %916 = vmatpush1.msra.mxu0 0.0
    %917 = vmatprep.subr.mxu0 0.0
    %918 = vmatpush1.msra.mxu0 0.0
    %919 = vmatprep.subr.mxu0 0.0
    %920 = vmatpush1.msra.mxu0 0.0
    %921 = vmatprep.subr.mxu0 0.0
    %922 = vmatpush1.msra.mxu0 0.0
    %923 = vmatprep.subr.mxu0 0.0
    %924 = vmatpush1.msra.mxu0 0.0
    %925 = vmatprep.mubr.f32.mxu0 0.0
    %926 = vmatmul.mubr.f32.gmra.mrb[0].mxu0 %v783
    %v927 = vpop.f32.mrb[0].mxu0
    %v928 = vadd.f32 0.0, %v927
    %v929 = vpop.f32.mrb[0].mxu0
    %930 = vdwg.mxu0
    %v931 = vadd.f32 %v787, %v857
    %v932 = vxor.u32 %v931, 2147483648
    %v933 = vmul.f32 %v932, 1.442695
    %v934 = vpow.pop %v933
    %v935 = vadd.f32 %v934, 1.0
    %v936 = vrcp.pop %v935
    %v937 = vmul.f32 1.0, %v936
    %v938 = vadd.f32 %v788, %v859
    %v939 = vxor.u32 %v938, 2147483648
    %v940 = vmul.f32 %v939, 1.442695
    %v941 = vpow.pop %v940
    %v942 = vadd.f32 %v941, 1.0
    %v943 = vrcp.pop %v942
    %v944 = vmul.f32 1.0, %v943
    %v945 = vadd.f32 %v928, %v450
    %v946 = vmul.f32 %v937, %v945
    %v947 = vadd.f32 %v789, %v946
    %v948 = vtanh.pop %v947
    %v949 = vsub.f32 %v783, %v948
    %v950 = vmul.f32 %v944, %v949
    %v951 = vadd.f32 %v948, %v950
    %s952 = scalar_lea.vmem [#allocation2], 16
    %953 = vst [vmem:[%s952] sm:$0xff] %v951
    %s954 = scalar_lea.vmem [#allocation3], 72
    %v955 = vld [vmem:[%s954] sm:$0xff]
    %v956 = vld [vmem:[%s954 + $0x8] sm:$0xff]
    %v957 = vld [vmem:[%s954 + $0x10] sm:$0xff]
    %958 = vmatprep.subr.mxu0 %v398
    %959 = vmatpush1.msra.mxu0 %v397
    %960 = vmatprep.subr.mxu0 %v401
    %961 = vmatpush1.msra.mxu0 %v400
    %962 = vmatprep.subr.mxu0 %v404
    %963 = vmatpush1.msra.mxu0 %v403
    %964 = vmatprep.subr.mxu0 %v407
    %965 = vmatpush1.msra.mxu0 %v406
    %966 = vmatprep.subr.mxu0 %v410
    %967 = vmatpush1.msra.mxu0 %v409
    %968 = vmatprep.subr.mxu0 %v413
    %969 = vmatpush1.msra.mxu0 %v412
    %970 = vmatprep.subr.mxu0 %v416
    %971 = vmatpush1.msra.mxu0 %v415
    %972 = vmatprep.subr.mxu0 %v419
    %973 = vmatpush1.msra.mxu0 %v418
    %974 = vmatprep.subr.mxu0 %v422
    %975 = vmatpush1.msra.mxu0 %v421
    %976 = vmatprep.subr.mxu0 %v425
    %977 = vmatpush1.msra.mxu0 %v424
    %978 = vmatprep.subr.mxu0 %v428
    %979 = vmatpush1.msra.mxu0 %v427
    %980 = vmatprep.subr.mxu0 %v431
    %981 = vmatpush1.msra.mxu0 %v430
    %982 = vmatprep.subr.mxu0 %v434
    %983 = vmatpush1.msra.mxu0 %v433
    %984 = vmatprep.subr.mxu0 %v437
    %985 = vmatpush1.msra.mxu0 %v436
    %986 = vmatprep.subr.mxu0 %v440
    %987 = vmatpush1.msra.mxu0 %v439
    %988 = vmatprep.subr.mxu0 %v443
    %989 = vmatpush1.msra.mxu0 %v442
    %990 = vmatprep.subr.mxu0 0.0
    %991 = vmatpush1.msra.mxu0 0.0
    %992 = vmatprep.subr.mxu0 0.0
    %993 = vmatpush1.msra.mxu0 0.0
    %994 = vmatprep.subr.mxu0 0.0
    %995 = vmatpush1.msra.mxu0 0.0
    %996 = vmatprep.subr.mxu0 0.0
    %997 = vmatpush1.msra.mxu0 0.0
    %998 = vmatprep.subr.mxu0 0.0
    %999 = vmatpush1.msra.mxu0 0.0
    %1000 = vmatprep.subr.mxu0 0.0
    %1001 = vmatpush1.msra.mxu0 0.0
    %1002 = vmatprep.subr.mxu0 0.0
    %1003 = vmatpush1.msra.mxu0 0.0
    %1004 = vmatprep.subr.mxu0 0.0
    %1005 = vmatpush1.msra.mxu0 0.0
    %1006 = vmatprep.subr.mxu0 0.0
    %1007 = vmatpush1.msra.mxu0 0.0
    %1008 = vmatprep.subr.mxu0 0.0
    %1009 = vmatpush1.msra.mxu0 0.0
    %1010 = vmatprep.subr.mxu0 0.0
    %1011 = vmatpush1.msra.mxu0 0.0
    %1012 = vmatprep.subr.mxu0 0.0
    %1013 = vmatpush1.msra.mxu0 0.0
    %1014 = vmatprep.subr.mxu0 0.0
    %1015 = vmatpush1.msra.mxu0 0.0
    %1016 = vmatprep.subr.mxu0 0.0
    %1017 = vmatpush1.msra.mxu0 0.0
    %1018 = vmatprep.subr.mxu0 0.0
    %1019 = vmatpush1.msra.mxu0 0.0
    %1020 = vmatprep.subr.mxu0 0.0
    %1021 = vmatpush1.msra.mxu0 0.0
    %1022 = vmatprep.mubr.f32.mxu0 0.0
    %1023 = vmatmul.mubr.f32.gmra.mrb[0].mxu0 %v951
    %v1024 = vpop.f32.mrb[0].mxu0
    %v1025 = vadd.f32 0.0, %v1024
    %v1026 = vpop.f32.mrb[0].mxu0
    %v1027 = vadd.f32 0.0, %v1026
    %1028 = vdwg.mxu0
    %1029 = vmatprep.subr.mxu0 0.0
    %1030 = vmatpush1.msra.mxu0 %v399
    %1031 = vmatprep.subr.mxu0 0.0
    %1032 = vmatpush1.msra.mxu0 %v402
    %1033 = vmatprep.subr.mxu0 0.0
    %1034 = vmatpush1.msra.mxu0 %v405
    %1035 = vmatprep.subr.mxu0 0.0
    %1036 = vmatpush1.msra.mxu0 %v408
    %1037 = vmatprep.subr.mxu0 0.0
    %1038 = vmatpush1.msra.mxu0 %v411
    %1039 = vmatprep.subr.mxu0 0.0
    %1040 = vmatpush1.msra.mxu0 %v414
    %1041 = vmatprep.subr.mxu0 0.0
    %1042 = vmatpush1.msra.mxu0 %v417
    %1043 = vmatprep.subr.mxu0 0.0
    %1044 = vmatpush1.msra.mxu0 %v420
    %1045 = vmatprep.subr.mxu0 0.0
    %1046 = vmatpush1.msra.mxu0 %v423
    %1047 = vmatprep.subr.mxu0 0.0
    %1048 = vmatpush1.msra.mxu0 %v426
    %1049 = vmatprep.subr.mxu0 0.0
    %1050 = vmatpush1.msra.mxu0 %v429
    %1051 = vmatprep.subr.mxu0 0.0
    %1052 = vmatpush1.msra.mxu0 %v432
    %1053 = vmatprep.subr.mxu0 0.0
    %1054 = vmatpush1.msra.mxu0 %v435
    %1055 = vmatprep.subr.mxu0 0.0
    %1056 = vmatpush1.msra.mxu0 %v438
    %1057 = vmatprep.subr.mxu0 0.0
    %1058 = vmatpush1.msra.mxu0 %v441
    %1059 = vmatprep.subr.mxu0 0.0
    %1060 = vmatpush1.msra.mxu0 %v444
    %1061 = vmatprep.subr.mxu0 0.0
    %1062 = vmatpush1.msra.mxu0 0.0
    %1063 = vmatprep.subr.mxu0 0.0
    %1064 = vmatpush1.msra.mxu0 0.0
    %1065 = vmatprep.subr.mxu0 0.0
    %1066 = vmatpush1.msra.mxu0 0.0
    %1067 = vmatprep.subr.mxu0 0.0
    %1068 = vmatpush1.msra.mxu0 0.0
    %1069 = vmatprep.subr.mxu0 0.0
    %1070 = vmatpush1.msra.mxu0 0.0
    %1071 = vmatprep.subr.mxu0 0.0
    %1072 = vmatpush1.msra.mxu0 0.0
    %1073 = vmatprep.subr.mxu0 0.0
    %1074 = vmatpush1.msra.mxu0 0.0
    %1075 = vmatprep.subr.mxu0 0.0
    %1076 = vmatpush1.msra.mxu0 0.0
    %1077 = vmatprep.subr.mxu0 0.0
    %1078 = vmatpush1.msra.mxu0 0.0
    %1079 = vmatprep.subr.mxu0 0.0
    %1080 = vmatpush1.msra.mxu0 0.0
    %1081 = vmatprep.subr.mxu0 0.0
    %1082 = vmatpush1.msra.mxu0 0.0
    %1083 = vmatprep.subr.mxu0 0.0
    %1084 = vmatpush1.msra.mxu0 0.0
    %1085 = vmatprep.subr.mxu0 0.0
    %1086 = vmatpush1.msra.mxu0 0.0
    %1087 = vmatprep.subr.mxu0 0.0
    %1088 = vmatpush1.msra.mxu0 0.0
    %1089 = vmatprep.subr.mxu0 0.0
    %1090 = vmatpush1.msra.mxu0 0.0
    %1091 = vmatprep.subr.mxu0 0.0
    %1092 = vmatpush1.msra.mxu0 0.0
    %1093 = vmatprep.mubr.f32.mxu0 0.0
    %1094 = vmatmul.mubr.f32.gmra.mrb[0].mxu0 %v951
    %v1095 = vpop.f32.mrb[0].mxu0
    %v1096 = vadd.f32 0.0, %v1095
    %v1097 = vpop.f32.mrb[0].mxu0
    %1098 = vdwg.mxu0
    %v1099 = vadd.f32 %v955, %v1025
    %v1100 = vxor.u32 %v1099, 2147483648
    %v1101 = vmul.f32 %v1100, 1.442695
    %v1102 = vpow.pop %v1101
    %v1103 = vadd.f32 %v1102, 1.0
    %v1104 = vrcp.pop %v1103
    %v1105 = vmul.f32 1.0, %v1104
    %v1106 = vadd.f32 %v956, %v1027
    %v1107 = vxor.u32 %v1106, 2147483648
    %v1108 = vmul.f32 %v1107, 1.442695
    %v1109 = vpow.pop %v1108
    %v1110 = vadd.f32 %v1109, 1.0
    %v1111 = vrcp.pop %v1110
    %v1112 = vmul.f32 1.0, %v1111
    %v1113 = vadd.f32 %v1096, %v450
    %v1114 = vmul.f32 %v1105, %v1113
    %v1115 = vadd.f32 %v957, %v1114
    %v1116 = vtanh.pop %v1115
    %v1117 = vsub.f32 %v951, %v1116
    %v1118 = vmul.f32 %v1112, %v1117
    %v1119 = vadd.f32 %v1116, %v1118
    %s1120 = scalar_lea.vmem [#allocation2], 24
    %1121 = vst [vmem:[%s1120] sm:$0xff] %v1119
    %s1122 = scalar_lea.vmem [#allocation3], 96
    %v1123 = vld [vmem:[%s1122] sm:$0xff]
    %v1124 = vld [vmem:[%s1122 + $0x8] sm:$0xff]
    %v1125 = vld [vmem:[%s1122 + $0x10] sm:$0xff]
    %1126 = vmatprep.subr.mxu0 %v398
    %1127 = vmatpush1.msra.mxu0 %v397
    %1128 = vmatprep.subr.mxu0 %v401
    %1129 = vmatpush1.msra.mxu0 %v400
    %1130 = vmatprep.subr.mxu0 %v404
    %1131 = vmatpush1.msra.mxu0 %v403
    %1132 = vmatprep.subr.mxu0 %v407
    %1133 = vmatpush1.msra.mxu0 %v406
    %1134 = vmatprep.subr.mxu0 %v410
    %1135 = vmatpush1.msra.mxu0 %v409
    %1136 = vmatprep.subr.mxu0 %v413
    %1137 = vmatpush1.msra.mxu0 %v412
    %1138 = vmatprep.subr.mxu0 %v416
    %1139 = vmatpush1.msra.mxu0 %v415
    %1140 = vmatprep.subr.mxu0 %v419
    %1141 = vmatpush1.msra.mxu0 %v418
    %1142 = vmatprep.subr.mxu0 %v422
    %1143 = vmatpush1.msra.mxu0 %v421
    %1144 = vmatprep.subr.mxu0 %v425
    %1145 = vmatpush1.msra.mxu0 %v424
    %1146 = vmatprep.subr.mxu0 %v428
    %1147 = vmatpush1.msra.mxu0 %v427
    %1148 = vmatprep.subr.mxu0 %v431
    %1149 = vmatpush1.msra.mxu0 %v430
    %1150 = vmatprep.subr.mxu0 %v434
    %1151 = vmatpush1.msra.mxu0 %v433
    %1152 = vmatprep.subr.mxu0 %v437
    %1153 = vmatpush1.msra.mxu0 %v436
    %1154 = vmatprep.subr.mxu0 %v440
    %1155 = vmatpush1.msra.mxu0 %v439
    %1156 = vmatprep.subr.mxu0 %v443
    %1157 = vmatpush1.msra.mxu0 %v442
    %1158 = vmatprep.subr.mxu0 0.0
    %1159 = vmatpush1.msra.mxu0 0.0
    %1160 = vmatprep.subr.mxu0 0.0
    %1161 = vmatpush1.msra.mxu0 0.0
    %1162 = vmatprep.subr.mxu0 0.0
    %1163 = vmatpush1.msra.mxu0 0.0
    %1164 = vmatprep.subr.mxu0 0.0
    %1165 = vmatpush1.msra.mxu0 0.0
    %1166 = vmatprep.subr.mxu0 0.0
    %1167 = vmatpush1.msra.mxu0 0.0
    %1168 = vmatprep.subr.mxu0 0.0
    %1169 = vmatpush1.msra.mxu0 0.0
    %1170 = vmatprep.subr.mxu0 0.0
    %1171 = vmatpush1.msra.mxu0 0.0
    %1172 = vmatprep.subr.mxu0 0.0
    %1173 = vmatpush1.msra.mxu0 0.0
    %1174 = vmatprep.subr.mxu0 0.0
    %1175 = vmatpush1.msra.mxu0 0.0
    %1176 = vmatprep.subr.mxu0 0.0
    %1177 = vmatpush1.msra.mxu0 0.0
    %1178 = vmatprep.subr.mxu0 0.0
    %1179 = vmatpush1.msra.mxu0 0.0
    %1180 = vmatprep.subr.mxu0 0.0
    %1181 = vmatpush1.msra.mxu0 0.0
    %1182 = vmatprep.subr.mxu0 0.0
    %1183 = vmatpush1.msra.mxu0 0.0
    %1184 = vmatprep.subr.mxu0 0.0
    %1185 = vmatpush1.msra.mxu0 0.0
    %1186 = vmatprep.subr.mxu0 0.0
    %1187 = vmatpush1.msra.mxu0 0.0
    %1188 = vmatprep.subr.mxu0 0.0
    %1189 = vmatpush1.msra.mxu0 0.0
    %1190 = vmatprep.mubr.f32.mxu0 0.0
    %1191 = vmatmul.mubr.f32.gmra.mrb[0].mxu0 %v1119
    %v1192 = vpop.f32.mrb[0].mxu0
    %v1193 = vadd.f32 0.0, %v1192
    %v1194 = vpop.f32.mrb[0].mxu0
    %v1195 = vadd.f32 0.0, %v1194
    %1196 = vdwg.mxu0
    %1197 = vmatprep.subr.mxu0 0.0
    %1198 = vmatpush1.msra.mxu0 %v399
    %1199 = vmatprep.subr.mxu0 0.0
    %1200 = vmatpush1.msra.mxu0 %v402
    %1201 = vmatprep.subr.mxu0 0.0
    %1202 = vmatpush1.msra.mxu0 %v405
    %1203 = vmatprep.subr.mxu0 0.0
    %1204 = vmatpush1.msra.mxu0 %v408
    %1205 = vmatprep.subr.mxu0 0.0
    %1206 = vmatpush1.msra.mxu0 %v411
    %1207 = vmatprep.subr.mxu0 0.0
    %1208 = vmatpush1.msra.mxu0 %v414
    %1209 = vmatprep.subr.mxu0 0.0
    %1210 = vmatpush1.msra.mxu0 %v417
    %1211 = vmatprep.subr.mxu0 0.0
    %1212 = vmatpush1.msra.mxu0 %v420
    %1213 = vmatprep.subr.mxu0 0.0
    %1214 = vmatpush1.msra.mxu0 %v423
    %1215 = vmatprep.subr.mxu0 0.0
    %1216 = vmatpush1.msra.mxu0 %v426
    %1217 = vmatprep.subr.mxu0 0.0
    %1218 = vmatpush1.msra.mxu0 %v429
    %1219 = vmatprep.subr.mxu0 0.0
    %1220 = vmatpush1.msra.mxu0 %v432
    %1221 = vmatprep.subr.mxu0 0.0
    %1222 = vmatpush1.msra.mxu0 %v435
    %1223 = vmatprep.subr.mxu0 0.0
    %1224 = vmatpush1.msra.mxu0 %v438
    %1225 = vmatprep.subr.mxu0 0.0
    %1226 = vmatpush1.msra.mxu0 %v441
    %1227 = vmatprep.subr.mxu0 0.0
    %1228 = vmatpush1.msra.mxu0 %v444
    %1229 = vmatprep.subr.mxu0 0.0
    %1230 = vmatpush1.msra.mxu0 0.0
    %1231 = vmatprep.subr.mxu0 0.0
    %1232 = vmatpush1.msra.mxu0 0.0
    %1233 = vmatprep.subr.mxu0 0.0
    %1234 = vmatpush1.msra.mxu0 0.0
    %1235 = vmatprep.subr.mxu0 0.0
    %1236 = vmatpush1.msra.mxu0 0.0
    %1237 = vmatprep.subr.mxu0 0.0
    %1238 = vmatpush1.msra.mxu0 0.0
    %1239 = vmatprep.subr.mxu0 0.0
    %1240 = vmatpush1.msra.mxu0 0.0
    %1241 = vmatprep.subr.mxu0 0.0
    %1242 = vmatpush1.msra.mxu0 0.0
    %1243 = vmatprep.subr.mxu0 0.0
    %1244 = vmatpush1.msra.mxu0 0.0
    %1245 = vmatprep.subr.mxu0 0.0
    %1246 = vmatpush1.msra.mxu0 0.0
    %1247 = vmatprep.subr.mxu0 0.0
    %1248 = vmatpush1.msra.mxu0 0.0
    %1249 = vmatprep.subr.mxu0 0.0
    %1250 = vmatpush1.msra.mxu0 0.0
    %1251 = vmatprep.subr.mxu0 0.0
    %1252 = vmatpush1.msra.mxu0 0.0
    %1253 = vmatprep.subr.mxu0 0.0
    %1254 = vmatpush1.msra.mxu0 0.0
    %1255 = vmatprep.subr.mxu0 0.0
    %1256 = vmatpush1.msra.mxu0 0.0
    %1257 = vmatprep.subr.mxu0 0.0
    %1258 = vmatpush1.msra.mxu0 0.0
    %1259 = vmatprep.subr.mxu0 0.0
    %1260 = vmatpush1.msra.mxu0 0.0
    %1261 = vmatprep.mubr.f32.mxu0 0.0
    %1262 = vmatmul.mubr.f32.gmra.mrb[0].mxu0 %v1119
    %v1263 = vpop.f32.mrb[0].mxu0
    %v1264 = vadd.f32 0.0, %v1263
    %v1265 = vpop.f32.mrb[0].mxu0
    %1266 = vdwg.mxu0
    %v1267 = vadd.f32 %v1123, %v1193
    %v1268 = vxor.u32 %v1267, 2147483648
    %v1269 = vmul.f32 %v1268, 1.442695
    %v1270 = vpow.pop %v1269
    %v1271 = vadd.f32 %v1270, 1.0
    %v1272 = vrcp.pop %v1271
    %v1273 = vmul.f32 1.0, %v1272
    %v1274 = vadd.f32 %v1124, %v1195
    %v1275 = vxor.u32 %v1274, 2147483648
    %v1276 = vmul.f32 %v1275, 1.442695
    %v1277 = vpow.pop %v1276
    %v1278 = vadd.f32 %v1277, 1.0
    %v1279 = vrcp.pop %v1278
    %v1280 = vmul.f32 1.0, %v1279
    %v1281 = vadd.f32 %v1264, %v450
    %v1282 = vmul.f32 %v1273, %v1281
    %v1283 = vadd.f32 %v1125, %v1282
    %v1284 = vtanh.pop %v1283
    %v1285 = vsub.f32 %v1119, %v1284
    %v1286 = vmul.f32 %v1280, %v1285
    %v1287 = vadd.f32 %v1284, %v1286
    %s1288 = scalar_lea.vmem [#allocation2], 32
    %1289 = vst [vmem:[%s1288] sm:$0xff] %v1287
    %s1290 = scalar_lea.vmem [#allocation3], 120
    %v1291 = vld [vmem:[%s1290] sm:$0xff]
    %v1292 = vld [vmem:[%s1290 + $0x8] sm:$0xff]
    %v1293 = vld [vmem:[%s1290 + $0x10] sm:$0xff]
    %1294 = vmatprep.subr.mxu0 %v398
    %1295 = vmatpush1.msra.mxu0 %v397
    %1296 = vmatprep.subr.mxu0 %v401
    %1297 = vmatpush1.msra.mxu0 %v400
    %1298 = vmatprep.subr.mxu0 %v404
    %1299 = vmatpush1.msra.mxu0 %v403
    %1300 = vmatprep.subr.mxu0 %v407
    %1301 = vmatpush1.msra.mxu0 %v406
    %1302 = vmatprep.subr.mxu0 %v410
    %1303 = vmatpush1.msra.mxu0 %v409
    %1304 = vmatprep.subr.mxu0 %v413
    %1305 = vmatpush1.msra.mxu0 %v412
    %1306 = vmatprep.subr.mxu0 %v416
    %1307 = vmatpush1.msra.mxu0 %v415
    %1308 = vmatprep.subr.mxu0 %v419
    %1309 = vmatpush1.msra.mxu0 %v418
    %1310 = vmatprep.subr.mxu0 %v422
    %1311 = vmatpush1.msra.mxu0 %v421
    %1312 = vmatprep.subr.mxu0 %v425
    %1313 = vmatpush1.msra.mxu0 %v424
    %1314 = vmatprep.subr.mxu0 %v428
    %1315 = vmatpush1.msra.mxu0 %v427
    %1316 = vmatprep.subr.mxu0 %v431
    %1317 = vmatpush1.msra.mxu0 %v430
    %1318 = vmatprep.subr.mxu0 %v434
    %1319 = vmatpush1.msra.mxu0 %v433
    %1320 = vmatprep.subr.mxu0 %v437
    %1321 = vmatpush1.msra.mxu0 %v436
    %1322 = vmatprep.subr.mxu0 %v440
    %1323 = vmatpush1.msra.mxu0 %v439
    %1324 = vmatprep.subr.mxu0 %v443
    %1325 = vmatpush1.msra.mxu0 %v442
    %1326 = vmatprep.subr.mxu0 0.0
    %1327 = vmatpush1.msra.mxu0 0.0
    %1328 = vmatprep.subr.mxu0 0.0
    %1329 = vmatpush1.msra.mxu0 0.0
    %1330 = vmatprep.subr.mxu0 0.0
    %1331 = vmatpush1.msra.mxu0 0.0
    %1332 = vmatprep.subr.mxu0 0.0
    %1333 = vmatpush1.msra.mxu0 0.0
    %1334 = vmatprep.subr.mxu0 0.0
    %1335 = vmatpush1.msra.mxu0 0.0
    %1336 = vmatprep.subr.mxu0 0.0
    %1337 = vmatpush1.msra.mxu0 0.0
    %1338 = vmatprep.subr.mxu0 0.0
    %1339 = vmatpush1.msra.mxu0 0.0
    %1340 = vmatprep.subr.mxu0 0.0
    %1341 = vmatpush1.msra.mxu0 0.0
    %1342 = vmatprep.subr.mxu0 0.0
    %1343 = vmatpush1.msra.mxu0 0.0
    %1344 = vmatprep.subr.mxu0 0.0
    %1345 = vmatpush1.msra.mxu0 0.0
    %1346 = vmatprep.subr.mxu0 0.0
    %1347 = vmatpush1.msra.mxu0 0.0
    %1348 = vmatprep.subr.mxu0 0.0
    %1349 = vmatpush1.msra.mxu0 0.0
    %1350 = vmatprep.subr.mxu0 0.0
    %1351 = vmatpush1.msra.mxu0 0.0
    %1352 = vmatprep.subr.mxu0 0.0
    %1353 = vmatpush1.msra.mxu0 0.0
    %1354 = vmatprep.subr.mxu0 0.0
    %1355 = vmatpush1.msra.mxu0 0.0
    %1356 = vmatprep.subr.mxu0 0.0
    %1357 = vmatpush1.msra.mxu0 0.0
    %1358 = vmatprep.mubr.f32.mxu0 0.0
    %1359 = vmatmul.mubr.f32.gmra.mrb[0].mxu0 %v1287
    %v1360 = vpop.f32.mrb[0].mxu0
    %v1361 = vadd.f32 0.0, %v1360
    %v1362 = vpop.f32.mrb[0].mxu0
    %v1363 = vadd.f32 0.0, %v1362
    %1364 = vdwg.mxu0
    %1365 = vmatprep.subr.mxu0 0.0
    %1366 = vmatpush1.msra.mxu0 %v399
    %1367 = vmatprep.subr.mxu0 0.0
    %1368 = vmatpush1.msra.mxu0 %v402
    %1369 = vmatprep.subr.mxu0 0.0
    %1370 = vmatpush1.msra.mxu0 %v405
    %1371 = vmatprep.subr.mxu0 0.0
    %1372 = vmatpush1.msra.mxu0 %v408
    %1373 = vmatprep.subr.mxu0 0.0
    %1374 = vmatpush1.msra.mxu0 %v411
    %1375 = vmatprep.subr.mxu0 0.0
    %1376 = vmatpush1.msra.mxu0 %v414
    %1377 = vmatprep.subr.mxu0 0.0
    %1378 = vmatpush1.msra.mxu0 %v417
    %1379 = vmatprep.subr.mxu0 0.0
    %1380 = vmatpush1.msra.mxu0 %v420
    %1381 = vmatprep.subr.mxu0 0.0
    %1382 = vmatpush1.msra.mxu0 %v423
    %1383 = vmatprep.subr.mxu0 0.0
    %1384 = vmatpush1.msra.mxu0 %v426
    %1385 = vmatprep.subr.mxu0 0.0
    %1386 = vmatpush1.msra.mxu0 %v429
    %1387 = vmatprep.subr.mxu0 0.0
    %1388 = vmatpush1.msra.mxu0 %v432
    %1389 = vmatprep.subr.mxu0 0.0
    %1390 = vmatpush1.msra.mxu0 %v435
    %1391 = vmatprep.subr.mxu0 0.0
    %1392 = vmatpush1.msra.mxu0 %v438
    %1393 = vmatprep.subr.mxu0 0.0
    %1394 = vmatpush1.msra.mxu0 %v441
    %1395 = vmatprep.subr.mxu0 0.0
    %1396 = vmatpush1.msra.mxu0 %v444
    %1397 = vmatprep.subr.mxu0 0.0
    %1398 = vmatpush1.msra.mxu0 0.0
    %1399 = vmatprep.subr.mxu0 0.0
    %1400 = vmatpush1.msra.mxu0 0.0
    %1401 = vmatprep.subr.mxu0 0.0
    %1402 = vmatpush1.msra.mxu0 0.0
    %1403 = vmatprep.subr.mxu0 0.0
    %1404 = vmatpush1.msra.mxu0 0.0
    %1405 = vmatprep.subr.mxu0 0.0
    %1406 = vmatpush1.msra.mxu0 0.0
    %1407 = vmatprep.subr.mxu0 0.0
    %1408 = vmatpush1.msra.mxu0 0.0
    %1409 = vmatprep.subr.mxu0 0.0
    %1410 = vmatpush1.msra.mxu0 0.0
    %1411 = vmatprep.subr.mxu0 0.0
    %1412 = vmatpush1.msra.mxu0 0.0
    %1413 = vmatprep.subr.mxu0 0.0
    %1414 = vmatpush1.msra.mxu0 0.0
    %1415 = vmatprep.subr.mxu0 0.0
    %1416 = vmatpush1.msra.mxu0 0.0
    %1417 = vmatprep.subr.mxu0 0.0
    %1418 = vmatpush1.msra.mxu0 0.0
    %1419 = vmatprep.subr.mxu0 0.0
    %1420 = vmatpush1.msra.mxu0 0.0
    %1421 = vmatprep.subr.mxu0 0.0
    %1422 = vmatpush1.msra.mxu0 0.0
    %1423 = vmatprep.subr.mxu0 0.0
    %1424 = vmatpush1.msra.mxu0 0.0
    %1425 = vmatprep.subr.mxu0 0.0
    %1426 = vmatpush1.msra.mxu0 0.0
    %1427 = vmatprep.subr.mxu0 0.0
    %1428 = vmatpush1.msra.mxu0 0.0
    %1429 = vmatprep.mubr.f32.mxu0 0.0
    %1430 = vmatmul.mubr.f32.gmra.mrb[0].mxu0 %v1287
    %v1431 = vpop.f32.mrb[0].mxu0
    %v1432 = vadd.f32 0.0, %v1431
    %v1433 = vpop.f32.mrb[0].mxu0
    %1434 = vdwg.mxu0
    %v1435 = vadd.f32 %v1291, %v1361
    %v1436 = vxor.u32 %v1435, 2147483648
    %v1437 = vmul.f32 %v1436, 1.442695
    %v1438 = vpow.pop %v1437
    %v1439 = vadd.f32 %v1438, 1.0
    %v1440 = vrcp.pop %v1439
    %v1441 = vmul.f32 1.0, %v1440
    %v1442 = vadd.f32 %v1292, %v1363
    %v1443 = vxor.u32 %v1442, 2147483648
    %v1444 = vmul.f32 %v1443, 1.442695
    %v1445 = vpow.pop %v1444
    %v1446 = vadd.f32 %v1445, 1.0
    %v1447 = vrcp.pop %v1446
    %v1448 = vmul.f32 1.0, %v1447
    %v1449 = vadd.f32 %v1432, %v450
    %v1450 = vmul.f32 %v1441, %v1449
    %v1451 = vadd.f32 %v1293, %v1450
    %v1452 = vtanh.pop %v1451
    %v1453 = vsub.f32 %v1287, %v1452
    %v1454 = vmul.f32 %v1448, %v1453
    %v1455 = vadd.f32 %v1452, %v1454
    %s1456 = scalar_lea.vmem [#allocation2], 40
    %1457 = vst [vmem:[%s1456] sm:$0xff] %v1455
    %s1458 = scalar_lea.vmem [#allocation3], 144
    %v1459 = vld [vmem:[%s1458] sm:$0xff]
    %v1460 = vld [vmem:[%s1458 + $0x8] sm:$0xff]
    %v1461 = vld [vmem:[%s1458 + $0x10] sm:$0xff]
    %1462 = vmatprep.subr.mxu0 %v398
    %1463 = vmatpush1.msra.mxu0 %v397
    %1464 = vmatprep.subr.mxu0 %v401
    %1465 = vmatpush1.msra.mxu0 %v400
    %1466 = vmatprep.subr.mxu0 %v404
    %1467 = vmatpush1.msra.mxu0 %v403
    %1468 = vmatprep.subr.mxu0 %v407
    %1469 = vmatpush1.msra.mxu0 %v406
    %1470 = vmatprep.subr.mxu0 %v410
    %1471 = vmatpush1.msra.mxu0 %v409
    %1472 = vmatprep.subr.mxu0 %v413
    %1473 = vmatpush1.msra.mxu0 %v412
    %1474 = vmatprep.subr.mxu0 %v416
    %1475 = vmatpush1.msra.mxu0 %v415
    %1476 = vmatprep.subr.mxu0 %v419
    %1477 = vmatpush1.msra.mxu0 %v418
    %1478 = vmatprep.subr.mxu0 %v422
    %1479 = vmatpush1.msra.mxu0 %v421
    %1480 = vmatprep.subr.mxu0 %v425
    %1481 = vmatpush1.msra.mxu0 %v424
    %1482 = vmatprep.subr.mxu0 %v428
    %1483 = vmatpush1.msra.mxu0 %v427
    %1484 = vmatprep.subr.mxu0 %v431
    %1485 = vmatpush1.msra.mxu0 %v430
    %1486 = vmatprep.subr.mxu0 %v434
    %1487 = vmatpush1.msra.mxu0 %v433
    %1488 = vmatprep.subr.mxu0 %v437
    %1489 = vmatpush1.msra.mxu0 %v436
    %1490 = vmatprep.subr.mxu0 %v440
    %1491 = vmatpush1.msra.mxu0 %v439
    %1492 = vmatprep.subr.mxu0 %v443
    %1493 = vmatpush1.msra.mxu0 %v442
    %1494 = vmatprep.subr.mxu0 0.0
    %1495 = vmatpush1.msra.mxu0 0.0
    %1496 = vmatprep.subr.mxu0 0.0
    %1497 = vmatpush1.msra.mxu0 0.0
    %1498 = vmatprep.subr.mxu0 0.0
    %1499 = vmatpush1.msra.mxu0 0.0
    %1500 = vmatprep.subr.mxu0 0.0
    %1501 = vmatpush1.msra.mxu0 0.0
    %1502 = vmatprep.subr.mxu0 0.0
    %1503 = vmatpush1.msra.mxu0 0.0
    %1504 = vmatprep.subr.mxu0 0.0
    %1505 = vmatpush1.msra.mxu0 0.0
    %1506 = vmatprep.subr.mxu0 0.0
    %1507 = vmatpush1.msra.mxu0 0.0
    %1508 = vmatprep.subr.mxu0 0.0
    %1509 = vmatpush1.msra.mxu0 0.0
    %1510 = vmatprep.subr.mxu0 0.0
    %1511 = vmatpush1.msra.mxu0 0.0
    %1512 = vmatprep.subr.mxu0 0.0
    %1513 = vmatpush1.msra.mxu0 0.0
    %1514 = vmatprep.subr.mxu0 0.0
    %1515 = vmatpush1.msra.mxu0 0.0
    %1516 = vmatprep.subr.mxu0 0.0
    %1517 = vmatpush1.msra.mxu0 0.0
    %1518 = vmatprep.subr.mxu0 0.0
    %1519 = vmatpush1.msra.mxu0 0.0
    %1520 = vmatprep.subr.mxu0 0.0
    %1521 = vmatpush1.msra.mxu0 0.0
    %1522 = vmatprep.subr.mxu0 0.0
    %1523 = vmatpush1.msra.mxu0 0.0
    %1524 = vmatprep.subr.mxu0 0.0
    %1525 = vmatpush1.msra.mxu0 0.0
    %1526 = vmatprep.mubr.f32.mxu0 0.0
    %1527 = vmatmul.mubr.f32.gmra.mrb[0].mxu0 %v1455
    %v1528 = vpop.f32.mrb[0].mxu0
    %v1529 = vadd.f32 0.0, %v1528
    %v1530 = vpop.f32.mrb[0].mxu0
    %v1531 = vadd.f32 0.0, %v1530
    %1532 = vdwg.mxu0
    %1533 = vmatprep.subr.mxu0 0.0
    %1534 = vmatpush1.msra.mxu0 %v399
    %1535 = vmatprep.subr.mxu0 0.0
    %1536 = vmatpush1.msra.mxu0 %v402
    %1537 = vmatprep.subr.mxu0 0.0
    %1538 = vmatpush1.msra.mxu0 %v405
    %1539 = vmatprep.subr.mxu0 0.0
    %1540 = vmatpush1.msra.mxu0 %v408
    %1541 = vmatprep.subr.mxu0 0.0
    %1542 = vmatpush1.msra.mxu0 %v411
    %1543 = vmatprep.subr.mxu0 0.0
    %1544 = vmatpush1.msra.mxu0 %v414
    %1545 = vmatprep.subr.mxu0 0.0
    %1546 = vmatpush1.msra.mxu0 %v417
    %1547 = vmatprep.subr.mxu0 0.0
    %1548 = vmatpush1.msra.mxu0 %v420
    %1549 = vmatprep.subr.mxu0 0.0
    %1550 = vmatpush1.msra.mxu0 %v423
    %1551 = vmatprep.subr.mxu0 0.0
    %1552 = vmatpush1.msra.mxu0 %v426
    %1553 = vmatprep.subr.mxu0 0.0
    %1554 = vmatpush1.msra.mxu0 %v429
    %1555 = vmatprep.subr.mxu0 0.0
    %1556 = vmatpush1.msra.mxu0 %v432
    %1557 = vmatprep.subr.mxu0 0.0
    %1558 = vmatpush1.msra.mxu0 %v435
    %1559 = vmatprep.subr.mxu0 0.0
    %1560 = vmatpush1.msra.mxu0 %v438
    %1561 = vmatprep.subr.mxu0 0.0
    %1562 = vmatpush1.msra.mxu0 %v441
    %1563 = vmatprep.subr.mxu0 0.0
    %1564 = vmatpush1.msra.mxu0 %v444
    %1565 = vmatprep.subr.mxu0 0.0
    %1566 = vmatpush1.msra.mxu0 0.0
    %1567 = vmatprep.subr.mxu0 0.0
    %1568 = vmatpush1.msra.mxu0 0.0
    %1569 = vmatprep.subr.mxu0 0.0
    %1570 = vmatpush1.msra.mxu0 0.0
    %1571 = vmatprep.subr.mxu0 0.0
    %1572 = vmatpush1.msra.mxu0 0.0
    %1573 = vmatprep.subr.mxu0 0.0
    %1574 = vmatpush1.msra.mxu0 0.0
    %1575 = vmatprep.subr.mxu0 0.0
    %1576 = vmatpush1.msra.mxu0 0.0
    %1577 = vmatprep.subr.mxu0 0.0
    %1578 = vmatpush1.msra.mxu0 0.0
    %1579 = vmatprep.subr.mxu0 0.0
    %1580 = vmatpush1.msra.mxu0 0.0
    %1581 = vmatprep.subr.mxu0 0.0
    %1582 = vmatpush1.msra.mxu0 0.0
    %1583 = vmatprep.subr.mxu0 0.0
    %1584 = vmatpush1.msra.mxu0 0.0
    %1585 = vmatprep.subr.mxu0 0.0
    %1586 = vmatpush1.msra.mxu0 0.0
    %1587 = vmatprep.subr.mxu0 0.0
    %1588 = vmatpush1.msra.mxu0 0.0
    %1589 = vmatprep.subr.mxu0 0.0
    %1590 = vmatpush1.msra.mxu0 0.0
    %1591 = vmatprep.subr.mxu0 0.0
    %1592 = vmatpush1.msra.mxu0 0.0
    %1593 = vmatprep.subr.mxu0 0.0
    %1594 = vmatpush1.msra.mxu0 0.0
    %1595 = vmatprep.subr.mxu0 0.0
    %1596 = vmatpush1.msra.mxu0 0.0
    %1597 = vmatprep.mubr.f32.mxu0 0.0
    %1598 = vmatmul.mubr.f32.gmra.mrb[0].mxu0 %v1455
    %v1599 = vpop.f32.mrb[0].mxu0
    %v1600 = vadd.f32 0.0, %v1599
    %v1601 = vpop.f32.mrb[0].mxu0
    %1602 = vdwg.mxu0
    %v1603 = vadd.f32 %v1459, %v1529
    %v1604 = vxor.u32 %v1603, 2147483648
    %v1605 = vmul.f32 %v1604, 1.442695
    %v1606 = vpow.pop %v1605
    %v1607 = vadd.f32 %v1606, 1.0
    %v1608 = vrcp.pop %v1607
    %v1609 = vmul.f32 1.0, %v1608
    %v1610 = vadd.f32 %v1460, %v1531
    %v1611 = vxor.u32 %v1610, 2147483648
    %v1612 = vmul.f32 %v1611, 1.442695
    %v1613 = vpow.pop %v1612
    %v1614 = vadd.f32 %v1613, 1.0
    %v1615 = vrcp.pop %v1614
    %v1616 = vmul.f32 1.0, %v1615
    %v1617 = vadd.f32 %v1600, %v450
    %v1618 = vmul.f32 %v1609, %v1617
    %v1619 = vadd.f32 %v1461, %v1618
    %v1620 = vtanh.pop %v1619
    %v1621 = vsub.f32 %v1455, %v1620
    %v1622 = vmul.f32 %v1616, %v1621
    %v1623 = vadd.f32 %v1620, %v1622
    %s1624 = scalar_lea.vmem [#allocation2], 48
    %1625 = vst [vmem:[%s1624] sm:$0xff] %v1623
    %s1626 = scalar_lea.vmem [#allocation3], 168
    %v1627 = vld [vmem:[%s1626] sm:$0xff]
    %v1628 = vld [vmem:[%s1626 + $0x8] sm:$0xff]
    %v1629 = vld [vmem:[%s1626 + $0x10] sm:$0xff]
    %1630 = vmatprep.subr.mxu0 %v398
    %1631 = vmatpush1.msra.mxu0 %v397
    %1632 = vmatprep.subr.mxu0 %v401
    %1633 = vmatpush1.msra.mxu0 %v400
    %1634 = vmatprep.subr.mxu0 %v404
    %1635 = vmatpush1.msra.mxu0 %v403
    %1636 = vmatprep.subr.mxu0 %v407
    %1637 = vmatpush1.msra.mxu0 %v406
    %1638 = vmatprep.subr.mxu0 %v410
    %1639 = vmatpush1.msra.mxu0 %v409
    %1640 = vmatprep.subr.mxu0 %v413
    %1641 = vmatpush1.msra.mxu0 %v412
    %1642 = vmatprep.subr.mxu0 %v416
    %1643 = vmatpush1.msra.mxu0 %v415
    %1644 = vmatprep.subr.mxu0 %v419
    %1645 = vmatpush1.msra.mxu0 %v418
    %1646 = vmatprep.subr.mxu0 %v422
    %1647 = vmatpush1.msra.mxu0 %v421
    %1648 = vmatprep.subr.mxu0 %v425
    %1649 = vmatpush1.msra.mxu0 %v424
    %1650 = vmatprep.subr.mxu0 %v428
    %1651 = vmatpush1.msra.mxu0 %v427
    %1652 = vmatprep.subr.mxu0 %v431
    %1653 = vmatpush1.msra.mxu0 %v430
    %1654 = vmatprep.subr.mxu0 %v434
    %1655 = vmatpush1.msra.mxu0 %v433
    %1656 = vmatprep.subr.mxu0 %v437
    %1657 = vmatpush1.msra.mxu0 %v436
    %1658 = vmatprep.subr.mxu0 %v440
    %1659 = vmatpush1.msra.mxu0 %v439
    %1660 = vmatprep.subr.mxu0 %v443
    %1661 = vmatpush1.msra.mxu0 %v442
    %1662 = vmatprep.subr.mxu0 0.0
    %1663 = vmatpush1.msra.mxu0 0.0
    %1664 = vmatprep.subr.mxu0 0.0
    %1665 = vmatpush1.msra.mxu0 0.0
    %1666 = vmatprep.subr.mxu0 0.0
    %1667 = vmatpush1.msra.mxu0 0.0
    %1668 = vmatprep.subr.mxu0 0.0
    %1669 = vmatpush1.msra.mxu0 0.0
    %1670 = vmatprep.subr.mxu0 0.0
    %1671 = vmatpush1.msra.mxu0 0.0
    %1672 = vmatprep.subr.mxu0 0.0
    %1673 = vmatpush1.msra.mxu0 0.0
    %1674 = vmatprep.subr.mxu0 0.0
    %1675 = vmatpush1.msra.mxu0 0.0
    %1676 = vmatprep.subr.mxu0 0.0
    %1677 = vmatpush1.msra.mxu0 0.0
    %1678 = vmatprep.subr.mxu0 0.0
    %1679 = vmatpush1.msra.mxu0 0.0
    %1680 = vmatprep.subr.mxu0 0.0
    %1681 = vmatpush1.msra.mxu0 0.0
    %1682 = vmatprep.subr.mxu0 0.0
    %1683 = vmatpush1.msra.mxu0 0.0
    %1684 = vmatprep.subr.mxu0 0.0
    %1685 = vmatpush1.msra.mxu0 0.0
    %1686 = vmatprep.subr.mxu0 0.0
    %1687 = vmatpush1.msra.mxu0 0.0
    %1688 = vmatprep.subr.mxu0 0.0
    %1689 = vmatpush1.msra.mxu0 0.0
    %1690 = vmatprep.subr.mxu0 0.0
    %1691 = vmatpush1.msra.mxu0 0.0
    %1692 = vmatprep.subr.mxu0 0.0
    %1693 = vmatpush1.msra.mxu0 0.0
    %1694 = vmatprep.mubr.f32.mxu0 0.0
    %1695 = vmatmul.mubr.f32.gmra.mrb[0].mxu0 %v1623
    %v1696 = vpop.f32.mrb[0].mxu0
    %v1697 = vadd.f32 0.0, %v1696
    %v1698 = vpop.f32.mrb[0].mxu0
    %v1699 = vadd.f32 0.0, %v1698
    %1700 = vdwg.mxu0
    %1701 = vmatprep.subr.mxu0 0.0
    %1702 = vmatpush1.msra.mxu0 %v399
    %1703 = vmatprep.subr.mxu0 0.0
    %1704 = vmatpush1.msra.mxu0 %v402
    %1705 = vmatprep.subr.mxu0 0.0
    %1706 = vmatpush1.msra.mxu0 %v405
    %1707 = vmatprep.subr.mxu0 0.0
    %1708 = vmatpush1.msra.mxu0 %v408
    %1709 = vmatprep.subr.mxu0 0.0
    %1710 = vmatpush1.msra.mxu0 %v411
    %1711 = vmatprep.subr.mxu0 0.0
    %1712 = vmatpush1.msra.mxu0 %v414
    %1713 = vmatprep.subr.mxu0 0.0
    %1714 = vmatpush1.msra.mxu0 %v417
    %1715 = vmatprep.subr.mxu0 0.0
    %1716 = vmatpush1.msra.mxu0 %v420
    %1717 = vmatprep.subr.mxu0 0.0
    %1718 = vmatpush1.msra.mxu0 %v423
    %1719 = vmatprep.subr.mxu0 0.0
    %1720 = vmatpush1.msra.mxu0 %v426
    %1721 = vmatprep.subr.mxu0 0.0
    %1722 = vmatpush1.msra.mxu0 %v429
    %1723 = vmatprep.subr.mxu0 0.0
    %1724 = vmatpush1.msra.mxu0 %v432
    %1725 = vmatprep.subr.mxu0 0.0
    %1726 = vmatpush1.msra.mxu0 %v435
    %1727 = vmatprep.subr.mxu0 0.0
    %1728 = vmatpush1.msra.mxu0 %v438
    %1729 = vmatprep.subr.mxu0 0.0
    %1730 = vmatpush1.msra.mxu0 %v441
    %1731 = vmatprep.subr.mxu0 0.0
    %1732 = vmatpush1.msra.mxu0 %v444
    %1733 = vmatprep.subr.mxu0 0.0
    %1734 = vmatpush1.msra.mxu0 0.0
    %1735 = vmatprep.subr.mxu0 0.0
    %1736 = vmatpush1.msra.mxu0 0.0
    %1737 = vmatprep.subr.mxu0 0.0
    %1738 = vmatpush1.msra.mxu0 0.0
    %1739 = vmatprep.subr.mxu0 0.0
    %1740 = vmatpush1.msra.mxu0 0.0
    %1741 = vmatprep.subr.mxu0 0.0
    %1742 = vmatpush1.msra.mxu0 0.0
    %1743 = vmatprep.subr.mxu0 0.0
    %1744 = vmatpush1.msra.mxu0 0.0
    %1745 = vmatprep.subr.mxu0 0.0
    %1746 = vmatpush1.msra.mxu0 0.0
    %1747 = vmatprep.subr.mxu0 0.0
    %1748 = vmatpush1.msra.mxu0 0.0
    %1749 = vmatprep.subr.mxu0 0.0
    %1750 = vmatpush1.msra.mxu0 0.0
    %1751 = vmatprep.subr.mxu0 0.0
    %1752 = vmatpush1.msra.mxu0 0.0
    %1753 = vmatprep.subr.mxu0 0.0
    %1754 = vmatpush1.msra.mxu0 0.0
    %1755 = vmatprep.subr.mxu0 0.0
    %1756 = vmatpush1.msra.mxu0 0.0
    %1757 = vmatprep.subr.mxu0 0.0
    %1758 = vmatpush1.msra.mxu0 0.0
    %1759 = vmatprep.subr.mxu0 0.0
    %1760 = vmatpush1.msra.mxu0 0.0
    %1761 = vmatprep.subr.mxu0 0.0
    %1762 = vmatpush1.msra.mxu0 0.0
    %1763 = vmatprep.subr.mxu0 0.0
    %1764 = vmatpush1.msra.mxu0 0.0
    %1765 = vmatprep.mubr.f32.mxu0 0.0
    %1766 = vmatmul.mubr.f32.gmra.mrb[0].mxu0 %v1623
    %v1767 = vpop.f32.mrb[0].mxu0
    %v1768 = vadd.f32 0.0, %v1767
    %v1769 = vpop.f32.mrb[0].mxu0
    %1770 = vdwg.mxu0
    %v1771 = vadd.f32 %v1627, %v1697
    %v1772 = vxor.u32 %v1771, 2147483648
    %v1773 = vmul.f32 %v1772, 1.442695
    %v1774 = vpow.pop %v1773
    %v1775 = vadd.f32 %v1774, 1.0
    %v1776 = vrcp.pop %v1775
    %v1777 = vmul.f32 1.0, %v1776
    %v1778 = vadd.f32 %v1628, %v1699
    %v1779 = vxor.u32 %v1778, 2147483648
    %v1780 = vmul.f32 %v1779, 1.442695
    %v1781 = vpow.pop %v1780
    %v1782 = vadd.f32 %v1781, 1.0
    %v1783 = vrcp.pop %v1782
    %v1784 = vmul.f32 1.0, %v1783
    %v1785 = vadd.f32 %v1768, %v450
    %v1786 = vmul.f32 %v1777, %v1785
    %v1787 = vadd.f32 %v1629, %v1786
    %v1788 = vtanh.pop %v1787
    %v1789 = vsub.f32 %v1623, %v1788
    %v1790 = vmul.f32 %v1784, %v1789
    %v1791 = vadd.f32 %v1788, %v1790
    %s1792 = scalar_lea.vmem [#allocation2], 56
    %1793 = vst [vmem:[%s1792] sm:$0xff] %v1791
    %v1794 = vld [vmem:[#allocation2] sm:$0xff]
    %v1795 = vld [vmem:[#allocation2 + $0x8] sm:$0xff]
    %v1796 = vld [vmem:[#allocation2 + $0x10] sm:$0xff]
    %v1797 = vld [vmem:[#allocation2 + $0x18] sm:$0xff]
    %v1798 = vld [vmem:[#allocation2 + $0x20] sm:$0xff]
    %v1799 = vld [vmem:[#allocation2 + $0x28] sm:$0xff]
    %v1800 = vld [vmem:[#allocation2 + $0x30] sm:$0xff]
    %v1801 = vld [vmem:[#allocation2 + $0x38] sm:$0xff]
    %s1802 = scalar_lea.vmem [#allocation7], 384
    %v1803 = vld [vmem:[%s1802] sm:$0xff]
    %v1804 = vld [vmem:[%s1802 + $0x8] sm:$0xff]
    %v1805 = vld [vmem:[%s1802 + $0x10] sm:$0xff]
    %v1806 = vld [vmem:[%s1802 + $0x18] sm:$0xff]
    %v1807 = vld [vmem:[%s1802 + $0x20] sm:$0xff]
    %v1808 = vld [vmem:[%s1802 + $0x28] sm:$0xff]
    %v1809 = vld [vmem:[%s1802 + $0x30] sm:$0xff]
    %v1810 = vld [vmem:[%s1802 + $0x38] sm:$0xff]
    %v1811 = vld [vmem:[%s1802 + $0x40] sm:$0xff]
    %v1812 = vld [vmem:[%s1802 + $0x48] sm:$0xff]
    %v1813 = vld [vmem:[%s1802 + $0x50] sm:$0xff]
    %v1814 = vld [vmem:[%s1802 + $0x58] sm:$0xff]
    %v1815 = vld [vmem:[%s1802 + $0x60] sm:$0xff]
    %v1816 = vld [vmem:[%s1802 + $0x68] sm:$0xff]
    %v1817 = vld [vmem:[%s1802 + $0x70] sm:$0xff]
    %v1818 = vld [vmem:[%s1802 + $0x78] sm:$0xff]
    %v1819 = vld [vmem:[%s1802 + $0x80] sm:$0xff]
    %v1820 = vld [vmem:[%s1802 + $0x88] sm:$0xff]
    %v1821 = vld [vmem:[%s1802 + $0x90] sm:$0xff]
    %v1822 = vld [vmem:[%s1802 + $0x98] sm:$0xff]
    %v1823 = vld [vmem:[%s1802 + $0xa0] sm:$0xff]
    %v1824 = vld [vmem:[%s1802 + $0xa8] sm:$0xff]
    %v1825 = vld [vmem:[%s1802 + $0xb0] sm:$0xff]
    %v1826 = vld [vmem:[%s1802 + $0xb8] sm:$0xff]
    %v1827 = vld [vmem:[%s1802 + $0xc0] sm:$0xff]
    %v1828 = vld [vmem:[%s1802 + $0xc8] sm:$0xff]
    %v1829 = vld [vmem:[%s1802 + $0xd0] sm:$0xff]
    %v1830 = vld [vmem:[%s1802 + $0xd8] sm:$0xff]
    %v1831 = vld [vmem:[%s1802 + $0xe0] sm:$0xff]
    %v1832 = vld [vmem:[%s1802 + $0xe8] sm:$0xff]
    %v1833 = vld [vmem:[%s1802 + $0xf0] sm:$0xff]
    %v1834 = vld [vmem:[%s1802 + $0xf8] sm:$0xff]
    %v1835 = vld [vmem:[%s1802 + $0x100] sm:$0xff]
    %v1836 = vld [vmem:[%s1802 + $0x108] sm:$0xff]
    %v1837 = vld [vmem:[%s1802 + $0x110] sm:$0xff]
    %v1838 = vld [vmem:[%s1802 + $0x118] sm:$0xff]
    %v1839 = vld [vmem:[%s1802 + $0x120] sm:$0xff]
    %v1840 = vld [vmem:[%s1802 + $0x128] sm:$0xff]
    %v1841 = vld [vmem:[%s1802 + $0x130] sm:$0xff]
    %v1842 = vld [vmem:[%s1802 + $0x138] sm:$0xff]
    %v1843 = vld [vmem:[%s1802 + $0x140] sm:$0xff]
    %v1844 = vld [vmem:[%s1802 + $0x148] sm:$0xff]
    %v1845 = vld [vmem:[%s1802 + $0x150] sm:$0xff]
    %v1846 = vld [vmem:[%s1802 + $0x158] sm:$0xff]
    %v1847 = vld [vmem:[%s1802 + $0x160] sm:$0xff]
    %v1848 = vld [vmem:[%s1802 + $0x168] sm:$0xff]
    %v1849 = vld [vmem:[%s1802 + $0x170] sm:$0xff]
    %v1850 = vld [vmem:[%s1802 + $0x178] sm:$0xff]
    %s1851 = scalar_lea.vmem %s3, 3
    %v1852 = vld [vmem:[%s1851] sm:$0x7]
    %v1854 = vlaneseq
    %v1855 = vshrl.u32 %v1854, 7
    %v1856 = vsub.s32 0, %v1855
    %v1857 = vrot.slane %v1852, %v1856
    %v1858 = vlaneseq
    %v1859 = vshrl.u32 %v1858, 7
    %v1860 = vsub.s32 1, %v1859
    %v1861 = vrot.slane %v1852, %v1860
    %v1862 = vlaneseq
    %v1863 = vshrl.u32 %v1862, 7
    %v1864 = vsub.s32 2, %v1863
    %v1865 = vrot.slane %v1852, %v1864
    %1869 = vmatprep.subr.mxu0 %v1804
    %1870 = vmatpush1.msra.mxu0 %v1803
    %1871 = vmatprep.subr.mxu0 %v1807
    %1872 = vmatpush1.msra.mxu0 %v1806
    %1873 = vmatprep.subr.mxu0 %v1810
    %1874 = vmatpush1.msra.mxu0 %v1809
    %1875 = vmatprep.subr.mxu0 %v1813
    %1876 = vmatpush1.msra.mxu0 %v1812
    %1877 = vmatprep.subr.mxu0 %v1816
    %1878 = vmatpush1.msra.mxu0 %v1815
    %1879 = vmatprep.subr.mxu0 %v1819
    %1880 = vmatpush1.msra.mxu0 %v1818
    %1881 = vmatprep.subr.mxu0 %v1822
    %1882 = vmatpush1.msra.mxu0 %v1821
    %1883 = vmatprep.subr.mxu0 %v1825
    %1884 = vmatpush1.msra.mxu0 %v1824
    %1885 = vmatprep.subr.mxu0 %v1828
    %1886 = vmatpush1.msra.mxu0 %v1827
    %1887 = vmatprep.subr.mxu0 %v1831
    %1888 = vmatpush1.msra.mxu0 %v1830
    %1889 = vmatprep.subr.mxu0 %v1834
    %1890 = vmatpush1.msra.mxu0 %v1833
    %1891 = vmatprep.subr.mxu0 %v1837
    %1892 = vmatpush1.msra.mxu0 %v1836
    %1893 = vmatprep.subr.mxu0 %v1840
    %1894 = vmatpush1.msra.mxu0 %v1839
    %1895 = vmatprep.subr.mxu0 %v1843
    %1896 = vmatpush1.msra.mxu0 %v1842
    %1897 = vmatprep.subr.mxu0 %v1846
    %1898 = vmatpush1.msra.mxu0 %v1845
    %1899 = vmatprep.subr.mxu0 %v1849
    %1900 = vmatpush1.msra.mxu0 %v1848
    %1901 = vmatprep.subr.mxu0 0.0
    %1902 = vmatpush1.msra.mxu0 0.0
    %1903 = vmatprep.subr.mxu0 0.0
    %1904 = vmatpush1.msra.mxu0 0.0
    %1905 = vmatprep.subr.mxu0 0.0
    %1906 = vmatpush1.msra.mxu0 0.0
    %1907 = vmatprep.subr.mxu0 0.0
    %1908 = vmatpush1.msra.mxu0 0.0
    %1909 = vmatprep.subr.mxu0 0.0
    %1910 = vmatpush1.msra.mxu0 0.0
    %1911 = vmatprep.subr.mxu0 0.0
    %1912 = vmatpush1.msra.mxu0 0.0
    %1913 = vmatprep.subr.mxu0 0.0
    %1914 = vmatpush1.msra.mxu0 0.0
    %1915 = vmatprep.subr.mxu0 0.0
    %1916 = vmatpush1.msra.mxu0 0.0
    %1917 = vmatprep.subr.mxu0 0.0
    %1918 = vmatpush1.msra.mxu0 0.0
    %1919 = vmatprep.subr.mxu0 0.0
    %1920 = vmatpush1.msra.mxu0 0.0
    %1921 = vmatprep.subr.mxu0 0.0
    %1922 = vmatpush1.msra.mxu0 0.0
    %1923 = vmatprep.subr.mxu0 0.0
    %1924 = vmatpush1.msra.mxu0 0.0
    %1925 = vmatprep.subr.mxu0 0.0
    %1926 = vmatpush1.msra.mxu0 0.0
    %1927 = vmatprep.subr.mxu0 0.0
    %1928 = vmatpush1.msra.mxu0 0.0
    %1929 = vmatprep.subr.mxu0 0.0
    %1930 = vmatpush1.msra.mxu0 0.0
    %1931 = vmatprep.subr.mxu0 0.0
    %1932 = vmatpush1.msra.mxu0 0.0
    %1933 = vmatprep.mubr.f32.mxu0 0.0
    %1934 = vmatmul.mubr.f32.gmra.mrb[0].mxu0 %v1794
    %v1935 = vpop.f32.mrb[0].mxu0
    %v1936 = vadd.f32 %v1857, %v1935
    %v1937 = vpop.f32.mrb[0].mxu0
    %v1938 = vadd.f32 %v1861, %v1937
    %1939 = vmatprep.mubr.f32.mxu0 0.0
    %1940 = vmatmul.mubr.f32.gmra.mrb[0].mxu0 %v1795
    %v1941 = vpop.f32.mrb[0].mxu0
    %v1942 = vadd.f32 %v1857, %v1941
    %v1943 = vpop.f32.mrb[0].mxu0
    %v1944 = vadd.f32 %v1861, %v1943
    %1945 = vmatprep.mubr.f32.mxu0 0.0
    %1946 = vmatmul.mubr.f32.gmra.mrb[0].mxu0 %v1796
    %v1947 = vpop.f32.mrb[0].mxu0
    %v1948 = vadd.f32 %v1857, %v1947
    %v1949 = vpop.f32.mrb[0].mxu0
    %v1950 = vadd.f32 %v1861, %v1949
    %1951 = vmatprep.mubr.f32.mxu0 0.0
    %1952 = vmatmul.mubr.f32.gmra.mrb[0].mxu0 %v1797
    %v1953 = vpop.f32.mrb[0].mxu0
    %v1954 = vadd.f32 %v1857, %v1953
    %v1955 = vpop.f32.mrb[0].mxu0
    %v1956 = vadd.f32 %v1861, %v1955
    %1957 = vmatprep.mubr.f32.mxu0 0.0
    %1958 = vmatmul.mubr.f32.gmra.mrb[0].mxu0 %v1798
    %v1959 = vpop.f32.mrb[0].mxu0
    %v1960 = vadd.f32 %v1857, %v1959
    %v1961 = vpop.f32.mrb[0].mxu0
    %v1962 = vadd.f32 %v1861, %v1961
    %1963 = vmatprep.mubr.f32.mxu0 0.0
    %1964 = vmatmul.mubr.f32.gmra.mrb[0].mxu0 %v1799
    %v1965 = vpop.f32.mrb[0].mxu0
    %v1966 = vadd.f32 %v1857, %v1965
    %v1967 = vpop.f32.mrb[0].mxu0
    %v1968 = vadd.f32 %v1861, %v1967
    %1969 = vmatprep.mubr.f32.mxu0 0.0
    %1970 = vmatmul.mubr.f32.gmra.mrb[0].mxu0 %v1800
    %v1971 = vpop.f32.mrb[0].mxu0
    %v1972 = vadd.f32 %v1857, %v1971
    %v1973 = vpop.f32.mrb[0].mxu0
    %v1974 = vadd.f32 %v1861, %v1973
    %1975 = vmatprep.mubr.f32.mxu0 0.0
    %1976 = vmatmul.mubr.f32.gmra.mrb[0].mxu0 %v1801
    %v1977 = vpop.f32.mrb[0].mxu0
    %v1978 = vadd.f32 %v1857, %v1977
    %v1979 = vpop.f32.mrb[0].mxu0
    %v1980 = vadd.f32 %v1861, %v1979
    %1981 = vdwg.mxu0
    %1982 = vmatprep.subr.mxu0 0.0
    %1983 = vmatpush1.msra.mxu0 %v1805
    %1984 = vmatprep.subr.mxu0 0.0
    %1985 = vmatpush1.msra.mxu0 %v1808
    %1986 = vmatprep.subr.mxu0 0.0
    %1987 = vmatpush1.msra.mxu0 %v1811
    %1988 = vmatprep.subr.mxu0 0.0
    %1989 = vmatpush1.msra.mxu0 %v1814
    %1990 = vmatprep.subr.mxu0 0.0
    %1991 = vmatpush1.msra.mxu0 %v1817
    %1992 = vmatprep.subr.mxu0 0.0
    %1993 = vmatpush1.msra.mxu0 %v1820
    %1994 = vmatprep.subr.mxu0 0.0
    %1995 = vmatpush1.msra.mxu0 %v1823
    %1996 = vmatprep.subr.mxu0 0.0
    %1997 = vmatpush1.msra.mxu0 %v1826
    %1998 = vmatprep.subr.mxu0 0.0
    %1999 = vmatpush1.msra.mxu0 %v1829
    %2000 = vmatprep.subr.mxu0 0.0
    %2001 = vmatpush1.msra.mxu0 %v1832
    %2002 = vmatprep.subr.mxu0 0.0
    %2003 = vmatpush1.msra.mxu0 %v1835
    %2004 = vmatprep.subr.mxu0 0.0
    %2005 = vmatpush1.msra.mxu0 %v1838
    %2006 = vmatprep.subr.mxu0 0.0
    %2007 = vmatpush1.msra.mxu0 %v1841
    %2008 = vmatprep.subr.mxu0 0.0
    %2009 = vmatpush1.msra.mxu0 %v1844
    %2010 = vmatprep.subr.mxu0 0.0
    %2011 = vmatpush1.msra.mxu0 %v1847
    %2012 = vmatprep.subr.mxu0 0.0
    %2013 = vmatpush1.msra.mxu0 %v1850
    %2014 = vmatprep.subr.mxu0 0.0
    %2015 = vmatpush1.msra.mxu0 0.0
    %2016 = vmatprep.subr.mxu0 0.0
    %2017 = vmatpush1.msra.mxu0 0.0
    %2018 = vmatprep.subr.mxu0 0.0
    %2019 = vmatpush1.msra.mxu0 0.0
    %2020 = vmatprep.subr.mxu0 0.0
    %2021 = vmatpush1.msra.mxu0 0.0
    %2022 = vmatprep.subr.mxu0 0.0
    %2023 = vmatpush1.msra.mxu0 0.0
    %2024 = vmatprep.subr.mxu0 0.0
    %2025 = vmatpush1.msra.mxu0 0.0
    %2026 = vmatprep.subr.mxu0 0.0
    %2027 = vmatpush1.msra.mxu0 0.0
    %2028 = vmatprep.subr.mxu0 0.0
    %2029 = vmatpush1.msra.mxu0 0.0
    %2030 = vmatprep.subr.mxu0 0.0
    %2031 = vmatpush1.msra.mxu0 0.0
    %2032 = vmatprep.subr.mxu0 0.0
    %2033 = vmatpush1.msra.mxu0 0.0
    %2034 = vmatprep.subr.mxu0 0.0
    %2035 = vmatpush1.msra.mxu0 0.0
    %2036 = vmatprep.subr.mxu0 0.0
    %2037 = vmatpush1.msra.mxu0 0.0
    %2038 = vmatprep.subr.mxu0 0.0
    %2039 = vmatpush1.msra.mxu0 0.0
    %2040 = vmatprep.subr.mxu0 0.0
    %2041 = vmatpush1.msra.mxu0 0.0
    %2042 = vmatprep.subr.mxu0 0.0
    %2043 = vmatpush1.msra.mxu0 0.0
    %2044 = vmatprep.subr.mxu0 0.0
    %2045 = vmatpush1.msra.mxu0 0.0
    %2046 = vmatprep.mubr.f32.mxu0 0.0
    %2047 = vmatmul.mubr.f32.gmra.mrb[0].mxu0 %v1794
    %v2048 = vpop.f32.mrb[0].mxu0
    %v2049 = vadd.f32 %v1865, %v2048
    %v2050 = vpop.f32.mrb[0].mxu0
    %2051 = vmatprep.mubr.f32.mxu0 0.0
    %2052 = vmatmul.mubr.f32.gmra.mrb[0].mxu0 %v1795
    %v2053 = vpop.f32.mrb[0].mxu0
    %v2054 = vadd.f32 %v1865, %v2053
    %v2055 = vpop.f32.mrb[0].mxu0
    %2056 = vmatprep.mubr.f32.mxu0 0.0
    %2057 = vmatmul.mubr.f32.gmra.mrb[0].mxu0 %v1796
    %v2058 = vpop.f32.mrb[0].mxu0
    %v2059 = vadd.f32 %v1865, %v2058
    %v2060 = vpop.f32.mrb[0].mxu0
    %2061 = vmatprep.mubr.f32.mxu0 0.0
    %2062 = vmatmul.mubr.f32.gmra.mrb[0].mxu0 %v1797
    %v2063 = vpop.f32.mrb[0].mxu0
    %v2064 = vadd.f32 %v1865, %v2063
    %v2065 = vpop.f32.mrb[0].mxu0
    %2066 = vmatprep.mubr.f32.mxu0 0.0
    %2067 = vmatmul.mubr.f32.gmra.mrb[0].mxu0 %v1798
    %v2068 = vpop.f32.mrb[0].mxu0
    %v2069 = vadd.f32 %v1865, %v2068
    %v2070 = vpop.f32.mrb[0].mxu0
    %2071 = vmatprep.mubr.f32.mxu0 0.0
    %2072 = vmatmul.mubr.f32.gmra.mrb[0].mxu0 %v1799
    %v2073 = vpop.f32.mrb[0].mxu0
    %v2074 = vadd.f32 %v1865, %v2073
    %v2075 = vpop.f32.mrb[0].mxu0
    %2076 = vmatprep.mubr.f32.mxu0 0.0
    %2077 = vmatmul.mubr.f32.gmra.mrb[0].mxu0 %v1800
    %v2078 = vpop.f32.mrb[0].mxu0
    %v2079 = vadd.f32 %v1865, %v2078
    %v2080 = vpop.f32.mrb[0].mxu0
    %2081 = vmatprep.mubr.f32.mxu0 0.0
    %2082 = vmatmul.mubr.f32.gmra.mrb[0].mxu0 %v1801
    %v2083 = vpop.f32.mrb[0].mxu0
    %v2084 = vadd.f32 %v1865, %v2083
    %v2085 = vpop.f32.mrb[0].mxu0
    %2086 = vdwg.mxu0
    %2087 = vst [vmem:[#allocation3] sm:$0xff] %v1936
    %2088 = vst [vmem:[#allocation3 + $0x8] sm:$0xff] %v1938
    %2089 = vst [vmem:[#allocation3 + $0x10] sm:$0xff] %v2049
    %2090 = vst [vmem:[#allocation3 + $0x18] sm:$0xff] %v1942
    %2091 = vst [vmem:[#allocation3 + $0x20] sm:$0xff] %v1944
    %2092 = vst [vmem:[#allocation3 + $0x28] sm:$0xff] %v2054
    %2093 = vst [vmem:[#allocation3 + $0x30] sm:$0xff] %v1948
    %2094 = vst [vmem:[#allocation3 + $0x38] sm:$0xff] %v1950
    %2095 = vst [vmem:[#allocation3 + $0x40] sm:$0xff] %v2059
    %2096 = vst [vmem:[#allocation3 + $0x48] sm:$0xff] %v1954
    %2097 = vst [vmem:[#allocation3 + $0x50] sm:$0xff] %v1956
    %2098 = vst [vmem:[#allocation3 + $0x58] sm:$0xff] %v2064
    %2099 = vst [vmem:[#allocation3 + $0x60] sm:$0xff] %v1960
    %2100 = vst [vmem:[#allocation3 + $0x68] sm:$0xff] %v1962
    %2101 = vst [vmem:[#allocation3 + $0x70] sm:$0xff] %v2069
    %2102 = vst [vmem:[#allocation3 + $0x78] sm:$0xff] %v1966
    %2103 = vst [vmem:[#allocation3 + $0x80] sm:$0xff] %v1968
    %2104 = vst [vmem:[#allocation3 + $0x88] sm:$0xff] %v2074
    %2105 = vst [vmem:[#allocation3 + $0x90] sm:$0xff] %v1972
    %2106 = vst [vmem:[#allocation3 + $0x98] sm:$0xff] %v1974
    %2107 = vst [vmem:[#allocation3 + $0xa0] sm:$0xff] %v2079
    %2108 = vst [vmem:[#allocation3 + $0xa8] sm:$0xff] %v1978
    %2109 = vst [vmem:[#allocation3 + $0xb0] sm:$0xff] %v1980
    %2110 = vst [vmem:[#allocation3 + $0xb8] sm:$0xff] %v2084
    %s2111 = scalar_lea.vmem [#allocation9], 384
    %v2112 = vld [vmem:[%s2111] sm:$0xff]
    %v2113 = vld [vmem:[%s2111 + $0x8] sm:$0xff]
    %v2114 = vld [vmem:[%s2111 + $0x10] sm:$0xff]
    %v2115 = vld [vmem:[%s2111 + $0x18] sm:$0xff]
    %v2116 = vld [vmem:[%s2111 + $0x20] sm:$0xff]
    %v2117 = vld [vmem:[%s2111 + $0x28] sm:$0xff]
    %v2118 = vld [vmem:[%s2111 + $0x30] sm:$0xff]
    %v2119 = vld [vmem:[%s2111 + $0x38] sm:$0xff]
    %v2120 = vld [vmem:[%s2111 + $0x40] sm:$0xff]
    %v2121 = vld [vmem:[%s2111 + $0x48] sm:$0xff]
    %v2122 = vld [vmem:[%s2111 + $0x50] sm:$0xff]
    %v2123 = vld [vmem:[%s2111 + $0x58] sm:$0xff]
    %v2124 = vld [vmem:[%s2111 + $0x60] sm:$0xff]
    %v2125 = vld [vmem:[%s2111 + $0x68] sm:$0xff]
    %v2126 = vld [vmem:[%s2111 + $0x70] sm:$0xff]
    %v2127 = vld [vmem:[%s2111 + $0x78] sm:$0xff]
    %v2128 = vld [vmem:[%s2111 + $0x80] sm:$0xff]
    %v2129 = vld [vmem:[%s2111 + $0x88] sm:$0xff]
    %v2130 = vld [vmem:[%s2111 + $0x90] sm:$0xff]
    %v2131 = vld [vmem:[%s2111 + $0x98] sm:$0xff]
    %v2132 = vld [vmem:[%s2111 + $0xa0] sm:$0xff]
    %v2133 = vld [vmem:[%s2111 + $0xa8] sm:$0xff]
    %v2134 = vld [vmem:[%s2111 + $0xb0] sm:$0xff]
    %v2135 = vld [vmem:[%s2111 + $0xb8] sm:$0xff]
    %v2136 = vld [vmem:[%s2111 + $0xc0] sm:$0xff]
    %v2137 = vld [vmem:[%s2111 + $0xc8] sm:$0xff]
    %v2138 = vld [vmem:[%s2111 + $0xd0] sm:$0xff]
    %v2139 = vld [vmem:[%s2111 + $0xd8] sm:$0xff]
    %v2140 = vld [vmem:[%s2111 + $0xe0] sm:$0xff]
    %v2141 = vld [vmem:[%s2111 + $0xe8] sm:$0xff]
    %v2142 = vld [vmem:[%s2111 + $0xf0] sm:$0xff]
    %v2143 = vld [vmem:[%s2111 + $0xf8] sm:$0xff]
    %v2144 = vld [vmem:[%s2111 + $0x100] sm:$0xff]
    %v2145 = vld [vmem:[%s2111 + $0x108] sm:$0xff]
    %v2146 = vld [vmem:[%s2111 + $0x110] sm:$0xff]
    %v2147 = vld [vmem:[%s2111 + $0x118] sm:$0xff]
    %v2148 = vld [vmem:[%s2111 + $0x120] sm:$0xff]
    %v2149 = vld [vmem:[%s2111 + $0x128] sm:$0xff]
    %v2150 = vld [vmem:[%s2111 + $0x130] sm:$0xff]
    %v2151 = vld [vmem:[%s2111 + $0x138] sm:$0xff]
    %v2152 = vld [vmem:[%s2111 + $0x140] sm:$0xff]
    %v2153 = vld [vmem:[%s2111 + $0x148] sm:$0xff]
    %v2154 = vld [vmem:[%s2111 + $0x150] sm:$0xff]
    %v2155 = vld [vmem:[%s2111 + $0x158] sm:$0xff]
    %v2156 = vld [vmem:[%s2111 + $0x160] sm:$0xff]
    %v2157 = vld [vmem:[%s2111 + $0x168] sm:$0xff]
    %v2158 = vld [vmem:[%s2111 + $0x170] sm:$0xff]
    %v2159 = vld [vmem:[%s2111 + $0x178] sm:$0xff]
    %s2160 = scalar_lea.vmem %s4, 1
    %v2161 = vld [vmem:[%s2160] sm:$0x1]
    %v2163 = vlaneseq
    %v2164 = vshrl.u32 %v2163, 7
    %v2165 = vsub.s32 0, %v2164
    %v2166 = vrot.slane %v2161, %v2165
    %v2168 = vld [vmem:[#allocation3] sm:$0xff]
    %v2169 = vld [vmem:[#allocation3 + $0x8] sm:$0xff]
    %v2170 = vld [vmem:[#allocation3 + $0x10] sm:$0xff]
    %2171 = vmatprep.subr.mxu0 %v2113
    %2172 = vmatpush1.msra.mxu0 %v2112
    %2173 = vmatprep.subr.mxu0 %v2116
    %2174 = vmatpush1.msra.mxu0 %v2115
    %2175 = vmatprep.subr.mxu0 %v2119
    %2176 = vmatpush1.msra.mxu0 %v2118
    %2177 = vmatprep.subr.mxu0 %v2122
    %2178 = vmatpush1.msra.mxu0 %v2121
    %2179 = vmatprep.subr.mxu0 %v2125
    %2180 = vmatpush1.msra.mxu0 %v2124
    %2181 = vmatprep.subr.mxu0 %v2128
    %2182 = vmatpush1.msra.mxu0 %v2127
    %2183 = vmatprep.subr.mxu0 %v2131
    %2184 = vmatpush1.msra.mxu0 %v2130
    %2185 = vmatprep.subr.mxu0 %v2134
    %2186 = vmatpush1.msra.mxu0 %v2133
    %2187 = vmatprep.subr.mxu0 %v2137
    %2188 = vmatpush1.msra.mxu0 %v2136
    %2189 = vmatprep.subr.mxu0 %v2140
    %2190 = vmatpush1.msra.mxu0 %v2139
    %2191 = vmatprep.subr.mxu0 %v2143
    %2192 = vmatpush1.msra.mxu0 %v2142
    %2193 = vmatprep.subr.mxu0 %v2146
    %2194 = vmatpush1.msra.mxu0 %v2145
    %2195 = vmatprep.subr.mxu0 %v2149
    %2196 = vmatpush1.msra.mxu0 %v2148
    %2197 = vmatprep.subr.mxu0 %v2152
    %2198 = vmatpush1.msra.mxu0 %v2151
    %2199 = vmatprep.subr.mxu0 %v2155
    %2200 = vmatpush1.msra.mxu0 %v2154
    %2201 = vmatprep.subr.mxu0 %v2158
    %2202 = vmatpush1.msra.mxu0 %v2157
    %2203 = vmatprep.subr.mxu0 0.0
    %2204 = vmatpush1.msra.mxu0 0.0
    %2205 = vmatprep.subr.mxu0 0.0
    %2206 = vmatpush1.msra.mxu0 0.0
    %2207 = vmatprep.subr.mxu0 0.0
    %2208 = vmatpush1.msra.mxu0 0.0
    %2209 = vmatprep.subr.mxu0 0.0
    %2210 = vmatpush1.msra.mxu0 0.0
    %2211 = vmatprep.subr.mxu0 0.0
    %2212 = vmatpush1.msra.mxu0 0.0
    %2213 = vmatprep.subr.mxu0 0.0
    %2214 = vmatpush1.msra.mxu0 0.0
    %2215 = vmatprep.subr.mxu0 0.0
    %2216 = vmatpush1.msra.mxu0 0.0
    %2217 = vmatprep.subr.mxu0 0.0
    %2218 = vmatpush1.msra.mxu0 0.0
    %2219 = vmatprep.subr.mxu0 0.0
    %2220 = vmatpush1.msra.mxu0 0.0
    %2221 = vmatprep.subr.mxu0 0.0
    %2222 = vmatpush1.msra.mxu0 0.0
    %2223 = vmatprep.subr.mxu0 0.0
    %2224 = vmatpush1.msra.mxu0 0.0
    %2225 = vmatprep.subr.mxu0 0.0
    %2226 = vmatpush1.msra.mxu0 0.0
    %2227 = vmatprep.subr.mxu0 0.0
    %2228 = vmatpush1.msra.mxu0 0.0
    %2229 = vmatprep.subr.mxu0 0.0
    %2230 = vmatpush1.msra.mxu0 0.0
    %2231 = vmatprep.subr.mxu0 0.0
    %2232 = vmatpush1.msra.mxu0 0.0
    %2233 = vmatprep.subr.mxu0 0.0
    %2234 = vmatpush1.msra.mxu0 0.0
    %2235 = vmatprep.mubr.f32.mxu0 0.0
    %2236 = vmatmul.mubr.f32.gmra.mrb[0].mxu0 0.0
    %v2237 = vpop.f32.mrb[0].mxu0
    %v2238 = vadd.f32 0.0, %v2237
    %v2239 = vpop.f32.mrb[0].mxu0
    %v2240 = vadd.f32 0.0, %v2239
    %2241 = vdwg.mxu0
    %2242 = vmatprep.subr.mxu0 0.0
    %2243 = vmatpush1.msra.mxu0 %v2114
    %2244 = vmatprep.subr.mxu0 0.0
    %2245 = vmatpush1.msra.mxu0 %v2117
    %2246 = vmatprep.subr.mxu0 0.0
    %2247 = vmatpush1.msra.mxu0 %v2120
    %2248 = vmatprep.subr.mxu0 0.0
    %2249 = vmatpush1.msra.mxu0 %v2123
    %2250 = vmatprep.subr.mxu0 0.0
    %2251 = vmatpush1.msra.mxu0 %v2126
    %2252 = vmatprep.subr.mxu0 0.0
    %2253 = vmatpush1.msra.mxu0 %v2129
    %2254 = vmatprep.subr.mxu0 0.0
    %2255 = vmatpush1.msra.mxu0 %v2132
    %2256 = vmatprep.subr.mxu0 0.0
    %2257 = vmatpush1.msra.mxu0 %v2135
    %2258 = vmatprep.subr.mxu0 0.0
    %2259 = vmatpush1.msra.mxu0 %v2138
    %2260 = vmatprep.subr.mxu0 0.0
    %2261 = vmatpush1.msra.mxu0 %v2141
    %2262 = vmatprep.subr.mxu0 0.0
    %2263 = vmatpush1.msra.mxu0 %v2144
    %2264 = vmatprep.subr.mxu0 0.0
    %2265 = vmatpush1.msra.mxu0 %v2147
    %2266 = vmatprep.subr.mxu0 0.0
    %2267 = vmatpush1.msra.mxu0 %v2150
    %2268 = vmatprep.subr.mxu0 0.0
    %2269 = vmatpush1.msra.mxu0 %v2153
    %2270 = vmatprep.subr.mxu0 0.0
    %2271 = vmatpush1.msra.mxu0 %v2156
    %2272 = vmatprep.subr.mxu0 0.0
    %2273 = vmatpush1.msra.mxu0 %v2159
    %2274 = vmatprep.subr.mxu0 0.0
    %2275 = vmatpush1.msra.mxu0 0.0
    %2276 = vmatprep.subr.mxu0 0.0
    %2277 = vmatpush1.msra.mxu0 0.0
    %2278 = vmatprep.subr.mxu0 0.0
    %2279 = vmatpush1.msra.mxu0 0.0
    %2280 = vmatprep.subr.mxu0 0.0
    %2281 = vmatpush1.msra.mxu0 0.0
    %2282 = vmatprep.subr.mxu0 0.0
    %2283 = vmatpush1.msra.mxu0 0.0
    %2284 = vmatprep.subr.mxu0 0.0
    %2285 = vmatpush1.msra.mxu0 0.0
    %2286 = vmatprep.subr.mxu0 0.0
    %2287 = vmatpush1.msra.mxu0 0.0
    %2288 = vmatprep.subr.mxu0 0.0
    %2289 = vmatpush1.msra.mxu0 0.0
    %2290 = vmatprep.subr.mxu0 0.0
    %2291 = vmatpush1.msra.mxu0 0.0
    %2292 = vmatprep.subr.mxu0 0.0
    %2293 = vmatpush1.msra.mxu0 0.0
    %2294 = vmatprep.subr.mxu0 0.0
    %2295 = vmatpush1.msra.mxu0 0.0
    %2296 = vmatprep.subr.mxu0 0.0
    %2297 = vmatpush1.msra.mxu0 0.0
    %2298 = vmatprep.subr.mxu0 0.0
    %2299 = vmatpush1.msra.mxu0 0.0
    %2300 = vmatprep.subr.mxu0 0.0
    %2301 = vmatpush1.msra.mxu0 0.0
    %2302 = vmatprep.subr.mxu0 0.0
    %2303 = vmatpush1.msra.mxu0 0.0
    %2304 = vmatprep.subr.mxu0 0.0
    %2305 = vmatpush1.msra.mxu0 0.0
    %2306 = vmatprep.mubr.f32.mxu0 0.0
    %2307 = vmatmul.mubr.f32.gmra.mrb[0].mxu0 0.0
    %v2308 = vpop.f32.mrb[0].mxu0
    %v2309 = vadd.f32 0.0, %v2308
    %v2310 = vpop.f32.mrb[0].mxu0
    %2311 = vdwg.mxu0
    %v2312 = vadd.f32 %v2168, %v2238
    %v2313 = vxor.u32 %v2312, 2147483648
    %v2314 = vmul.f32 %v2313, 1.442695
    %v2315 = vpow.pop %v2314
    %v2316 = vadd.f32 %v2315, 1.0
    %v2317 = vrcp.pop %v2316
    %v2318 = vmul.f32 1.0, %v2317
    %v2319 = vadd.f32 %v2169, %v2240
    %v2320 = vxor.u32 %v2319, 2147483648
    %v2321 = vmul.f32 %v2320, 1.442695
    %v2322 = vpow.pop %v2321
    %v2323 = vadd.f32 %v2322, 1.0
    %v2324 = vrcp.pop %v2323
    %v2325 = vmul.f32 1.0, %v2324
    %v2326 = vadd.f32 %v2309, %v2166
    %v2327 = vmul.f32 %v2318, %v2326
    %v2328 = vadd.f32 %v2170, %v2327
    %v2329 = vtanh.pop %v2328
    %v2330 = vsub.f32 0.0, %v2329
    %v2331 = vmul.f32 %v2325, %v2330
    %v2332 = vadd.f32 %v2329, %v2331
    %2333 = vst [vmem:[#allocation2] sm:$0xff] %v2332
    %v2334 = vld [vmem:[%s618] sm:$0xff]
    %v2335 = vld [vmem:[%s618 + $0x8] sm:$0xff]
    %v2336 = vld [vmem:[%s618 + $0x10] sm:$0xff]
    %2337 = vmatprep.subr.mxu0 %v2113
    %2338 = vmatpush1.msra.mxu0 %v2112
    %2339 = vmatprep.subr.mxu0 %v2116
    %2340 = vmatpush1.msra.mxu0 %v2115
    %2341 = vmatprep.subr.mxu0 %v2119
    %2342 = vmatpush1.msra.mxu0 %v2118
    %2343 = vmatprep.subr.mxu0 %v2122
    %2344 = vmatpush1.msra.mxu0 %v2121
    %2345 = vmatprep.subr.mxu0 %v2125
    %2346 = vmatpush1.msra.mxu0 %v2124
    %2347 = vmatprep.subr.mxu0 %v2128
    %2348 = vmatpush1.msra.mxu0 %v2127
    %2349 = vmatprep.subr.mxu0 %v2131
    %2350 = vmatpush1.msra.mxu0 %v2130
    %2351 = vmatprep.subr.mxu0 %v2134
    %2352 = vmatpush1.msra.mxu0 %v2133
    %2353 = vmatprep.subr.mxu0 %v2137
    %2354 = vmatpush1.msra.mxu0 %v2136
    %2355 = vmatprep.subr.mxu0 %v2140
    %2356 = vmatpush1.msra.mxu0 %v2139
    %2357 = vmatprep.subr.mxu0 %v2143
    %2358 = vmatpush1.msra.mxu0 %v2142
    %2359 = vmatprep.subr.mxu0 %v2146
    %2360 = vmatpush1.msra.mxu0 %v2145
    %2361 = vmatprep.subr.mxu0 %v2149
    %2362 = vmatpush1.msra.mxu0 %v2148
    %2363 = vmatprep.subr.mxu0 %v2152
    %2364 = vmatpush1.msra.mxu0 %v2151
    %2365 = vmatprep.subr.mxu0 %v2155
    %2366 = vmatpush1.msra.mxu0 %v2154
    %2367 = vmatprep.subr.mxu0 %v2158
    %2368 = vmatpush1.msra.mxu0 %v2157
    %2369 = vmatprep.subr.mxu0 0.0
    %2370 = vmatpush1.msra.mxu0 0.0
    %2371 = vmatprep.subr.mxu0 0.0
    %2372 = vmatpush1.msra.mxu0 0.0
    %2373 = vmatprep.subr.mxu0 0.0
    %2374 = vmatpush1.msra.mxu0 0.0
    %2375 = vmatprep.subr.mxu0 0.0
    %2376 = vmatpush1.msra.mxu0 0.0
    %2377 = vmatprep.subr.mxu0 0.0
    %2378 = vmatpush1.msra.mxu0 0.0
    %2379 = vmatprep.subr.mxu0 0.0
    %2380 = vmatpush1.msra.mxu0 0.0
    %2381 = vmatprep.subr.mxu0 0.0
    %2382 = vmatpush1.msra.mxu0 0.0
    %2383 = vmatprep.subr.mxu0 0.0
    %2384 = vmatpush1.msra.mxu0 0.0
    %2385 = vmatprep.subr.mxu0 0.0
    %2386 = vmatpush1.msra.mxu0 0.0
    %2387 = vmatprep.subr.mxu0 0.0
    %2388 = vmatpush1.msra.mxu0 0.0
    %2389 = vmatprep.subr.mxu0 0.0
    %2390 = vmatpush1.msra.mxu0 0.0
    %2391 = vmatprep.subr.mxu0 0.0
    %2392 = vmatpush1.msra.mxu0 0.0
    %2393 = vmatprep.subr.mxu0 0.0
    %2394 = vmatpush1.msra.mxu0 0.0
    %2395 = vmatprep.subr.mxu0 0.0
    %2396 = vmatpush1.msra.mxu0 0.0
    %2397 = vmatprep.subr.mxu0 0.0
    %2398 = vmatpush1.msra.mxu0 0.0
    %2399 = vmatprep.subr.mxu0 0.0
    %2400 = vmatpush1.msra.mxu0 0.0
    %2401 = vmatprep.mubr.f32.mxu0 0.0
    %2402 = vmatmul.mubr.f32.gmra.mrb[0].mxu0 %v2332
    %v2403 = vpop.f32.mrb[0].mxu0
    %v2404 = vadd.f32 0.0, %v2403
    %v2405 = vpop.f32.mrb[0].mxu0
    %v2406 = vadd.f32 0.0, %v2405
    %2407 = vdwg.mxu0
    %2408 = vmatprep.subr.mxu0 0.0
    %2409 = vmatpush1.msra.mxu0 %v2114
    %2410 = vmatprep.subr.mxu0 0.0
    %2411 = vmatpush1.msra.mxu0 %v2117
    %2412 = vmatprep.subr.mxu0 0.0
    %2413 = vmatpush1.msra.mxu0 %v2120
    %2414 = vmatprep.subr.mxu0 0.0
    %2415 = vmatpush1.msra.mxu0 %v2123
    %2416 = vmatprep.subr.mxu0 0.0
    %2417 = vmatpush1.msra.mxu0 %v2126
    %2418 = vmatprep.subr.mxu0 0.0
    %2419 = vmatpush1.msra.mxu0 %v2129
    %2420 = vmatprep.subr.mxu0 0.0
    %2421 = vmatpush1.msra.mxu0 %v2132
    %2422 = vmatprep.subr.mxu0 0.0
    %2423 = vmatpush1.msra.mxu0 %v2135
    %2424 = vmatprep.subr.mxu0 0.0
    %2425 = vmatpush1.msra.mxu0 %v2138
    %2426 = vmatprep.subr.mxu0 0.0
    %2427 = vmatpush1.msra.mxu0 %v2141
    %2428 = vmatprep.subr.mxu0 0.0
    %2429 = vmatpush1.msra.mxu0 %v2144
    %2430 = vmatprep.subr.mxu0 0.0
    %2431 = vmatpush1.msra.mxu0 %v2147
    %2432 = vmatprep.subr.mxu0 0.0
    %2433 = vmatpush1.msra.mxu0 %v2150
    %2434 = vmatprep.subr.mxu0 0.0
    %2435 = vmatpush1.msra.mxu0 %v2153
    %2436 = vmatprep.subr.mxu0 0.0
    %2437 = vmatpush1.msra.mxu0 %v2156
    %2438 = vmatprep.subr.mxu0 0.0
    %2439 = vmatpush1.msra.mxu0 %v2159
    %2440 = vmatprep.subr.mxu0 0.0
    %2441 = vmatpush1.msra.mxu0 0.0
    %2442 = vmatprep.subr.mxu0 0.0
    %2443 = vmatpush1.msra.mxu0 0.0
    %2444 = vmatprep.subr.mxu0 0.0
    %2445 = vmatpush1.msra.mxu0 0.0
    %2446 = vmatprep.subr.mxu0 0.0
    %2447 = vmatpush1.msra.mxu0 0.0
    %2448 = vmatprep.subr.mxu0 0.0
    %2449 = vmatpush1.msra.mxu0 0.0
    %2450 = vmatprep.subr.mxu0 0.0
    %2451 = vmatpush1.msra.mxu0 0.0
    %2452 = vmatprep.subr.mxu0 0.0
    %2453 = vmatpush1.msra.mxu0 0.0
    %2454 = vmatprep.subr.mxu0 0.0
    %2455 = vmatpush1.msra.mxu0 0.0
    %2456 = vmatprep.subr.mxu0 0.0
    %2457 = vmatpush1.msra.mxu0 0.0
    %2458 = vmatprep.subr.mxu0 0.0
    %2459 = vmatpush1.msra.mxu0 0.0
    %2460 = vmatprep.subr.mxu0 0.0
    %2461 = vmatpush1.msra.mxu0 0.0
    %2462 = vmatprep.subr.mxu0 0.0
    %2463 = vmatpush1.msra.mxu0 0.0
    %2464 = vmatprep.subr.mxu0 0.0
    %2465 = vmatpush1.msra.mxu0 0.0
    %2466 = vmatprep.subr.mxu0 0.0
    %2467 = vmatpush1.msra.mxu0 0.0
    %2468 = vmatprep.subr.mxu0 0.0
    %2469 = vmatpush1.msra.mxu0 0.0
    %2470 = vmatprep.subr.mxu0 0.0
    %2471 = vmatpush1.msra.mxu0 0.0
    %2472 = vmatprep.mubr.f32.mxu0 0.0
    %2473 = vmatmul.mubr.f32.gmra.mrb[0].mxu0 %v2332
    %v2474 = vpop.f32.mrb[0].mxu0
    %v2475 = vadd.f32 0.0, %v2474
    %v2476 = vpop.f32.mrb[0].mxu0
    %2477 = vdwg.mxu0
    %v2478 = vadd.f32 %v2334, %v2404
    %v2479 = vxor.u32 %v2478, 2147483648
    %v2480 = vmul.f32 %v2479, 1.442695
    %v2481 = vpow.pop %v2480
    %v2482 = vadd.f32 %v2481, 1.0
    %v2483 = vrcp.pop %v2482
    %v2484 = vmul.f32 1.0, %v2483
    %v2485 = vadd.f32 %v2335, %v2406
    %v2486 = vxor.u32 %v2485, 2147483648
    %v2487 = vmul.f32 %v2486, 1.442695
    %v2488 = vpow.pop %v2487
    %v2489 = vadd.f32 %v2488, 1.0
    %v2490 = vrcp.pop %v2489
    %v2491 = vmul.f32 1.0, %v2490
    %v2492 = vadd.f32 %v2475, %v2166
    %v2493 = vmul.f32 %v2484, %v2492
    %v2494 = vadd.f32 %v2336, %v2493
    %v2495 = vtanh.pop %v2494
    %v2496 = vsub.f32 %v2332, %v2495
    %v2497 = vmul.f32 %v2491, %v2496
    %v2498 = vadd.f32 %v2495, %v2497
    %2499 = vst [vmem:[%s784] sm:$0xff] %v2498
    %v2500 = vld [vmem:[%s786] sm:$0xff]
    %v2501 = vld [vmem:[%s786 + $0x8] sm:$0xff]
    %v2502 = vld [vmem:[%s786 + $0x10] sm:$0xff]
    %2503 = vmatprep.subr.mxu0 %v2113
    %2504 = vmatpush1.msra.mxu0 %v2112
    %2505 = vmatprep.subr.mxu0 %v2116
    %2506 = vmatpush1.msra.mxu0 %v2115
    %2507 = vmatprep.subr.mxu0 %v2119
    %2508 = vmatpush1.msra.mxu0 %v2118
    %2509 = vmatprep.subr.mxu0 %v2122
    %2510 = vmatpush1.msra.mxu0 %v2121
    %2511 = vmatprep.subr.mxu0 %v2125
    %2512 = vmatpush1.msra.mxu0 %v2124
    %2513 = vmatprep.subr.mxu0 %v2128
    %2514 = vmatpush1.msra.mxu0 %v2127
    %2515 = vmatprep.subr.mxu0 %v2131
    %2516 = vmatpush1.msra.mxu0 %v2130
    %2517 = vmatprep.subr.mxu0 %v2134
    %2518 = vmatpush1.msra.mxu0 %v2133
    %2519 = vmatprep.subr.mxu0 %v2137
    %2520 = vmatpush1.msra.mxu0 %v2136
    %2521 = vmatprep.subr.mxu0 %v2140
    %2522 = vmatpush1.msra.mxu0 %v2139
    %2523 = vmatprep.subr.mxu0 %v2143
    %2524 = vmatpush1.msra.mxu0 %v2142
    %2525 = vmatprep.subr.mxu0 %v2146
    %2526 = vmatpush1.msra.mxu0 %v2145
    %2527 = vmatprep.subr.mxu0 %v2149
    %2528 = vmatpush1.msra.mxu0 %v2148
    %2529 = vmatprep.subr.mxu0 %v2152
    %2530 = vmatpush1.msra.mxu0 %v2151
    %2531 = vmatprep.subr.mxu0 %v2155
    %2532 = vmatpush1.msra.mxu0 %v2154
    %2533 = vmatprep.subr.mxu0 %v2158
    %2534 = vmatpush1.msra.mxu0 %v2157
    %2535 = vmatprep.subr.mxu0 0.0
    %2536 = vmatpush1.msra.mxu0 0.0
    %2537 = vmatprep.subr.mxu0 0.0
    %2538 = vmatpush1.msra.mxu0 0.0
    %2539 = vmatprep.subr.mxu0 0.0
    %2540 = vmatpush1.msra.mxu0 0.0
    %2541 = vmatprep.subr.mxu0 0.0
    %2542 = vmatpush1.msra.mxu0 0.0
    %2543 = vmatprep.subr.mxu0 0.0
    %2544 = vmatpush1.msra.mxu0 0.0
    %2545 = vmatprep.subr.mxu0 0.0
    %2546 = vmatpush1.msra.mxu0 0.0
    %2547 = vmatprep.subr.mxu0 0.0
    %2548 = vmatpush1.msra.mxu0 0.0
    %2549 = vmatprep.subr.mxu0 0.0
    %2550 = vmatpush1.msra.mxu0 0.0
    %2551 = vmatprep.subr.mxu0 0.0
    %2552 = vmatpush1.msra.mxu0 0.0
    %2553 = vmatprep.subr.mxu0 0.0
    %2554 = vmatpush1.msra.mxu0 0.0
    %2555 = vmatprep.subr.mxu0 0.0
    %2556 = vmatpush1.msra.mxu0 0.0
    %2557 = vmatprep.subr.mxu0 0.0
    %2558 = vmatpush1.msra.mxu0 0.0
    %2559 = vmatprep.subr.mxu0 0.0
    %2560 = vmatpush1.msra.mxu0 0.0
    %2561 = vmatprep.subr.mxu0 0.0
    %2562 = vmatpush1.msra.mxu0 0.0
    %2563 = vmatprep.subr.mxu0 0.0
    %2564 = vmatpush1.msra.mxu0 0.0
    %2565 = vmatprep.subr.mxu0 0.0
    %2566 = vmatpush1.msra.mxu0 0.0
    %2567 = vmatprep.mubr.f32.mxu0 0.0
    %2568 = vmatmul.mubr.f32.gmra.mrb[0].mxu0 %v2498
    %v2569 = vpop.f32.mrb[0].mxu0
    %v2570 = vadd.f32 0.0, %v2569
    %v2571 = vpop.f32.mrb[0].mxu0
    %v2572 = vadd.f32 0.0, %v2571
    %2573 = vdwg.mxu0
    %2574 = vmatprep.subr.mxu0 0.0
    %2575 = vmatpush1.msra.mxu0 %v2114
    %2576 = vmatprep.subr.mxu0 0.0
    %2577 = vmatpush1.msra.mxu0 %v2117
    %2578 = vmatprep.subr.mxu0 0.0
    %2579 = vmatpush1.msra.mxu0 %v2120
    %2580 = vmatprep.subr.mxu0 0.0
    %2581 = vmatpush1.msra.mxu0 %v2123
    %2582 = vmatprep.subr.mxu0 0.0
    %2583 = vmatpush1.msra.mxu0 %v2126
    %2584 = vmatprep.subr.mxu0 0.0
    %2585 = vmatpush1.msra.mxu0 %v2129
    %2586 = vmatprep.subr.mxu0 0.0
    %2587 = vmatpush1.msra.mxu0 %v2132
    %2588 = vmatprep.subr.mxu0 0.0
    %2589 = vmatpush1.msra.mxu0 %v2135
    %2590 = vmatprep.subr.mxu0 0.0
    %2591 = vmatpush1.msra.mxu0 %v2138
    %2592 = vmatprep.subr.mxu0 0.0
    %2593 = vmatpush1.msra.mxu0 %v2141
    %2594 = vmatprep.subr.mxu0 0.0
    %2595 = vmatpush1.msra.mxu0 %v2144
    %2596 = vmatprep.subr.mxu0 0.0
    %2597 = vmatpush1.msra.mxu0 %v2147
    %2598 = vmatprep.subr.mxu0 0.0
    %2599 = vmatpush1.msra.mxu0 %v2150
    %2600 = vmatprep.subr.mxu0 0.0
    %2601 = vmatpush1.msra.mxu0 %v2153
    %2602 = vmatprep.subr.mxu0 0.0
    %2603 = vmatpush1.msra.mxu0 %v2156
    %2604 = vmatprep.subr.mxu0 0.0
    %2605 = vmatpush1.msra.mxu0 %v2159
    %2606 = vmatprep.subr.mxu0 0.0
    %2607 = vmatpush1.msra.mxu0 0.0
    %2608 = vmatprep.subr.mxu0 0.0
    %2609 = vmatpush1.msra.mxu0 0.0
    %2610 = vmatprep.subr.mxu0 0.0
    %2611 = vmatpush1.msra.mxu0 0.0
    %2612 = vmatprep.subr.mxu0 0.0
    %2613 = vmatpush1.msra.mxu0 0.0
    %2614 = vmatprep.subr.mxu0 0.0
    %2615 = vmatpush1.msra.mxu0 0.0
    %2616 = vmatprep.subr.mxu0 0.0
    %2617 = vmatpush1.msra.mxu0 0.0
    %2618 = vmatprep.subr.mxu0 0.0
    %2619 = vmatpush1.msra.mxu0 0.0
    %2620 = vmatprep.subr.mxu0 0.0
    %2621 = vmatpush1.msra.mxu0 0.0
    %2622 = vmatprep.subr.mxu0 0.0
    %2623 = vmatpush1.msra.mxu0 0.0
    %2624 = vmatprep.subr.mxu0 0.0
    %2625 = vmatpush1.msra.mxu0 0.0
    %2626 = vmatprep.subr.mxu0 0.0
    %2627 = vmatpush1.msra.mxu0 0.0
    %2628 = vmatprep.subr.mxu0 0.0
    %2629 = vmatpush1.msra.mxu0 0.0
    %2630 = vmatprep.subr.mxu0 0.0
    %2631 = vmatpush1.msra.mxu0 0.0
    %2632 = vmatprep.subr.mxu0 0.0
    %2633 = vmatpush1.msra.mxu0 0.0
    %2634 = vmatprep.subr.mxu0 0.0
    %2635 = vmatpush1.msra.mxu0 0.0
    %2636 = vmatprep.subr.mxu0 0.0
    %2637 = vmatpush1.msra.mxu0 0.0
    %2638 = vmatprep.mubr.f32.mxu0 0.0
    %2639 = vmatmul.mubr.f32.gmra.mrb[0].mxu0 %v2498
    %v2640 = vpop.f32.mrb[0].mxu0
    %v2641 = vadd.f32 0.0, %v2640
    %v2642 = vpop.f32.mrb[0].mxu0
    %2643 = vdwg.mxu0
    %v2644 = vadd.f32 %v2500, %v2570
    %v2645 = vxor.u32 %v2644, 2147483648
    %v2646 = vmul.f32 %v2645, 1.442695
    %v2647 = vpow.pop %v2646
    %v2648 = vadd.f32 %v2647, 1.0
    %v2649 = vrcp.pop %v2648
    %v2650 = vmul.f32 1.0, %v2649
    %v2651 = vadd.f32 %v2501, %v2572
    %v2652 = vxor.u32 %v2651, 2147483648
    %v2653 = vmul.f32 %v2652, 1.442695
    %v2654 = vpow.pop %v2653
    %v2655 = vadd.f32 %v2654, 1.0
    %v2656 = vrcp.pop %v2655
    %v2657 = vmul.f32 1.0, %v2656
    %v2658 = vadd.f32 %v2641, %v2166
    %v2659 = vmul.f32 %v2650, %v2658
    %v2660 = vadd.f32 %v2502, %v2659
    %v2661 = vtanh.pop %v2660
    %v2662 = vsub.f32 %v2498, %v2661
    %v2663 = vmul.f32 %v2657, %v2662
    %v2664 = vadd.f32 %v2661, %v2663
    %2665 = vst [vmem:[%s952] sm:$0xff] %v2664
    %v2666 = vld [vmem:[%s954] sm:$0xff]
    %v2667 = vld [vmem:[%s954 + $0x8] sm:$0xff]
    %v2668 = vld [vmem:[%s954 + $0x10] sm:$0xff]
    %2669 = vmatprep.subr.mxu0 %v2113
    %2670 = vmatpush1.msra.mxu0 %v2112
    %2671 = vmatprep.subr.mxu0 %v2116
    %2672 = vmatpush1.msra.mxu0 %v2115
    %2673 = vmatprep.subr.mxu0 %v2119
    %2674 = vmatpush1.msra.mxu0 %v2118
    %2675 = vmatprep.subr.mxu0 %v2122
    %2676 = vmatpush1.msra.mxu0 %v2121
    %2677 = vmatprep.subr.mxu0 %v2125
    %2678 = vmatpush1.msra.mxu0 %v2124
    %2679 = vmatprep.subr.mxu0 %v2128
    %2680 = vmatpush1.msra.mxu0 %v2127
    %2681 = vmatprep.subr.mxu0 %v2131
    %2682 = vmatpush1.msra.mxu0 %v2130
    %2683 = vmatprep.subr.mxu0 %v2134
    %2684 = vmatpush1.msra.mxu0 %v2133
    %2685 = vmatprep.subr.mxu0 %v2137
    %2686 = vmatpush1.msra.mxu0 %v2136
    %2687 = vmatprep.subr.mxu0 %v2140
    %2688 = vmatpush1.msra.mxu0 %v2139
    %2689 = vmatprep.subr.mxu0 %v2143
    %2690 = vmatpush1.msra.mxu0 %v2142
    %2691 = vmatprep.subr.mxu0 %v2146
    %2692 = vmatpush1.msra.mxu0 %v2145
    %2693 = vmatprep.subr.mxu0 %v2149
    %2694 = vmatpush1.msra.mxu0 %v2148
    %2695 = vmatprep.subr.mxu0 %v2152
    %2696 = vmatpush1.msra.mxu0 %v2151
    %2697 = vmatprep.subr.mxu0 %v2155
    %2698 = vmatpush1.msra.mxu0 %v2154
    %2699 = vmatprep.subr.mxu0 %v2158
    %2700 = vmatpush1.msra.mxu0 %v2157
    %2701 = vmatprep.subr.mxu0 0.0
    %2702 = vmatpush1.msra.mxu0 0.0
    %2703 = vmatprep.subr.mxu0 0.0
    %2704 = vmatpush1.msra.mxu0 0.0
    %2705 = vmatprep.subr.mxu0 0.0
    %2706 = vmatpush1.msra.mxu0 0.0
    %2707 = vmatprep.subr.mxu0 0.0
    %2708 = vmatpush1.msra.mxu0 0.0
    %2709 = vmatprep.subr.mxu0 0.0
    %2710 = vmatpush1.msra.mxu0 0.0
    %2711 = vmatprep.subr.mxu0 0.0
    %2712 = vmatpush1.msra.mxu0 0.0
    %2713 = vmatprep.subr.mxu0 0.0
    %2714 = vmatpush1.msra.mxu0 0.0
    %2715 = vmatprep.subr.mxu0 0.0
    %2716 = vmatpush1.msra.mxu0 0.0
    %2717 = vmatprep.subr.mxu0 0.0
    %2718 = vmatpush1.msra.mxu0 0.0
    %2719 = vmatprep.subr.mxu0 0.0
    %2720 = vmatpush1.msra.mxu0 0.0
    %2721 = vmatprep.subr.mxu0 0.0
    %2722 = vmatpush1.msra.mxu0 0.0
    %2723 = vmatprep.subr.mxu0 0.0
    %2724 = vmatpush1.msra.mxu0 0.0
    %2725 = vmatprep.subr.mxu0 0.0
    %2726 = vmatpush1.msra.mxu0 0.0
    %2727 = vmatprep.subr.mxu0 0.0
    %2728 = vmatpush1.msra.mxu0 0.0
    %2729 = vmatprep.subr.mxu0 0.0
    %2730 = vmatpush1.msra.mxu0 0.0
    %2731 = vmatprep.subr.mxu0 0.0
    %2732 = vmatpush1.msra.mxu0 0.0
    %2733 = vmatprep.mubr.f32.mxu0 0.0
    %2734 = vmatmul.mubr.f32.gmra.mrb[0].mxu0 %v2664
    %v2735 = vpop.f32.mrb[0].mxu0
    %v2736 = vadd.f32 0.0, %v2735
    %v2737 = vpop.f32.mrb[0].mxu0
    %v2738 = vadd.f32 0.0, %v2737
    %2739 = vdwg.mxu0
    %2740 = vmatprep.subr.mxu0 0.0
    %2741 = vmatpush1.msra.mxu0 %v2114
    %2742 = vmatprep.subr.mxu0 0.0
    %2743 = vmatpush1.msra.mxu0 %v2117
    %2744 = vmatprep.subr.mxu0 0.0
    %2745 = vmatpush1.msra.mxu0 %v2120
    %2746 = vmatprep.subr.mxu0 0.0
    %2747 = vmatpush1.msra.mxu0 %v2123
    %2748 = vmatprep.subr.mxu0 0.0
    %2749 = vmatpush1.msra.mxu0 %v2126
    %2750 = vmatprep.subr.mxu0 0.0
    %2751 = vmatpush1.msra.mxu0 %v2129
    %2752 = vmatprep.subr.mxu0 0.0
    %2753 = vmatpush1.msra.mxu0 %v2132
    %2754 = vmatprep.subr.mxu0 0.0
    %2755 = vmatpush1.msra.mxu0 %v2135
    %2756 = vmatprep.subr.mxu0 0.0
    %2757 = vmatpush1.msra.mxu0 %v2138
    %2758 = vmatprep.subr.mxu0 0.0
    %2759 = vmatpush1.msra.mxu0 %v2141
    %2760 = vmatprep.subr.mxu0 0.0
    %2761 = vmatpush1.msra.mxu0 %v2144
    %2762 = vmatprep.subr.mxu0 0.0
    %2763 = vmatpush1.msra.mxu0 %v2147
    %2764 = vmatprep.subr.mxu0 0.0
    %2765 = vmatpush1.msra.mxu0 %v2150
    %2766 = vmatprep.subr.mxu0 0.0
    %2767 = vmatpush1.msra.mxu0 %v2153
    %2768 = vmatprep.subr.mxu0 0.0
    %2769 = vmatpush1.msra.mxu0 %v2156
    %2770 = vmatprep.subr.mxu0 0.0
    %2771 = vmatpush1.msra.mxu0 %v2159
    %2772 = vmatprep.subr.mxu0 0.0
    %2773 = vmatpush1.msra.mxu0 0.0
    %2774 = vmatprep.subr.mxu0 0.0
    %2775 = vmatpush1.msra.mxu0 0.0
    %2776 = vmatprep.subr.mxu0 0.0
    %2777 = vmatpush1.msra.mxu0 0.0
    %2778 = vmatprep.subr.mxu0 0.0
    %2779 = vmatpush1.msra.mxu0 0.0
    %2780 = vmatprep.subr.mxu0 0.0
    %2781 = vmatpush1.msra.mxu0 0.0
    %2782 = vmatprep.subr.mxu0 0.0
    %2783 = vmatpush1.msra.mxu0 0.0
    %2784 = vmatprep.subr.mxu0 0.0
    %2785 = vmatpush1.msra.mxu0 0.0
    %2786 = vmatprep.subr.mxu0 0.0
    %2787 = vmatpush1.msra.mxu0 0.0
    %2788 = vmatprep.subr.mxu0 0.0
    %2789 = vmatpush1.msra.mxu0 0.0
    %2790 = vmatprep.subr.mxu0 0.0
    %2791 = vmatpush1.msra.mxu0 0.0
    %2792 = vmatprep.subr.mxu0 0.0
    %2793 = vmatpush1.msra.mxu0 0.0
    %2794 = vmatprep.subr.mxu0 0.0
    %2795 = vmatpush1.msra.mxu0 0.0
    %2796 = vmatprep.subr.mxu0 0.0
    %2797 = vmatpush1.msra.mxu0 0.0
    %2798 = vmatprep.subr.mxu0 0.0
    %2799 = vmatpush1.msra.mxu0 0.0
    %2800 = vmatprep.subr.mxu0 0.0
    %2801 = vmatpush1.msra.mxu0 0.0
    %2802 = vmatprep.subr.mxu0 0.0
    %2803 = vmatpush1.msra.mxu0 0.0
    %2804 = vmatprep.mubr.f32.mxu0 0.0
    %2805 = vmatmul.mubr.f32.gmra.mrb[0].mxu0 %v2664
    %v2806 = vpop.f32.mrb[0].mxu0
    %v2807 = vadd.f32 0.0, %v2806
    %v2808 = vpop.f32.mrb[0].mxu0
    %2809 = vdwg.mxu0
    %v2810 = vadd.f32 %v2666, %v2736
    %v2811 = vxor.u32 %v2810, 2147483648
    %v2812 = vmul.f32 %v2811, 1.442695
    %v2813 = vpow.pop %v2812
    %v2814 = vadd.f32 %v2813, 1.0
    %v2815 = vrcp.pop %v2814
    %v2816 = vmul.f32 1.0, %v2815
    %v2817 = vadd.f32 %v2667, %v2738
    %v2818 = vxor.u32 %v2817, 2147483648
    %v2819 = vmul.f32 %v2818, 1.442695
    %v2820 = vpow.pop %v2819
    %v2821 = vadd.f32 %v2820, 1.0
    %v2822 = vrcp.pop %v2821
    %v2823 = vmul.f32 1.0, %v2822
    %v2824 = vadd.f32 %v2807, %v2166
    %v2825 = vmul.f32 %v2816, %v2824
    %v2826 = vadd.f32 %v2668, %v2825
    %v2827 = vtanh.pop %v2826
    %v2828 = vsub.f32 %v2664, %v2827
    %v2829 = vmul.f32 %v2823, %v2828
    %v2830 = vadd.f32 %v2827, %v2829
    %2831 = vst [vmem:[%s1120] sm:$0xff] %v2830
    %v2832 = vld [vmem:[%s1122] sm:$0xff]
    %v2833 = vld [vmem:[%s1122 + $0x8] sm:$0xff]
    %v2834 = vld [vmem:[%s1122 + $0x10] sm:$0xff]
    %2835 = vmatprep.subr.mxu0 %v2113
    %2836 = vmatpush1.msra.mxu0 %v2112
    %2837 = vmatprep.subr.mxu0 %v2116
    %2838 = vmatpush1.msra.mxu0 %v2115
    %2839 = vmatprep.subr.mxu0 %v2119
    %2840 = vmatpush1.msra.mxu0 %v2118
    %2841 = vmatprep.subr.mxu0 %v2122
    %2842 = vmatpush1.msra.mxu0 %v2121
    %2843 = vmatprep.subr.mxu0 %v2125
    %2844 = vmatpush1.msra.mxu0 %v2124
    %2845 = vmatprep.subr.mxu0 %v2128
    %2846 = vmatpush1.msra.mxu0 %v2127
    %2847 = vmatprep.subr.mxu0 %v2131
    %2848 = vmatpush1.msra.mxu0 %v2130
    %2849 = vmatprep.subr.mxu0 %v2134
    %2850 = vmatpush1.msra.mxu0 %v2133
    %2851 = vmatprep.subr.mxu0 %v2137
    %2852 = vmatpush1.msra.mxu0 %v2136
    %2853 = vmatprep.subr.mxu0 %v2140
    %2854 = vmatpush1.msra.mxu0 %v2139
    %2855 = vmatprep.subr.mxu0 %v2143
    %2856 = vmatpush1.msra.mxu0 %v2142
    %2857 = vmatprep.subr.mxu0 %v2146
    %2858 = vmatpush1.msra.mxu0 %v2145
    %2859 = vmatprep.subr.mxu0 %v2149
    %2860 = vmatpush1.msra.mxu0 %v2148
    %2861 = vmatprep.subr.mxu0 %v2152
    %2862 = vmatpush1.msra.mxu0 %v2151
    %2863 = vmatprep.subr.mxu0 %v2155
    %2864 = vmatpush1.msra.mxu0 %v2154
    %2865 = vmatprep.subr.mxu0 %v2158
    %2866 = vmatpush1.msra.mxu0 %v2157
    %2867 = vmatprep.subr.mxu0 0.0
    %2868 = vmatpush1.msra.mxu0 0.0
    %2869 = vmatprep.subr.mxu0 0.0
    %2870 = vmatpush1.msra.mxu0 0.0
    %2871 = vmatprep.subr.mxu0 0.0
    %2872 = vmatpush1.msra.mxu0 0.0
    %2873 = vmatprep.subr.mxu0 0.0
    %2874 = vmatpush1.msra.mxu0 0.0
    %2875 = vmatprep.subr.mxu0 0.0
    %2876 = vmatpush1.msra.mxu0 0.0
    %2877 = vmatprep.subr.mxu0 0.0
    %2878 = vmatpush1.msra.mxu0 0.0
    %2879 = vmatprep.subr.mxu0 0.0
    %2880 = vmatpush1.msra.mxu0 0.0
    %2881 = vmatprep.subr.mxu0 0.0
    %2882 = vmatpush1.msra.mxu0 0.0
    %2883 = vmatprep.subr.mxu0 0.0
    %2884 = vmatpush1.msra.mxu0 0.0
    %2885 = vmatprep.subr.mxu0 0.0
    %2886 = vmatpush1.msra.mxu0 0.0
    %2887 = vmatprep.subr.mxu0 0.0
    %2888 = vmatpush1.msra.mxu0 0.0
    %2889 = vmatprep.subr.mxu0 0.0
    %2890 = vmatpush1.msra.mxu0 0.0
    %2891 = vmatprep.subr.mxu0 0.0
    %2892 = vmatpush1.msra.mxu0 0.0
    %2893 = vmatprep.subr.mxu0 0.0
    %2894 = vmatpush1.msra.mxu0 0.0
    %2895 = vmatprep.subr.mxu0 0.0
    %2896 = vmatpush1.msra.mxu0 0.0
    %2897 = vmatprep.subr.mxu0 0.0
    %2898 = vmatpush1.msra.mxu0 0.0
    %2899 = vmatprep.mubr.f32.mxu0 0.0
    %2900 = vmatmul.mubr.f32.gmra.mrb[0].mxu0 %v2830
    %v2901 = vpop.f32.mrb[0].mxu0
    %v2902 = vadd.f32 0.0, %v2901
    %v2903 = vpop.f32.mrb[0].mxu0
    %v2904 = vadd.f32 0.0, %v2903
    %2905 = vdwg.mxu0
    %2906 = vmatprep.subr.mxu0 0.0
    %2907 = vmatpush1.msra.mxu0 %v2114
    %2908 = vmatprep.subr.mxu0 0.0
    %2909 = vmatpush1.msra.mxu0 %v2117
    %2910 = vmatprep.subr.mxu0 0.0
    %2911 = vmatpush1.msra.mxu0 %v2120
    %2912 = vmatprep.subr.mxu0 0.0
    %2913 = vmatpush1.msra.mxu0 %v2123
    %2914 = vmatprep.subr.mxu0 0.0
    %2915 = vmatpush1.msra.mxu0 %v2126
    %2916 = vmatprep.subr.mxu0 0.0
    %2917 = vmatpush1.msra.mxu0 %v2129
    %2918 = vmatprep.subr.mxu0 0.0
    %2919 = vmatpush1.msra.mxu0 %v2132
    %2920 = vmatprep.subr.mxu0 0.0
    %2921 = vmatpush1.msra.mxu0 %v2135
    %2922 = vmatprep.subr.mxu0 0.0
    %2923 = vmatpush1.msra.mxu0 %v2138
    %2924 = vmatprep.subr.mxu0 0.0
    %2925 = vmatpush1.msra.mxu0 %v2141
    %2926 = vmatprep.subr.mxu0 0.0
    %2927 = vmatpush1.msra.mxu0 %v2144
    %2928 = vmatprep.subr.mxu0 0.0
    %2929 = vmatpush1.msra.mxu0 %v2147
    %2930 = vmatprep.subr.mxu0 0.0
    %2931 = vmatpush1.msra.mxu0 %v2150
    %2932 = vmatprep.subr.mxu0 0.0
    %2933 = vmatpush1.msra.mxu0 %v2153
    %2934 = vmatprep.subr.mxu0 0.0
    %2935 = vmatpush1.msra.mxu0 %v2156
    %2936 = vmatprep.subr.mxu0 0.0
    %2937 = vmatpush1.msra.mxu0 %v2159
    %2938 = vmatprep.subr.mxu0 0.0
    %2939 = vmatpush1.msra.mxu0 0.0
    %2940 = vmatprep.subr.mxu0 0.0
    %2941 = vmatpush1.msra.mxu0 0.0
    %2942 = vmatprep.subr.mxu0 0.0
    %2943 = vmatpush1.msra.mxu0 0.0
    %2944 = vmatprep.subr.mxu0 0.0
    %2945 = vmatpush1.msra.mxu0 0.0
    %2946 = vmatprep.subr.mxu0 0.0
    %2947 = vmatpush1.msra.mxu0 0.0
    %2948 = vmatprep.subr.mxu0 0.0
    %2949 = vmatpush1.msra.mxu0 0.0
    %2950 = vmatprep.subr.mxu0 0.0
    %2951 = vmatpush1.msra.mxu0 0.0
    %2952 = vmatprep.subr.mxu0 0.0
    %2953 = vmatpush1.msra.mxu0 0.0
    %2954 = vmatprep.subr.mxu0 0.0
    %2955 = vmatpush1.msra.mxu0 0.0
    %2956 = vmatprep.subr.mxu0 0.0
    %2957 = vmatpush1.msra.mxu0 0.0
    %2958 = vmatprep.subr.mxu0 0.0
    %2959 = vmatpush1.msra.mxu0 0.0
    %2960 = vmatprep.subr.mxu0 0.0
    %2961 = vmatpush1.msra.mxu0 0.0
    %2962 = vmatprep.subr.mxu0 0.0
    %2963 = vmatpush1.msra.mxu0 0.0
    %2964 = vmatprep.subr.mxu0 0.0
    %2965 = vmatpush1.msra.mxu0 0.0
    %2966 = vmatprep.subr.mxu0 0.0
    %2967 = vmatpush1.msra.mxu0 0.0
    %2968 = vmatprep.subr.mxu0 0.0
    %2969 = vmatpush1.msra.mxu0 0.0
    %2970 = vmatprep.mubr.f32.mxu0 0.0
    %2971 = vmatmul.mubr.f32.gmra.mrb[0].mxu0 %v2830
    %v2972 = vpop.f32.mrb[0].mxu0
    %v2973 = vadd.f32 0.0, %v2972
    %v2974 = vpop.f32.mrb[0].mxu0
    %2975 = vdwg.mxu0
    %v2976 = vadd.f32 %v2832, %v2902
    %v2977 = vxor.u32 %v2976, 2147483648
    %v2978 = vmul.f32 %v2977, 1.442695
    %v2979 = vpow.pop %v2978
    %v2980 = vadd.f32 %v2979, 1.0
    %v2981 = vrcp.pop %v2980
    %v2982 = vmul.f32 1.0, %v2981
    %v2983 = vadd.f32 %v2833, %v2904
    %v2984 = vxor.u32 %v2983, 2147483648
    %v2985 = vmul.f32 %v2984, 1.442695
    %v2986 = vpow.pop %v2985
    %v2987 = vadd.f32 %v2986, 1.0
    %v2988 = vrcp.pop %v2987
    %v2989 = vmul.f32 1.0, %v2988
    %v2990 = vadd.f32 %v2973, %v2166
    %v2991 = vmul.f32 %v2982, %v2990
    %v2992 = vadd.f32 %v2834, %v2991
    %v2993 = vtanh.pop %v2992
    %v2994 = vsub.f32 %v2830, %v2993
    %v2995 = vmul.f32 %v2989, %v2994
    %v2996 = vadd.f32 %v2993, %v2995
    %2997 = vst [vmem:[%s1288] sm:$0xff] %v2996
    %v2998 = vld [vmem:[%s1290] sm:$0xff]
    %v2999 = vld [vmem:[%s1290 + $0x8] sm:$0xff]
    %v3000 = vld [vmem:[%s1290 + $0x10] sm:$0xff]
    %3001 = vmatprep.subr.mxu0 %v2113
    %3002 = vmatpush1.msra.mxu0 %v2112
    %3003 = vmatprep.subr.mxu0 %v2116
    %3004 = vmatpush1.msra.mxu0 %v2115
    %3005 = vmatprep.subr.mxu0 %v2119
    %3006 = vmatpush1.msra.mxu0 %v2118
    %3007 = vmatprep.subr.mxu0 %v2122
    %3008 = vmatpush1.msra.mxu0 %v2121
    %3009 = vmatprep.subr.mxu0 %v2125
    %3010 = vmatpush1.msra.mxu0 %v2124
    %3011 = vmatprep.subr.mxu0 %v2128
    %3012 = vmatpush1.msra.mxu0 %v2127
    %3013 = vmatprep.subr.mxu0 %v2131
    %3014 = vmatpush1.msra.mxu0 %v2130
    %3015 = vmatprep.subr.mxu0 %v2134
    %3016 = vmatpush1.msra.mxu0 %v2133
    %3017 = vmatprep.subr.mxu0 %v2137
    %3018 = vmatpush1.msra.mxu0 %v2136
    %3019 = vmatprep.subr.mxu0 %v2140
    %3020 = vmatpush1.msra.mxu0 %v2139
    %3021 = vmatprep.subr.mxu0 %v2143
    %3022 = vmatpush1.msra.mxu0 %v2142
    %3023 = vmatprep.subr.mxu0 %v2146
    %3024 = vmatpush1.msra.mxu0 %v2145
    %3025 = vmatprep.subr.mxu0 %v2149
    %3026 = vmatpush1.msra.mxu0 %v2148
    %3027 = vmatprep.subr.mxu0 %v2152
    %3028 = vmatpush1.msra.mxu0 %v2151
    %3029 = vmatprep.subr.mxu0 %v2155
    %3030 = vmatpush1.msra.mxu0 %v2154
    %3031 = vmatprep.subr.mxu0 %v2158
    %3032 = vmatpush1.msra.mxu0 %v2157
    %3033 = vmatprep.subr.mxu0 0.0
    %3034 = vmatpush1.msra.mxu0 0.0
    %3035 = vmatprep.subr.mxu0 0.0
    %3036 = vmatpush1.msra.mxu0 0.0
    %3037 = vmatprep.subr.mxu0 0.0
    %3038 = vmatpush1.msra.mxu0 0.0
    %3039 = vmatprep.subr.mxu0 0.0
    %3040 = vmatpush1.msra.mxu0 0.0
    %3041 = vmatprep.subr.mxu0 0.0
    %3042 = vmatpush1.msra.mxu0 0.0
    %3043 = vmatprep.subr.mxu0 0.0
    %3044 = vmatpush1.msra.mxu0 0.0
    %3045 = vmatprep.subr.mxu0 0.0
    %3046 = vmatpush1.msra.mxu0 0.0
    %3047 = vmatprep.subr.mxu0 0.0
    %3048 = vmatpush1.msra.mxu0 0.0
    %3049 = vmatprep.subr.mxu0 0.0
    %3050 = vmatpush1.msra.mxu0 0.0
    %3051 = vmatprep.subr.mxu0 0.0
    %3052 = vmatpush1.msra.mxu0 0.0
    %3053 = vmatprep.subr.mxu0 0.0
    %3054 = vmatpush1.msra.mxu0 0.0
    %3055 = vmatprep.subr.mxu0 0.0
    %3056 = vmatpush1.msra.mxu0 0.0
    %3057 = vmatprep.subr.mxu0 0.0
    %3058 = vmatpush1.msra.mxu0 0.0
    %3059 = vmatprep.subr.mxu0 0.0
    %3060 = vmatpush1.msra.mxu0 0.0
    %3061 = vmatprep.subr.mxu0 0.0
    %3062 = vmatpush1.msra.mxu0 0.0
    %3063 = vmatprep.subr.mxu0 0.0
    %3064 = vmatpush1.msra.mxu0 0.0
    %3065 = vmatprep.mubr.f32.mxu0 0.0
    %3066 = vmatmul.mubr.f32.gmra.mrb[0].mxu0 %v2996
    %v3067 = vpop.f32.mrb[0].mxu0
    %v3068 = vadd.f32 0.0, %v3067
    %v3069 = vpop.f32.mrb[0].mxu0
    %v3070 = vadd.f32 0.0, %v3069
    %3071 = vdwg.mxu0
    %3072 = vmatprep.subr.mxu0 0.0
    %3073 = vmatpush1.msra.mxu0 %v2114
    %3074 = vmatprep.subr.mxu0 0.0
    %3075 = vmatpush1.msra.mxu0 %v2117
    %3076 = vmatprep.subr.mxu0 0.0
    %3077 = vmatpush1.msra.mxu0 %v2120
    %3078 = vmatprep.subr.mxu0 0.0
    %3079 = vmatpush1.msra.mxu0 %v2123
    %3080 = vmatprep.subr.mxu0 0.0
    %3081 = vmatpush1.msra.mxu0 %v2126
    %3082 = vmatprep.subr.mxu0 0.0
    %3083 = vmatpush1.msra.mxu0 %v2129
    %3084 = vmatprep.subr.mxu0 0.0
    %3085 = vmatpush1.msra.mxu0 %v2132
    %3086 = vmatprep.subr.mxu0 0.0
    %3087 = vmatpush1.msra.mxu0 %v2135
    %3088 = vmatprep.subr.mxu0 0.0
    %3089 = vmatpush1.msra.mxu0 %v2138
    %3090 = vmatprep.subr.mxu0 0.0
    %3091 = vmatpush1.msra.mxu0 %v2141
    %3092 = vmatprep.subr.mxu0 0.0
    %3093 = vmatpush1.msra.mxu0 %v2144
    %3094 = vmatprep.subr.mxu0 0.0
    %3095 = vmatpush1.msra.mxu0 %v2147
    %3096 = vmatprep.subr.mxu0 0.0
    %3097 = vmatpush1.msra.mxu0 %v2150
    %3098 = vmatprep.subr.mxu0 0.0
    %3099 = vmatpush1.msra.mxu0 %v2153
    %3100 = vmatprep.subr.mxu0 0.0
    %3101 = vmatpush1.msra.mxu0 %v2156
    %3102 = vmatprep.subr.mxu0 0.0
    %3103 = vmatpush1.msra.mxu0 %v2159
    %3104 = vmatprep.subr.mxu0 0.0
    %3105 = vmatpush1.msra.mxu0 0.0
    %3106 = vmatprep.subr.mxu0 0.0
    %3107 = vmatpush1.msra.mxu0 0.0
    %3108 = vmatprep.subr.mxu0 0.0
    %3109 = vmatpush1.msra.mxu0 0.0
    %3110 = vmatprep.subr.mxu0 0.0
    %3111 = vmatpush1.msra.mxu0 0.0
    %3112 = vmatprep.subr.mxu0 0.0
    %3113 = vmatpush1.msra.mxu0 0.0
    %3114 = vmatprep.subr.mxu0 0.0
    %3115 = vmatpush1.msra.mxu0 0.0
    %3116 = vmatprep.subr.mxu0 0.0
    %3117 = vmatpush1.msra.mxu0 0.0
    %3118 = vmatprep.subr.mxu0 0.0
    %3119 = vmatpush1.msra.mxu0 0.0
    %3120 = vmatprep.subr.mxu0 0.0
    %3121 = vmatpush1.msra.mxu0 0.0
    %3122 = vmatprep.subr.mxu0 0.0
    %3123 = vmatpush1.msra.mxu0 0.0
    %3124 = vmatprep.subr.mxu0 0.0
    %3125 = vmatpush1.msra.mxu0 0.0
    %3126 = vmatprep.subr.mxu0 0.0
    %3127 = vmatpush1.msra.mxu0 0.0
    %3128 = vmatprep.subr.mxu0 0.0
    %3129 = vmatpush1.msra.mxu0 0.0
    %3130 = vmatprep.subr.mxu0 0.0
    %3131 = vmatpush1.msra.mxu0 0.0
    %3132 = vmatprep.subr.mxu0 0.0
    %3133 = vmatpush1.msra.mxu0 0.0
    %3134 = vmatprep.subr.mxu0 0.0
    %3135 = vmatpush1.msra.mxu0 0.0
    %3136 = vmatprep.mubr.f32.mxu0 0.0
    %3137 = vmatmul.mubr.f32.gmra.mrb[0].mxu0 %v2996
    %v3138 = vpop.f32.mrb[0].mxu0
    %v3139 = vadd.f32 0.0, %v3138
    %v3140 = vpop.f32.mrb[0].mxu0
    %3141 = vdwg.mxu0
    %v3142 = vadd.f32 %v2998, %v3068
    %v3143 = vxor.u32 %v3142, 2147483648
    %v3144 = vmul.f32 %v3143, 1.442695
    %v3145 = vpow.pop %v3144
    %v3146 = vadd.f32 %v3145, 1.0
    %v3147 = vrcp.pop %v3146
    %v3148 = vmul.f32 1.0, %v3147
    %v3149 = vadd.f32 %v2999, %v3070
    %v3150 = vxor.u32 %v3149, 2147483648
    %v3151 = vmul.f32 %v3150, 1.442695
    %v3152 = vpow.pop %v3151
    %v3153 = vadd.f32 %v3152, 1.0
    %v3154 = vrcp.pop %v3153
    %v3155 = vmul.f32 1.0, %v3154
    %v3156 = vadd.f32 %v3139, %v2166
    %v3157 = vmul.f32 %v3148, %v3156
    %v3158 = vadd.f32 %v3000, %v3157
    %v3159 = vtanh.pop %v3158
    %v3160 = vsub.f32 %v2996, %v3159
    %v3161 = vmul.f32 %v3155, %v3160
    %v3162 = vadd.f32 %v3159, %v3161
    %3163 = vst [vmem:[%s1456] sm:$0xff] %v3162
    %v3164 = vld [vmem:[%s1458] sm:$0xff]
    %v3165 = vld [vmem:[%s1458 + $0x8] sm:$0xff]
    %v3166 = vld [vmem:[%s1458 + $0x10] sm:$0xff]
    %3167 = vmatprep.subr.mxu0 %v2113
    %3168 = vmatpush1.msra.mxu0 %v2112
    %3169 = vmatprep.subr.mxu0 %v2116
    %3170 = vmatpush1.msra.mxu0 %v2115
    %3171 = vmatprep.subr.mxu0 %v2119
    %3172 = vmatpush1.msra.mxu0 %v2118
    %3173 = vmatprep.subr.mxu0 %v2122
    %3174 = vmatpush1.msra.mxu0 %v2121
    %3175 = vmatprep.subr.mxu0 %v2125
    %3176 = vmatpush1.msra.mxu0 %v2124
    %3177 = vmatprep.subr.mxu0 %v2128
    %3178 = vmatpush1.msra.mxu0 %v2127
    %3179 = vmatprep.subr.mxu0 %v2131
    %3180 = vmatpush1.msra.mxu0 %v2130
    %3181 = vmatprep.subr.mxu0 %v2134
    %3182 = vmatpush1.msra.mxu0 %v2133
    %3183 = vmatprep.subr.mxu0 %v2137
    %3184 = vmatpush1.msra.mxu0 %v2136
    %3185 = vmatprep.subr.mxu0 %v2140
    %3186 = vmatpush1.msra.mxu0 %v2139
    %3187 = vmatprep.subr.mxu0 %v2143
    %3188 = vmatpush1.msra.mxu0 %v2142
    %3189 = vmatprep.subr.mxu0 %v2146
    %3190 = vmatpush1.msra.mxu0 %v2145
    %3191 = vmatprep.subr.mxu0 %v2149
    %3192 = vmatpush1.msra.mxu0 %v2148
    %3193 = vmatprep.subr.mxu0 %v2152
    %3194 = vmatpush1.msra.mxu0 %v2151
    %3195 = vmatprep.subr.mxu0 %v2155
    %3196 = vmatpush1.msra.mxu0 %v2154
    %3197 = vmatprep.subr.mxu0 %v2158
    %3198 = vmatpush1.msra.mxu0 %v2157
    %3199 = vmatprep.subr.mxu0 0.0
    %3200 = vmatpush1.msra.mxu0 0.0
    %3201 = vmatprep.subr.mxu0 0.0
    %3202 = vmatpush1.msra.mxu0 0.0
    %3203 = vmatprep.subr.mxu0 0.0
    %3204 = vmatpush1.msra.mxu0 0.0
    %3205 = vmatprep.subr.mxu0 0.0
    %3206 = vmatpush1.msra.mxu0 0.0
    %3207 = vmatprep.subr.mxu0 0.0
    %3208 = vmatpush1.msra.mxu0 0.0
    %3209 = vmatprep.subr.mxu0 0.0
    %3210 = vmatpush1.msra.mxu0 0.0
    %3211 = vmatprep.subr.mxu0 0.0
    %3212 = vmatpush1.msra.mxu0 0.0
    %3213 = vmatprep.subr.mxu0 0.0
    %3214 = vmatpush1.msra.mxu0 0.0
    %3215 = vmatprep.subr.mxu0 0.0
    %3216 = vmatpush1.msra.mxu0 0.0
    %3217 = vmatprep.subr.mxu0 0.0
    %3218 = vmatpush1.msra.mxu0 0.0
    %3219 = vmatprep.subr.mxu0 0.0
    %3220 = vmatpush1.msra.mxu0 0.0
    %3221 = vmatprep.subr.mxu0 0.0
    %3222 = vmatpush1.msra.mxu0 0.0
    %3223 = vmatprep.subr.mxu0 0.0
    %3224 = vmatpush1.msra.mxu0 0.0
    %3225 = vmatprep.subr.mxu0 0.0
    %3226 = vmatpush1.msra.mxu0 0.0
    %3227 = vmatprep.subr.mxu0 0.0
    %3228 = vmatpush1.msra.mxu0 0.0
    %3229 = vmatprep.subr.mxu0 0.0
    %3230 = vmatpush1.msra.mxu0 0.0
    %3231 = vmatprep.mubr.f32.mxu0 0.0
    %3232 = vmatmul.mubr.f32.gmra.mrb[0].mxu0 %v3162
    %v3233 = vpop.f32.mrb[0].mxu0
    %v3234 = vadd.f32 0.0, %v3233
    %v3235 = vpop.f32.mrb[0].mxu0
    %v3236 = vadd.f32 0.0, %v3235
    %3237 = vdwg.mxu0
    %3238 = vmatprep.subr.mxu0 0.0
    %3239 = vmatpush1.msra.mxu0 %v2114
    %3240 = vmatprep.subr.mxu0 0.0
    %3241 = vmatpush1.msra.mxu0 %v2117
    %3242 = vmatprep.subr.mxu0 0.0
    %3243 = vmatpush1.msra.mxu0 %v2120
    %3244 = vmatprep.subr.mxu0 0.0
    %3245 = vmatpush1.msra.mxu0 %v2123
    %3246 = vmatprep.subr.mxu0 0.0
    %3247 = vmatpush1.msra.mxu0 %v2126
    %3248 = vmatprep.subr.mxu0 0.0
    %3249 = vmatpush1.msra.mxu0 %v2129
    %3250 = vmatprep.subr.mxu0 0.0
    %3251 = vmatpush1.msra.mxu0 %v2132
    %3252 = vmatprep.subr.mxu0 0.0
    %3253 = vmatpush1.msra.mxu0 %v2135
    %3254 = vmatprep.subr.mxu0 0.0
    %3255 = vmatpush1.msra.mxu0 %v2138
    %3256 = vmatprep.subr.mxu0 0.0
    %3257 = vmatpush1.msra.mxu0 %v2141
    %3258 = vmatprep.subr.mxu0 0.0
    %3259 = vmatpush1.msra.mxu0 %v2144
    %3260 = vmatprep.subr.mxu0 0.0
    %3261 = vmatpush1.msra.mxu0 %v2147
    %3262 = vmatprep.subr.mxu0 0.0
    %3263 = vmatpush1.msra.mxu0 %v2150
    %3264 = vmatprep.subr.mxu0 0.0
    %3265 = vmatpush1.msra.mxu0 %v2153
    %3266 = vmatprep.subr.mxu0 0.0
    %3267 = vmatpush1.msra.mxu0 %v2156
    %3268 = vmatprep.subr.mxu0 0.0
    %3269 = vmatpush1.msra.mxu0 %v2159
    %3270 = vmatprep.subr.mxu0 0.0
    %3271 = vmatpush1.msra.mxu0 0.0
    %3272 = vmatprep.subr.mxu0 0.0
    %3273 = vmatpush1.msra.mxu0 0.0
    %3274 = vmatprep.subr.mxu0 0.0
    %3275 = vmatpush1.msra.mxu0 0.0
    %3276 = vmatprep.subr.mxu0 0.0
    %3277 = vmatpush1.msra.mxu0 0.0
    %3278 = vmatprep.subr.mxu0 0.0
    %3279 = vmatpush1.msra.mxu0 0.0
    %3280 = vmatprep.subr.mxu0 0.0
    %3281 = vmatpush1.msra.mxu0 0.0
    %3282 = vmatprep.subr.mxu0 0.0
    %3283 = vmatpush1.msra.mxu0 0.0
    %3284 = vmatprep.subr.mxu0 0.0
    %3285 = vmatpush1.msra.mxu0 0.0
    %3286 = vmatprep.subr.mxu0 0.0
    %3287 = vmatpush1.msra.mxu0 0.0
    %3288 = vmatprep.subr.mxu0 0.0
    %3289 = vmatpush1.msra.mxu0 0.0
    %3290 = vmatprep.subr.mxu0 0.0
    %3291 = vmatpush1.msra.mxu0 0.0
    %3292 = vmatprep.subr.mxu0 0.0
    %3293 = vmatpush1.msra.mxu0 0.0
    %3294 = vmatprep.subr.mxu0 0.0
    %3295 = vmatpush1.msra.mxu0 0.0
    %3296 = vmatprep.subr.mxu0 0.0
    %3297 = vmatpush1.msra.mxu0 0.0
    %3298 = vmatprep.subr.mxu0 0.0
    %3299 = vmatpush1.msra.mxu0 0.0
    %3300 = vmatprep.subr.mxu0 0.0
    %3301 = vmatpush1.msra.mxu0 0.0
    %3302 = vmatprep.mubr.f32.mxu0 0.0
    %3303 = vmatmul.mubr.f32.gmra.mrb[0].mxu0 %v3162
    %v3304 = vpop.f32.mrb[0].mxu0
    %v3305 = vadd.f32 0.0, %v3304
    %v3306 = vpop.f32.mrb[0].mxu0
    %3307 = vdwg.mxu0
    %v3308 = vadd.f32 %v3164, %v3234
    %v3309 = vxor.u32 %v3308, 2147483648
    %v3310 = vmul.f32 %v3309, 1.442695
    %v3311 = vpow.pop %v3310
    %v3312 = vadd.f32 %v3311, 1.0
    %v3313 = vrcp.pop %v3312
    %v3314 = vmul.f32 1.0, %v3313
    %v3315 = vadd.f32 %v3165, %v3236
    %v3316 = vxor.u32 %v3315, 2147483648
    %v3317 = vmul.f32 %v3316, 1.442695
    %v3318 = vpow.pop %v3317
    %v3319 = vadd.f32 %v3318, 1.0
    %v3320 = vrcp.pop %v3319
    %v3321 = vmul.f32 1.0, %v3320
    %v3322 = vadd.f32 %v3305, %v2166
    %v3323 = vmul.f32 %v3314, %v3322
    %v3324 = vadd.f32 %v3166, %v3323
    %v3325 = vtanh.pop %v3324
    %v3326 = vsub.f32 %v3162, %v3325
    %v3327 = vmul.f32 %v3321, %v3326
    %v3328 = vadd.f32 %v3325, %v3327
    %3329 = vst [vmem:[%s1624] sm:$0xff] %v3328
    %v3330 = vld [vmem:[%s1626] sm:$0xff]
    %v3331 = vld [vmem:[%s1626 + $0x8] sm:$0xff]
    %v3332 = vld [vmem:[%s1626 + $0x10] sm:$0xff]
    %3333 = vmatprep.subr.mxu0 %v2113
    %3334 = vmatpush1.msra.mxu0 %v2112
    %3335 = vmatprep.subr.mxu0 %v2116
    %3336 = vmatpush1.msra.mxu0 %v2115
    %3337 = vmatprep.subr.mxu0 %v2119
    %3338 = vmatpush1.msra.mxu0 %v2118
    %3339 = vmatprep.subr.mxu0 %v2122
    %3340 = vmatpush1.msra.mxu0 %v2121
    %3341 = vmatprep.subr.mxu0 %v2125
    %3342 = vmatpush1.msra.mxu0 %v2124
    %3343 = vmatprep.subr.mxu0 %v2128
    %3344 = vmatpush1.msra.mxu0 %v2127
    %3345 = vmatprep.subr.mxu0 %v2131
    %3346 = vmatpush1.msra.mxu0 %v2130
    %3347 = vmatprep.subr.mxu0 %v2134
    %3348 = vmatpush1.msra.mxu0 %v2133
    %3349 = vmatprep.subr.mxu0 %v2137
    %3350 = vmatpush1.msra.mxu0 %v2136
    %3351 = vmatprep.subr.mxu0 %v2140
    %3352 = vmatpush1.msra.mxu0 %v2139
    %3353 = vmatprep.subr.mxu0 %v2143
    %3354 = vmatpush1.msra.mxu0 %v2142
    %3355 = vmatprep.subr.mxu0 %v2146
    %3356 = vmatpush1.msra.mxu0 %v2145
    %3357 = vmatprep.subr.mxu0 %v2149
    %3358 = vmatpush1.msra.mxu0 %v2148
    %3359 = vmatprep.subr.mxu0 %v2152
    %3360 = vmatpush1.msra.mxu0 %v2151
    %3361 = vmatprep.subr.mxu0 %v2155
    %3362 = vmatpush1.msra.mxu0 %v2154
    %3363 = vmatprep.subr.mxu0 %v2158
    %3364 = vmatpush1.msra.mxu0 %v2157
    %3365 = vmatprep.subr.mxu0 0.0
    %3366 = vmatpush1.msra.mxu0 0.0
    %3367 = vmatprep.subr.mxu0 0.0
    %3368 = vmatpush1.msra.mxu0 0.0
    %3369 = vmatprep.subr.mxu0 0.0
    %3370 = vmatpush1.msra.mxu0 0.0
    %3371 = vmatprep.subr.mxu0 0.0
    %3372 = vmatpush1.msra.mxu0 0.0
    %3373 = vmatprep.subr.mxu0 0.0
    %3374 = vmatpush1.msra.mxu0 0.0
    %3375 = vmatprep.subr.mxu0 0.0
    %3376 = vmatpush1.msra.mxu0 0.0
    %3377 = vmatprep.subr.mxu0 0.0
    %3378 = vmatpush1.msra.mxu0 0.0
    %3379 = vmatprep.subr.mxu0 0.0
    %3380 = vmatpush1.msra.mxu0 0.0
    %3381 = vmatprep.subr.mxu0 0.0
    %3382 = vmatpush1.msra.mxu0 0.0
    %3383 = vmatprep.subr.mxu0 0.0
    %3384 = vmatpush1.msra.mxu0 0.0
    %3385 = vmatprep.subr.mxu0 0.0
    %3386 = vmatpush1.msra.mxu0 0.0
    %3387 = vmatprep.subr.mxu0 0.0
    %3388 = vmatpush1.msra.mxu0 0.0
    %3389 = vmatprep.subr.mxu0 0.0
    %3390 = vmatpush1.msra.mxu0 0.0
    %3391 = vmatprep.subr.mxu0 0.0
    %3392 = vmatpush1.msra.mxu0 0.0
    %3393 = vmatprep.subr.mxu0 0.0
    %3394 = vmatpush1.msra.mxu0 0.0
    %3395 = vmatprep.subr.mxu0 0.0
    %3396 = vmatpush1.msra.mxu0 0.0
    %3397 = vmatprep.mubr.f32.mxu0 0.0
    %3398 = vmatmul.mubr.f32.gmra.mrb[0].mxu0 %v3328
    %v3399 = vpop.f32.mrb[0].mxu0
    %v3400 = vadd.f32 0.0, %v3399
    %v3401 = vpop.f32.mrb[0].mxu0
    %v3402 = vadd.f32 0.0, %v3401
    %3403 = vdwg.mxu0
    %3404 = vmatprep.subr.mxu0 0.0
    %3405 = vmatpush1.msra.mxu0 %v2114
    %3406 = vmatprep.subr.mxu0 0.0
    %3407 = vmatpush1.msra.mxu0 %v2117
    %3408 = vmatprep.subr.mxu0 0.0
    %3409 = vmatpush1.msra.mxu0 %v2120
    %3410 = vmatprep.subr.mxu0 0.0
    %3411 = vmatpush1.msra.mxu0 %v2123
    %3412 = vmatprep.subr.mxu0 0.0
    %3413 = vmatpush1.msra.mxu0 %v2126
    %3414 = vmatprep.subr.mxu0 0.0
    %3415 = vmatpush1.msra.mxu0 %v2129
    %3416 = vmatprep.subr.mxu0 0.0
    %3417 = vmatpush1.msra.mxu0 %v2132
    %3418 = vmatprep.subr.mxu0 0.0
    %3419 = vmatpush1.msra.mxu0 %v2135
    %3420 = vmatprep.subr.mxu0 0.0
    %3421 = vmatpush1.msra.mxu0 %v2138
    %3422 = vmatprep.subr.mxu0 0.0
    %3423 = vmatpush1.msra.mxu0 %v2141
    %3424 = vmatprep.subr.mxu0 0.0
    %3425 = vmatpush1.msra.mxu0 %v2144
    %3426 = vmatprep.subr.mxu0 0.0
    %3427 = vmatpush1.msra.mxu0 %v2147
    %3428 = vmatprep.subr.mxu0 0.0
    %3429 = vmatpush1.msra.mxu0 %v2150
    %3430 = vmatprep.subr.mxu0 0.0
    %3431 = vmatpush1.msra.mxu0 %v2153
    %3432 = vmatprep.subr.mxu0 0.0
    %3433 = vmatpush1.msra.mxu0 %v2156
    %3434 = vmatprep.subr.mxu0 0.0
    %3435 = vmatpush1.msra.mxu0 %v2159
    %3436 = vmatprep.subr.mxu0 0.0
    %3437 = vmatpush1.msra.mxu0 0.0
    %3438 = vmatprep.subr.mxu0 0.0
    %3439 = vmatpush1.msra.mxu0 0.0
    %3440 = vmatprep.subr.mxu0 0.0
    %3441 = vmatpush1.msra.mxu0 0.0
    %3442 = vmatprep.subr.mxu0 0.0
    %3443 = vmatpush1.msra.mxu0 0.0
    %3444 = vmatprep.subr.mxu0 0.0
    %3445 = vmatpush1.msra.mxu0 0.0
    %3446 = vmatprep.subr.mxu0 0.0
    %3447 = vmatpush1.msra.mxu0 0.0
    %3448 = vmatprep.subr.mxu0 0.0
    %3449 = vmatpush1.msra.mxu0 0.0
    %3450 = vmatprep.subr.mxu0 0.0
    %3451 = vmatpush1.msra.mxu0 0.0
    %3452 = vmatprep.subr.mxu0 0.0
    %3453 = vmatpush1.msra.mxu0 0.0
    %3454 = vmatprep.subr.mxu0 0.0
    %3455 = vmatpush1.msra.mxu0 0.0
    %3456 = vmatprep.subr.mxu0 0.0
    %3457 = vmatpush1.msra.mxu0 0.0
    %3458 = vmatprep.subr.mxu0 0.0
    %3459 = vmatpush1.msra.mxu0 0.0
    %3460 = vmatprep.subr.mxu0 0.0
    %3461 = vmatpush1.msra.mxu0 0.0
    %3462 = vmatprep.subr.mxu0 0.0
    %3463 = vmatpush1.msra.mxu0 0.0
    %3464 = vmatprep.subr.mxu0 0.0
    %3465 = vmatpush1.msra.mxu0 0.0
    %3466 = vmatprep.subr.mxu0 0.0
    %3467 = vmatpush1.msra.mxu0 0.0
    %3468 = vmatprep.mubr.f32.mxu0 0.0
    %3469 = vmatmul.mubr.f32.gmra.mrb[0].mxu0 %v3328
    %v3470 = vpop.f32.mrb[0].mxu0
    %v3471 = vadd.f32 0.0, %v3470
    %v3472 = vpop.f32.mrb[0].mxu0
    %3473 = vdwg.mxu0
    %v3474 = vadd.f32 %v3330, %v3400
    %v3475 = vxor.u32 %v3474, 2147483648
    %v3476 = vmul.f32 %v3475, 1.442695
    %v3477 = vpow.pop %v3476
    %v3478 = vadd.f32 %v3477, 1.0
    %v3479 = vrcp.pop %v3478
    %v3480 = vmul.f32 1.0, %v3479
    %v3481 = vadd.f32 %v3331, %v3402
    %v3482 = vxor.u32 %v3481, 2147483648
    %v3483 = vmul.f32 %v3482, 1.442695
    %v3484 = vpow.pop %v3483
    %v3485 = vadd.f32 %v3484, 1.0
    %v3486 = vrcp.pop %v3485
    %v3487 = vmul.f32 1.0, %v3486
    %v3488 = vadd.f32 %v3471, %v2166
    %v3489 = vmul.f32 %v3480, %v3488
    %v3490 = vadd.f32 %v3332, %v3489
    %v3491 = vtanh.pop %v3490
    %v3492 = vsub.f32 %v3328, %v3491
    %v3493 = vmul.f32 %v3487, %v3492
    %v3494 = vadd.f32 %v3491, %v3493
    %3495 = vst [vmem:[%s1792] sm:$0xff] %v3494
    %v3496 = vld [vmem:[#allocation2] sm:$0xff]
    %v3497 = vld [vmem:[#allocation2 + $0x8] sm:$0xff]
    %v3498 = vld [vmem:[#allocation2 + $0x10] sm:$0xff]
    %v3499 = vld [vmem:[#allocation2 + $0x18] sm:$0xff]
    %v3500 = vld [vmem:[#allocation2 + $0x20] sm:$0xff]
    %v3501 = vld [vmem:[#allocation2 + $0x28] sm:$0xff]
    %v3502 = vld [vmem:[#allocation2 + $0x30] sm:$0xff]
    %v3503 = vld [vmem:[#allocation2 + $0x38] sm:$0xff]
    %v3504 = vld [vmem:[#allocation10] sm:$0xff]
    %v3505 = vld [vmem:[#allocation10 + $0x8] sm:$0xff]
    %v3506 = vld [vmem:[#allocation10 + $0x10] sm:$0xff]
    %v3507 = vld [vmem:[#allocation10 + $0x18] sm:$0xff]
    %v3508 = vld [vmem:[#allocation10 + $0x20] sm:$0xff]
    %v3509 = vld [vmem:[#allocation10 + $0x28] sm:$0xff]
    %v3510 = vld [vmem:[#allocation10 + $0x30] sm:$0xff]
    %v3511 = vld [vmem:[#allocation10 + $0x38] sm:$0xff]
    %v3512 = vld [vmem:[#allocation10 + $0x40] sm:$0xff]
    %v3513 = vld [vmem:[#allocation10 + $0x48] sm:$0xff]
    %v3514 = vld [vmem:[#allocation10 + $0x50] sm:$0xff]
    %v3515 = vld [vmem:[#allocation10 + $0x58] sm:$0xff]
    %v3516 = vld [vmem:[#allocation10 + $0x60] sm:$0xff]
    %v3517 = vld [vmem:[#allocation10 + $0x68] sm:$0xff]
    %v3518 = vld [vmem:[#allocation10 + $0x70] sm:$0xff]
    %v3519 = vld [vmem:[#allocation10 + $0x78] sm:$0xff]
    %v3520 = vld [vmem:[%s6] sm:$0x1]
    %v3522 = vlaneseq
    %v3523 = vshrl.u32 %v3522, 7
    %v3524 = vsub.s32 0, %v3523
    %v3525 = vrot.slane %v3520, %v3524
    %3527 = vmatprep.subr.mxu0 0.0
    %3528 = vmatpush1.msra.mxu0 %v3504
    %3529 = vmatprep.subr.mxu0 0.0
    %3530 = vmatpush1.msra.mxu0 %v3505
    %3531 = vmatprep.subr.mxu0 0.0
    %3532 = vmatpush1.msra.mxu0 %v3506
    %3533 = vmatprep.subr.mxu0 0.0
    %3534 = vmatpush1.msra.mxu0 %v3507
    %3535 = vmatprep.subr.mxu0 0.0
    %3536 = vmatpush1.msra.mxu0 %v3508
    %3537 = vmatprep.subr.mxu0 0.0
    %3538 = vmatpush1.msra.mxu0 %v3509
    %3539 = vmatprep.subr.mxu0 0.0
    %3540 = vmatpush1.msra.mxu0 %v3510
    %3541 = vmatprep.subr.mxu0 0.0
    %3542 = vmatpush1.msra.mxu0 %v3511
    %3543 = vmatprep.subr.mxu0 0.0
    %3544 = vmatpush1.msra.mxu0 %v3512
    %3545 = vmatprep.subr.mxu0 0.0
    %3546 = vmatpush1.msra.mxu0 %v3513
    %3547 = vmatprep.subr.mxu0 0.0
    %3548 = vmatpush1.msra.mxu0 %v3514
    %3549 = vmatprep.subr.mxu0 0.0
    %3550 = vmatpush1.msra.mxu0 %v3515
    %3551 = vmatprep.subr.mxu0 0.0
    %3552 = vmatpush1.msra.mxu0 %v3516
    %3553 = vmatprep.subr.mxu0 0.0
    %3554 = vmatpush1.msra.mxu0 %v3517
    %3555 = vmatprep.subr.mxu0 0.0
    %3556 = vmatpush1.msra.mxu0 %v3518
    %3557 = vmatprep.subr.mxu0 0.0
    %3558 = vmatpush1.msra.mxu0 %v3519
    %3559 = vmatprep.subr.mxu0 0.0
    %3560 = vmatpush1.msra.mxu0 0.0
    %3561 = vmatprep.subr.mxu0 0.0
    %3562 = vmatpush1.msra.mxu0 0.0
    %3563 = vmatprep.subr.mxu0 0.0
    %3564 = vmatpush1.msra.mxu0 0.0
    %3565 = vmatprep.subr.mxu0 0.0
    %3566 = vmatpush1.msra.mxu0 0.0
    %3567 = vmatprep.subr.mxu0 0.0
    %3568 = vmatpush1.msra.mxu0 0.0
    %3569 = vmatprep.subr.mxu0 0.0
    %3570 = vmatpush1.msra.mxu0 0.0
    %3571 = vmatprep.subr.mxu0 0.0
    %3572 = vmatpush1.msra.mxu0 0.0
    %3573 = vmatprep.subr.mxu0 0.0
    %3574 = vmatpush1.msra.mxu0 0.0
    %3575 = vmatprep.subr.mxu0 0.0
    %3576 = vmatpush1.msra.mxu0 0.0
    %3577 = vmatprep.subr.mxu0 0.0
    %3578 = vmatpush1.msra.mxu0 0.0
    %3579 = vmatprep.subr.mxu0 0.0
    %3580 = vmatpush1.msra.mxu0 0.0
    %3581 = vmatprep.subr.mxu0 0.0
    %3582 = vmatpush1.msra.mxu0 0.0
    %3583 = vmatprep.subr.mxu0 0.0
    %3584 = vmatpush1.msra.mxu0 0.0
    %3585 = vmatprep.subr.mxu0 0.0
    %3586 = vmatpush1.msra.mxu0 0.0
    %3587 = vmatprep.subr.mxu0 0.0
    %3588 = vmatpush1.msra.mxu0 0.0
    %3589 = vmatprep.subr.mxu0 0.0
    %3590 = vmatpush1.msra.mxu0 0.0
    %3591 = vmatprep.mubr.f32.mxu0 0.0
    %3592 = vmatmul.mubr.f32.gmra.mrb[0].mxu0 %v3496
    %v3593 = vpop.f32.mrb[0].mxu0
    %v3594 = vadd.f32 %v3525, %v3593
    %v3595 = vpop.f32.mrb[0].mxu0
    %3596 = vmatprep.mubr.f32.mxu0 0.0
    %3597 = vmatmul.mubr.f32.gmra.mrb[0].mxu0 %v3497
    %v3598 = vpop.f32.mrb[0].mxu0
    %v3599 = vadd.f32 %v3525, %v3598
    %v3600 = vpop.f32.mrb[0].mxu0
    %3601 = vmatprep.mubr.f32.mxu0 0.0
    %3602 = vmatmul.mubr.f32.gmra.mrb[0].mxu0 %v3498
    %v3603 = vpop.f32.mrb[0].mxu0
    %v3604 = vadd.f32 %v3525, %v3603
    %v3605 = vpop.f32.mrb[0].mxu0
    %3606 = vmatprep.mubr.f32.mxu0 0.0
    %3607 = vmatmul.mubr.f32.gmra.mrb[0].mxu0 %v3499
    %v3608 = vpop.f32.mrb[0].mxu0
    %v3609 = vadd.f32 %v3525, %v3608
    %v3610 = vpop.f32.mrb[0].mxu0
    %3611 = vmatprep.mubr.f32.mxu0 0.0
    %3612 = vmatmul.mubr.f32.gmra.mrb[0].mxu0 %v3500
    %v3613 = vpop.f32.mrb[0].mxu0
    %v3614 = vadd.f32 %v3525, %v3613
    %v3615 = vpop.f32.mrb[0].mxu0
    %3616 = vmatprep.mubr.f32.mxu0 0.0
    %3617 = vmatmul.mubr.f32.gmra.mrb[0].mxu0 %v3501
    %v3618 = vpop.f32.mrb[0].mxu0
    %v3619 = vadd.f32 %v3525, %v3618
    %v3620 = vpop.f32.mrb[0].mxu0
    %3621 = vmatprep.mubr.f32.mxu0 0.0
    %3622 = vmatmul.mubr.f32.gmra.mrb[0].mxu0 %v3502
    %v3623 = vpop.f32.mrb[0].mxu0
    %v3624 = vadd.f32 %v3525, %v3623
    %v3625 = vpop.f32.mrb[0].mxu0
    %3626 = vmatprep.mubr.f32.mxu0 0.0
    %3627 = vmatmul.mubr.f32.gmra.mrb[0].mxu0 %v3503
    %v3628 = vpop.f32.mrb[0].mxu0
    %v3629 = vadd.f32 %v3525, %v3628
    %v3630 = vpop.f32.mrb[0].mxu0
    %3631 = vdwg.mxu0
    %v3632 = vxor.u32 %v3594, 2147483648
    %v3633 = vxor.u32 %v3599, 2147483648
    %v3634 = vxor.u32 %v3604, 2147483648
    %v3635 = vxor.u32 %v3609, 2147483648
    %v3636 = vxor.u32 %v3614, 2147483648
    %v3637 = vxor.u32 %v3619, 2147483648
    %v3638 = vxor.u32 %v3624, 2147483648
    %v3639 = vxor.u32 %v3629, 2147483648
    %v3640 = vmul.f32 %v3632, 1.442695
    %v3641 = vpow.pop %v3640
    %v3642 = vmul.f32 %v3633, 1.442695
    %v3643 = vpow.pop %v3642
    %v3644 = vmul.f32 %v3634, 1.442695
    %v3645 = vpow.pop %v3644
    %v3646 = vmul.f32 %v3635, 1.442695
    %v3647 = vpow.pop %v3646
    %v3648 = vmul.f32 %v3636, 1.442695
    %v3649 = vpow.pop %v3648
    %v3650 = vmul.f32 %v3637, 1.442695
    %v3651 = vpow.pop %v3650
    %v3652 = vmul.f32 %v3638, 1.442695
    %v3653 = vpow.pop %v3652
    %v3654 = vmul.f32 %v3639, 1.442695
    %v3655 = vpow.pop %v3654
    %v3656 = vadd.f32 %v3641, 1.0
    %v3657 = vadd.f32 %v3643, 1.0
    %v3658 = vadd.f32 %v3645, 1.0
    %v3659 = vadd.f32 %v3647, 1.0
    %v3660 = vadd.f32 %v3649, 1.0
    %v3661 = vadd.f32 %v3651, 1.0
    %v3662 = vadd.f32 %v3653, 1.0
    %v3663 = vadd.f32 %v3655, 1.0
    %v3664 = vrcp.pop %v3656
    %v3665 = vmul.f32 1.0, %v3664
    %v3666 = vrcp.pop %v3657
    %v3667 = vmul.f32 1.0, %v3666
    %v3668 = vrcp.pop %v3658
    %v3669 = vmul.f32 1.0, %v3668
    %v3670 = vrcp.pop %v3659
    %v3671 = vmul.f32 1.0, %v3670
    %v3672 = vrcp.pop %v3660
    %v3673 = vmul.f32 1.0, %v3672
    %v3674 = vrcp.pop %v3661
    %v3675 = vmul.f32 1.0, %v3674
    %v3676 = vrcp.pop %v3662
    %v3677 = vmul.f32 1.0, %v3676
    %v3678 = vrcp.pop %v3663
    %v3679 = vmul.f32 1.0, %v3678
    %3680 = vst [vmem:[#allocation12] sm:$0xff] %v3665
    %3681 = vst [vmem:[#allocation12 + $0x8] sm:$0xff] %v3667
    %3682 = vst [vmem:[#allocation12 + $0x10] sm:$0xff] %v3669
    %3683 = vst [vmem:[#allocation12 + $0x18] sm:$0xff] %v3671
    %3684 = vst [vmem:[#allocation12 + $0x20] sm:$0xff] %v3673
    %3685 = vst [vmem:[#allocation12 + $0x28] sm:$0xff] %v3675
    %3686 = vst [vmem:[#allocation12 + $0x30] sm:$0xff] %v3677
    %3687 = vst [vmem:[#allocation12 + $0x38] sm:$0xff] %v3679
    // Predicated region
    $region46: #{tpu_custom_call.1} parent=1 // pred_check
      _
    $region47: #{tpu_custom_call.1} parent=1 // pred_check_branch
      %3689 = sbr.rel (0) target = $region49
    $region48: #{tpu_custom_call.1} parent=1 // pred_region
      %s3691 = ssub.s32 1024, 1024
      %3692 = vsyncadd [#allocation6], %s3691
      %s3693 = sshll.u32 [#allocation12], 4
      %s3694 = int_to_ptr.vmem [resolvable:$true] %s3693
      %3699 = dma.vmem_to_hbm [thread:$0]  %s3694, 1024, %s7, [#allocation6], 128, 128, 8
    $region49: #{tpu_custom_call.1} parent=1 // pred_fallthru
      _
    // Predicated region
    $region50: #{tpu_custom_call.1} parent=1 // pred_check
      _
    $region51: #{tpu_custom_call.1} parent=1 // pred_check_branch
      %3701 = sbr.rel (0) target = $region53
    $region52: #{tpu_custom_call.1} parent=1 // pred_region
      %3702 = dma.done [#allocation6], 1024
    $region53: #{tpu_custom_call.1} parent=1 // pred_fallthru
      _
    %3703 = vsyncpa [#allocation5], 1
    %3704 = vsyncpa [#allocation8], 1
    %3705 = vsyncpa [#allocation11], 1
    %3706 = vsyncpa [#allocation6], 1

</llo_original>
